<compile_context>
chip_gen: v6e
topology: v6e:2x2x1
jax: 0.10.0
libtpu: 0.0.40
codegen_flags: <defaults>
</compile_context>

<pallas_src>
import math
import functools

import jax
import jax.numpy as jnp
from jax.experimental import pallas as pl
from jax.experimental.pallas import tpu as pltpu


def _layernorm(x, g, b, eps=1e-5):
    mu = jnp.mean(x, axis=-1, keepdims=True)
    var = jnp.mean((x - mu) ** 2, axis=-1, keepdims=True)
    return (x - mu) * jax.lax.rsqrt(var + eps) * g + b


def metamorph_kernel(obs_ref, bias_ref, we_ref, be_ref, pe_ref,
                     wq_ref, bq_ref, wk_ref, bk_ref, wv_ref, bv_ref,
                     wo_ref, ob_ref, ln1g_ref, ln1b_ref,
                     w1_ref, b1_ref, w2_ref, b2_ref, ln2g_ref, ln2b_ref,
                     dw_ref, db_ref,
                     out_ref,
                     x_ref, ctx_ref,
                     *, d_model, nhead, cdtype):
    hd = d_model // nhead
    l = pl.program_id(1)

    # ---------------- embedding + positional encoding (first layer step) ----
    @pl.when(l == 0)
    def _():
        x0 = jnp.dot(obs_ref[...], we_ref[...],
                     preferred_element_type=jnp.float32) + be_ref[...]
        x_ref[...] = x0 * jnp.float32(math.sqrt(d_model)) + pe_ref[...]

    # TODO(synk): dropout layers are identity here (eval-mode forward only).

    x = x_ref[...]                       # [M, D] float32 residual stream
    xc = x.astype(cdtype)

    # ---------------- self attention (layer l) -------------------------------
    q = jnp.dot(xc, wq_ref[0], preferred_element_type=jnp.float32) + bq_ref[0]
    k = jnp.dot(xc, wk_ref[0], preferred_element_type=jnp.float32) + bk_ref[0]
    v = jnp.dot(xc, wv_ref[0], preferred_element_type=jnp.float32) + bv_ref[0]
    qc, kc, vc = q.astype(cdtype), k.astype(cdtype), v.astype(cdtype)

    bias = bias_ref[0]                   # [M, M] f32: block-diag + key padding
    scale = jnp.float32(1.0 / math.sqrt(hd))
    for h in range(nhead):               # short static unroll over heads
        sl = slice(h * hd, (h + 1) * hd)
        # packed-sequence scores: one [M, M] MXU matmul for all BB sequences
        s = jax.lax.dot_general(qc[:, sl], kc[:, sl],
                                (((1,), (1,)), ((), ())),
                                preferred_element_type=jnp.float32)
        s = s * scale + bias
        s = s - jnp.max(s, axis=-1, keepdims=True)
        p = jnp.exp(s)
        p = p * pl.reciprocal(jnp.sum(p, axis=-1, keepdims=True), approx=True)
        # context: [M, M] @ [M, hd]  (full-depth K = M)
        ctx_h = jnp.dot(p.astype(cdtype), vc[:, sl],
                        preferred_element_type=jnp.float32)
        ctx_ref[:, sl] = ctx_h           # concat heads into VMEM scratch
    # single full-K output projection
    attn = jnp.dot(ctx_ref[...].astype(cdtype), wo_ref[0],
                   preferred_element_type=jnp.float32) + ob_ref[0]
    x = _layernorm(x + attn, ln1g_ref[0], ln1b_ref[0])

    # ---------------- feed forward -------------------------------------------
    h1 = jnp.dot(x.astype(cdtype), w1_ref[0],
                 preferred_element_type=jnp.float32) + b1_ref[0]
    h1 = jnp.maximum(h1, 0.0)
    ff = jnp.dot(h1.astype(cdtype), w2_ref[0],
                 preferred_element_type=jnp.float32) + b2_ref[0]
    x = _layernorm(x + ff, ln2g_ref[0], ln2b_ref[0])
    x_ref[...] = x

    # ---------------- decoder (last layer step), lane-dense padded output ----
    @pl.when(l == pl.num_programs(1) - 1)
    def _():
        y = jnp.dot(x.astype(cdtype), dw_ref[...],
                    preferred_element_type=jnp.float32) + db_ref[...]
        out_ref[...] = y


def init_params(key, input_dim, d_model, nhead, nfeed_fwd, nlayers, out_dim,
                seq_len, initrange=0.1):
    ks = jax.random.split(key, 15)
    u = lambda k, shape, r=initrange: jax.random.uniform(k, shape, jnp.float32, -r, r)
    p = {}
    p['we'] = u(ks[0], (input_dim, d_model))
    p['be'] = u(ks[1], (1, d_model))
    # sinusoidal positional encoding (matches PositionalEncoding1D buffer)
    pos = jnp.arange(seq_len, dtype=jnp.float32)[:, None]
    div = jnp.exp(jnp.arange(0, d_model, 2, dtype=jnp.float32)
                  * (-math.log(10000.0) / d_model))
    ang = pos * div
    p['pe'] = jnp.stack([jnp.sin(ang), jnp.cos(ang)], axis=-1).reshape(seq_len, d_model)
    # per-layer weights stacked on a leading nlayers axis, x @ W orientation;
    # q/k/v stored separately so no wide column slicing is needed in-kernel.
    p['wq'] = u(ks[2], (nlayers, d_model, d_model))
    p['bq'] = u(ks[3], (nlayers, 1, d_model))
    p['wk'] = u(ks[4], (nlayers, d_model, d_model))
    p['bk'] = u(ks[5], (nlayers, 1, d_model))
    p['wv'] = u(ks[6], (nlayers, d_model, d_model))
    p['bv'] = u(ks[7], (nlayers, 1, d_model))
    p['wo'] = u(ks[8], (nlayers, d_model, d_model))
    p['ob'] = u(ks[9], (nlayers, 1, d_model))
    p['ln1g'] = jnp.ones((nlayers, 1, d_model), jnp.float32)
    p['ln1b'] = jnp.zeros((nlayers, 1, d_model), jnp.float32)
    p['w1'] = u(ks[10], (nlayers, d_model, nfeed_fwd))
    p['b1'] = u(ks[11], (nlayers, 1, nfeed_fwd))
    p['w2'] = u(ks[12], (nlayers, nfeed_fwd, d_model))
    p['b2'] = u(ks[13], (nlayers, 1, d_model))
    p['ln2g'] = jnp.ones((nlayers, 1, d_model), jnp.float32)
    p['ln2b'] = jnp.zeros((nlayers, 1, d_model), jnp.float32)
    p['dec_w'] = u(ks[14], (d_model, out_dim))
    p['dec_b'] = jnp.zeros((1, out_dim), jnp.float32)   # zeroed as in init_weights
    return p


def metamorph_forward(obs, obs_mask, params, *, d_model, nhead, nlayers,
                      block_batch=16, compute_dtype=jnp.float32):
    B, S, F = obs.shape
    out_dim = params['dec_w'].shape[1]
    assert d_model % nhead == 0

    # ---- batch blocking: pack BB sequences into one M = BB*S row slab -------
    if B <= block_batch:
        BB, B_pad = B, B
    else:
        BB = block_batch                               # multiple of 8
        B_pad = ((B + BB - 1) // BB) * BB
    G = B_pad // BB
    M = BB * S

    if B_pad != B:
        obs = jnp.pad(obs, ((0, B_pad - B), (0, 0), (0, 0)))
        # padded batches left unmasked (finite outputs, discarded below)
        obs_mask = jnp.pad(obs_mask, ((0, B_pad - B), (0, 0)))

    cd = compute_dtype
    obs_flat = obs.reshape(B_pad * S, F).astype(cd)

    # additive attention bias (f32): -1e30 for padded keys and cross-sequence
    # pairs (block-diagonal sequence packing), 0 otherwise.
    # TODO(synk): a fully-masked row yields a uniform softmax here, whereas
    # PyTorch MultiheadAttention would produce NaN in that degenerate case.
    key_bias = jnp.where(obs_mask, jnp.float32(-1e30), jnp.float32(0.0)).reshape(G, M)
    ridx = jnp.arange(M)
    same_seq = (ridx[:, None] // S) == (ridx[None, :] // S)
    attn_bias = jnp.where(same_seq[None], key_bias[:, None, :], jnp.float32(-1e30))

    pe_flat = jnp.tile(params['pe'], (BB, 1)).astype(jnp.float32)

    # pad decoder to a lane-dense (multiple of 128) output width
    out_pad = max(128, ((out_dim + 127) // 128) * 128)
    dw = jnp.pad(params['dec_w'], ((0, 0), (0, out_pad - out_dim))).astype(cd)
    db = jnp.pad(params['dec_b'], ((0, 0), (0, out_pad - out_dim))).astype(cd)

    c = lambda a: a.astype(cd)
    f = lambda a: a.astype(jnp.float32)
    inputs = [
        obs_flat, attn_bias,
        c(params['we']), c(params['be']), pe_flat,
        c(params['wq']), c(params['bq']), c(params['wk']), c(params['bk']),
        c(params['wv']), c(params['bv']), c(params['wo']), c(params['ob']),
        f(params['ln1g']), f(params['ln1b']),
        c(params['w1']), c(params['b1']), c(params['w2']), c(params['b2']),
        f(params['ln2g']), f(params['ln2b']),
        dw, db,
    ]

    def const_spec(a):                                  # resident across all steps
        nd = a.ndim
        return pl.BlockSpec(a.shape, lambda g, l, _n=nd: (0,) * _n)

    def layer_spec(a):                                  # streamed per layer step
        nd = a.ndim
        return pl.BlockSpec((1,) + a.shape[1:],
                            lambda g, l, _n=nd - 1: (l,) + (0,) * _n)

    in_specs = [
        pl.BlockSpec((M, F), lambda g, l: (g, 0)),          # obs slab
        pl.BlockSpec((1, M, M), lambda g, l: (g, 0, 0)),    # attention bias
        const_spec(inputs[2]), const_spec(inputs[3]), const_spec(inputs[4]),
    ]
    in_specs += [layer_spec(a) for a in inputs[5:21]]       # per-layer stacks
    in_specs += [const_spec(dw), const_spec(db)]

    kernel = functools.partial(metamorph_kernel,
                               d_model=d_model, nhead=nhead, cdtype=cd)

    out = pl.pallas_call(
        kernel,
        out_shape=jax.ShapeDtypeStruct((G * M, out_pad), jnp.float32),
        grid=(G, nlayers),
        in_specs=in_specs,
        out_specs=pl.BlockSpec((M, out_pad), lambda g, l: (g, 0)),
        scratch_shapes=[pltpu.VMEM((M, d_model), jnp.float32),  # residual stream
                        pltpu.VMEM((M, d_model), jnp.float32)], # head contexts
        compiler_params=pltpu.CompilerParams(
            dimension_semantics=("parallel", "arbitrary"),
            vmem_limit_bytes=32 * 1024 * 1024),
    )(*inputs)

    out = out.reshape(B_pad, S, out_pad)[:B, :, :out_dim]
    return out.reshape(B, S * out_dim)


def reference_forward(obs, obs_mask, p, *, d_model, nhead, nlayers):
    """Pure-JAX reference of the same forward (for validation)."""
    B, S, F = obs.shape
    hd = d_model // nhead
    x = (obs @ p['we'] + p['be'][0]) * math.sqrt(d_model)
    x = x + p['pe'][None]
    bias = jnp.where(obs_mask, -1e30, 0.0)[:, None, None, :]     # [B,1,1,S]

    def ln(x, g, b):
        mu = x.mean(-1, keepdims=True)
        v = ((x - mu) ** 2).mean(-1, keepdims=True)
        return (x - mu) / jnp.sqrt(v + 1e-5) * g + b

    def heads(t):
        return t.reshape(B, S, nhead, hd).transpose(0, 2, 1, 3)

    for l in range(nlayers):
        q = heads(x @ p['wq'][l] + p['bq'][l, 0])
        k = heads(x @ p['wk'][l] + p['bk'][l, 0])
        v = heads(x @ p['wv'][l] + p['bv'][l, 0])
        s = (q @ jnp.swapaxes(k, -1, -2)) / math.sqrt(hd) + bias
        a = jax.nn.softmax(s, axis=-1)
        ctx = (a @ v).transpose(0, 2, 1, 3).reshape(B, S, d_model)
        attn = ctx @ p['wo'][l] + p['ob'][l, 0]
        x = ln(x + attn, p['ln1g'][l, 0], p['ln1b'][l, 0])
        ff = jax.nn.relu(x @ p['w1'][l] + p['b1'][l, 0]) @ p['w2'][l] + p['b2'][l, 0]
        x = ln(x + ff, p['ln2g'][l, 0], p['ln2b'][l, 0])
    y = x @ p['dec_w'] + p['dec_b'][0]
    return y.reshape(B, -1)


if __name__ == "__main__":
    B, S = 2, 8
    input_dim = 16
    d_model = 32
    nhead = 4
    nfeed_fwd = 64
    nlayers = 2
    decoder_out_dim = 8

    key = jax.random.PRNGKey(0)
    k_obs, k_param = jax.random.split(key)

    obs = jax.random.normal(k_obs, (B, S, input_dim), dtype=jnp.float32)
    obs_mask = jnp.zeros((B, S), dtype=bool).at[1, -2:].set(True)  # pad last 2 limbs of batch 1

    params = init_params(k_param, input_dim, d_model, nhead, nfeed_fwd, nlayers,
                         decoder_out_dim, S)

    ref = jax.block_until_ready(
        reference_forward(obs, obs_mask, params,
                          d_model=d_model, nhead=nhead, nlayers=nlayers))

    # f32 compute
    out_f32 = jax.block_until_ready(
        metamorph_forward(obs, obs_mask, params, d_model=d_model, nhead=nhead,
                          nlayers=nlayers, compute_dtype=jnp.float32))
    assert out_f32.shape == (B, S * decoder_out_dim), out_f32.shape
    err32 = float(jnp.max(jnp.abs(out_f32 - ref)))
    assert err32 < 5e-3, err32

    # bf16 MXU inputs, f32 accumulation / mask / softmax / LayerNorm stats
    out_bf16 = jax.block_until_ready(
        metamorph_forward(obs, obs_mask, params, d_model=d_model, nhead=nhead,
                          nlayers=nlayers, compute_dtype=jnp.bfloat16))
    err16 = float(jnp.max(jnp.abs(out_bf16 - ref)))
    assert err16 < 0.15, err16

    print("KERNEL_OK")
</pallas_src>

<mosaic_0001>
module attributes {stable_mosaic.version = 11 : i64} {
  func.func @metamorph_kernel(%arg0: i32, %arg1: i32, %arg2: memref<16x16xf32, #tpu.memory_space<vmem>>, %arg3: memref<1x16x16xf32, #tpu.memory_space<vmem>>, %arg4: memref<16x32xf32, #tpu.memory_space<vmem>>, %arg5: memref<1x32xf32, #tpu.memory_space<vmem>>, %arg6: memref<16x32xf32, #tpu.memory_space<vmem>>, %arg7: memref<1x32x32xf32, #tpu.memory_space<vmem>>, %arg8: memref<1x1x32xf32, #tpu.memory_space<vmem>>, %arg9: memref<1x32x32xf32, #tpu.memory_space<vmem>>, %arg10: memref<1x1x32xf32, #tpu.memory_space<vmem>>, %arg11: memref<1x32x32xf32, #tpu.memory_space<vmem>>, %arg12: memref<1x1x32xf32, #tpu.memory_space<vmem>>, %arg13: memref<1x32x32xf32, #tpu.memory_space<vmem>>, %arg14: memref<1x1x32xf32, #tpu.memory_space<vmem>>, %arg15: memref<1x1x32xf32, #tpu.memory_space<vmem>>, %arg16: memref<1x1x32xf32, #tpu.memory_space<vmem>>, %arg17: memref<1x32x64xf32, #tpu.memory_space<vmem>>, %arg18: memref<1x1x64xf32, #tpu.memory_space<vmem>>, %arg19: memref<1x64x32xf32, #tpu.memory_space<vmem>>, %arg20: memref<1x1x32xf32, #tpu.memory_space<vmem>>, %arg21: memref<1x1x32xf32, #tpu.memory_space<vmem>>, %arg22: memref<1x1x32xf32, #tpu.memory_space<vmem>>, %arg23: memref<32x128xf32, #tpu.memory_space<vmem>>, %arg24: memref<1x128xf32, #tpu.memory_space<vmem>>, %arg25: memref<16x128xf32, #tpu.memory_space<vmem>>, %arg26: memref<16x32xf32, #tpu.memory_space<vmem>>, %arg27: memref<16x32xf32, #tpu.memory_space<vmem>>) attributes {dimension_semantics = [#tpu.dimension_semantics<parallel>, #tpu.dimension_semantics<arbitrary>], iteration_bounds = array<i64: 1, 2>, scalar_prefetch = 0 : i64, scratch_operands = 2 : i64, tpu.core_type = #tpu.core_type<tc>, window_params = [{transform_indices = @transform_0, window_bounds = array<i64: 16, 16>}, {transform_indices = @transform_1, window_bounds = array<i64: 1, 16, 16>}, {pipeline_mode = #tpu.pipeline_mode<synchronous>, transform_indices = @transform_2, window_bounds = array<i64: 16, 32>}, {pipeline_mode = #tpu.pipeline_mode<synchronous>, transform_indices = @transform_3, window_bounds = array<i64: 1, 32>}, {pipeline_mode = #tpu.pipeline_mode<synchronous>, transform_indices = @transform_4, window_bounds = array<i64: 16, 32>}, {transform_indices = @transform_5, window_bounds = array<i64: 1, 32, 32>}, {transform_indices = @transform_6, window_bounds = array<i64: 1, 1, 32>}, {transform_indices = @transform_7, window_bounds = array<i64: 1, 32, 32>}, {transform_indices = @transform_8, window_bounds = array<i64: 1, 1, 32>}, {transform_indices = @transform_9, window_bounds = array<i64: 1, 32, 32>}, {transform_indices = @transform_10, window_bounds = array<i64: 1, 1, 32>}, {transform_indices = @transform_11, window_bounds = array<i64: 1, 32, 32>}, {transform_indices = @transform_12, window_bounds = array<i64: 1, 1, 32>}, {transform_indices = @transform_13, window_bounds = array<i64: 1, 1, 32>}, {transform_indices = @transform_14, window_bounds = array<i64: 1, 1, 32>}, {transform_indices = @transform_15, window_bounds = array<i64: 1, 32, 64>}, {transform_indices = @transform_16, window_bounds = array<i64: 1, 1, 64>}, {transform_indices = @transform_17, window_bounds = array<i64: 1, 64, 32>}, {transform_indices = @transform_18, window_bounds = array<i64: 1, 1, 32>}, {transform_indices = @transform_19, window_bounds = array<i64: 1, 1, 32>}, {transform_indices = @transform_20, window_bounds = array<i64: 1, 1, 32>}, {pipeline_mode = #tpu.pipeline_mode<synchronous>, transform_indices = @transform_21, window_bounds = array<i64: 32, 128>}, {pipeline_mode = #tpu.pipeline_mode<synchronous>, transform_indices = @transform_22, window_bounds = array<i64: 1, 128>}, {transform_indices = @transform_23, window_bounds = array<i64: 16, 128>}]} {
    %c0_i32 = arith.constant 0 : i32
    %0 = arith.cmpi eq, %arg1, %c0_i32 : i32
    %1 = arith.extui %0 : i1 to i32
    %c0_i32_0 = arith.constant 0 : i32
    %2 = arith.cmpi ne, %1, %c0_i32_0 : i32
    scf.if %2 {
      %c0_99 = arith.constant 0 : index
      %c0_100 = arith.constant 0 : index
      %185 = vector.load %arg2[%c0_99, %c0_100] : memref<16x16xf32, #tpu.memory_space<vmem>>, vector<16x16xf32>
      %c0_101 = arith.constant 0 : index
      %c0_102 = arith.constant 0 : index
      %186 = vector.load %arg4[%c0_101, %c0_102] : memref<16x32xf32, #tpu.memory_space<vmem>>, vector<16x32xf32>
      %cst_103 = arith.constant dense<0.000000e+00> : vector<16x32xf32>
      %187 = tpu.matmul %185, %186, %cst_103 {dimension_numbers = #tpu.dot_dimension_numbers<[1], [0], [0], [1], [0, 0, 1, 1], [], []>} : vector<16x16xf32>, vector<16x32xf32>, vector<16x32xf32> -> vector<16x32xf32>
      %c0_104 = arith.constant 0 : index
      %c0_105 = arith.constant 0 : index
      %188 = vector.load %arg5[%c0_104, %c0_105] : memref<1x32xf32, #tpu.memory_space<vmem>>, vector<1x32xf32>
      %189 = vector.broadcast %188 : vector<1x32xf32> to vector<16x32xf32>
      %190 = arith.addf %187, %189 : vector<16x32xf32>
      %cst_106 = arith.constant 5.65685415 : f32
      %191 = vector.broadcast %cst_106 : f32 to vector<16x32xf32>
      %192 = arith.mulf %190, %191 : vector<16x32xf32>
      %c0_107 = arith.constant 0 : index
      %c0_108 = arith.constant 0 : index
      %193 = vector.load %arg6[%c0_107, %c0_108] : memref<16x32xf32, #tpu.memory_space<vmem>>, vector<16x32xf32>
      %194 = arith.addf %192, %193 : vector<16x32xf32>
      %c0_109 = arith.constant 0 : index
      %c0_110 = arith.constant 0 : index
      %195 = vector.load %arg26[%c0_109, %c0_110] : memref<16x32xf32, #tpu.memory_space<vmem>>, vector<16x32xf32>
      tpu.vector_store %arg26[%c0_109, %c0_110], %194 {strides = array<i32>} : memref<16x32xf32, #tpu.memory_space<vmem>>, vector<16x32xf32>,
    } else {
    }
    %c0 = arith.constant 0 : index
    %c0_1 = arith.constant 0 : index
    %3 = vector.load %arg26[%c0, %c0_1] : memref<16x32xf32, #tpu.memory_space<vmem>>, vector<16x32xf32>
    %c0_2 = arith.constant 0 : index
    %c0_3 = arith.constant 0 : index
    %c0_4 = arith.constant 0 : index
    %4 = vector.load %arg7[%c0_2, %c0_3, %c0_4] : memref<1x32x32xf32, #tpu.memory_space<vmem>>, vector<1x32x32xf32>
    %5 = vector.shape_cast %4 : vector<1x32x32xf32> to vector<32x32xf32>
    %cst = arith.constant dense<0.000000e+00> : vector<16x32xf32>
    %6 = tpu.matmul %3, %5, %cst {dimension_numbers = #tpu.dot_dimension_numbers<[1], [0], [0], [1], [0, 0, 1, 1], [], []>} : vector<16x32xf32>, vector<32x32xf32>, vector<16x32xf32> -> vector<16x32xf32>
    %c0_5 = arith.constant 0 : index
    %c0_6 = arith.constant 0 : index
    %c0_7 = arith.constant 0 : index
    %7 = vector.load %arg8[%c0_5, %c0_6, %c0_7] : memref<1x1x32xf32, #tpu.memory_space<vmem>>, vector<1x1x32xf32>
    %8 = vector.shape_cast %7 : vector<1x1x32xf32> to vector<1x32xf32>
    %9 = vector.broadcast %8 : vector<1x32xf32> to vector<16x32xf32>
    %10 = arith.addf %6, %9 : vector<16x32xf32>
    %c0_8 = arith.constant 0 : index
    %c0_9 = arith.constant 0 : index
    %c0_10 = arith.constant 0 : index
    %11 = vector.load %arg9[%c0_8, %c0_9, %c0_10] : memref<1x32x32xf32, #tpu.memory_space<vmem>>, vector<1x32x32xf32>
    %12 = vector.shape_cast %11 : vector<1x32x32xf32> to vector<32x32xf32>
    %cst_11 = arith.constant dense<0.000000e+00> : vector<16x32xf32>
    %13 = tpu.matmul %3, %12, %cst_11 {dimension_numbers = #tpu.dot_dimension_numbers<[1], [0], [0], [1], [0, 0, 1, 1], [], []>} : vector<16x32xf32>, vector<32x32xf32>, vector<16x32xf32> -> vector<16x32xf32>
    %c0_12 = arith.constant 0 : index
    %c0_13 = arith.constant 0 : index
    %c0_14 = arith.constant 0 : index
    %14 = vector.load %arg10[%c0_12, %c0_13, %c0_14] : memref<1x1x32xf32, #tpu.memory_space<vmem>>, vector<1x1x32xf32>
    %15 = vector.shape_cast %14 : vector<1x1x32xf32> to vector<1x32xf32>
    %16 = vector.broadcast %15 : vector<1x32xf32> to vector<16x32xf32>
    %17 = arith.addf %13, %16 : vector<16x32xf32>
    %c0_15 = arith.constant 0 : index
    %c0_16 = arith.constant 0 : index
    %c0_17 = arith.constant 0 : index
    %18 = vector.load %arg11[%c0_15, %c0_16, %c0_17] : memref<1x32x32xf32, #tpu.memory_space<vmem>>, vector<1x32x32xf32>
    %19 = vector.shape_cast %18 : vector<1x32x32xf32> to vector<32x32xf32>
    %cst_18 = arith.constant dense<0.000000e+00> : vector<16x32xf32>
    %20 = tpu.matmul %3, %19, %cst_18 {dimension_numbers = #tpu.dot_dimension_numbers<[1], [0], [0], [1], [0, 0, 1, 1], [], []>} : vector<16x32xf32>, vector<32x32xf32>, vector<16x32xf32> -> vector<16x32xf32>
    %c0_19 = arith.constant 0 : index
    %c0_20 = arith.constant 0 : index
    %c0_21 = arith.constant 0 : index
    %21 = vector.load %arg12[%c0_19, %c0_20, %c0_21] : memref<1x1x32xf32, #tpu.memory_space<vmem>>, vector<1x1x32xf32>
    %22 = vector.shape_cast %21 : vector<1x1x32xf32> to vector<1x32xf32>
    %23 = vector.broadcast %22 : vector<1x32xf32> to vector<16x32xf32>
    %24 = arith.addf %20, %23 : vector<16x32xf32>
    %c0_22 = arith.constant 0 : index
    %c0_23 = arith.constant 0 : index
    %c0_24 = arith.constant 0 : index
    %25 = vector.load %arg3[%c0_22, %c0_23, %c0_24] : memref<1x16x16xf32, #tpu.memory_space<vmem>>, vector<1x16x16xf32>
    %26 = vector.shape_cast %25 : vector<1x16x16xf32> to vector<16x16xf32>
    %27 = vector.extract_strided_slice %10 {offsets = [0, 0], sizes = [16, 8], strides = [1, 1]} : vector<16x32xf32> to vector<16x8xf32>
    %28 = vector.extract_strided_slice %17 {offsets = [0, 0], sizes = [16, 8], strides = [1, 1]} : vector<16x32xf32> to vector<16x8xf32>
    %cst_25 = arith.constant dense<0.000000e+00> : vector<16x16xf32>
    %29 = tpu.matmul %27, %28, %cst_25 {dimension_numbers = #tpu.dot_dimension_numbers<[1], [1], [0], [0], [0, 0, 1, 0], [], []>} : vector<16x8xf32>, vector<16x8xf32>, vector<16x16xf32> -> vector<16x16xf32>
    %cst_26 = arith.constant 0.353553385 : f32
    %30 = vector.broadcast %cst_26 : f32 to vector<16x16xf32>
    %31 = arith.mulf %29, %30 : vector<16x16xf32>
    %32 = arith.addf %31, %26 : vector<16x16xf32>
    %cst_27 = arith.constant dense<0xFF800000> : vector<16xf32>
    %33 = vector.multi_reduction <maximumf>, %32, %cst_27 [1] : vector<16x16xf32> to vector<16xf32>
    %34 = vector.shape_cast %33 : vector<16xf32> to vector<16x1xf32>
    %35 = vector.broadcast %34 : vector<16x1xf32> to vector<16x16xf32>
    %36 = arith.subf %32, %35 : vector<16x16xf32>
    %37 = math.exp %36 : vector<16x16xf32>
    %cst_28 = arith.constant dense<0.000000e+00> : vector<16xf32>
    %38 = vector.multi_reduction <add>, %37, %cst_28 [1] : vector<16x16xf32> to vector<16xf32>
    %39 = vector.shape_cast %38 : vector<16xf32> to vector<16x1xf32>
    %40 = tpu.reciprocal %39 {approx = true} : vector<16x1xf32> -> vector<16x1xf32>
    %41 = vector.broadcast %40 : vector<16x1xf32> to vector<16x16xf32>
    %42 = arith.mulf %37, %41 : vector<16x16xf32>
    %43 = vector.extract_strided_slice %24 {offsets = [0, 0], sizes = [16, 8], strides = [1, 1]} : vector<16x32xf32> to vector<16x8xf32>
    %cst_29 = arith.constant dense<0.000000e+00> : vector<16x8xf32>
    %44 = tpu.matmul %42, %43, %cst_29 {dimension_numbers = #tpu.dot_dimension_numbers<[1], [0], [0], [1], [0, 0, 1, 1], [], []>} : vector<16x16xf32>, vector<16x8xf32>, vector<16x8xf32> -> vector<16x8xf32>
    %c0_30 = arith.constant 0 : index
    %c0_31 = arith.constant 0 : index
    %45 = vector.load %arg27[%c0_30, %c0_31] : memref<16x32xf32, #tpu.memory_space<vmem>>, vector<16x8xf32>
    tpu.vector_store %arg27[%c0_30, %c0_31], %44 {strides = array<i32>} : memref<16x32xf32, #tpu.memory_space<vmem>>, vector<16x8xf32>,
    %46 = vector.extract_strided_slice %10 {offsets = [0, 8], sizes = [16, 8], strides = [1, 1]} : vector<16x32xf32> to vector<16x8xf32>
    %47 = vector.extract_strided_slice %17 {offsets = [0, 8], sizes = [16, 8], strides = [1, 1]} : vector<16x32xf32> to vector<16x8xf32>
    %cst_32 = arith.constant dense<0.000000e+00> : vector<16x16xf32>
    %48 = tpu.matmul %46, %47, %cst_32 {dimension_numbers = #tpu.dot_dimension_numbers<[1], [1], [0], [0], [0, 0, 1, 0], [], []>} : vector<16x8xf32>, vector<16x8xf32>, vector<16x16xf32> -> vector<16x16xf32>
    %cst_33 = arith.constant 0.353553385 : f32
    %49 = vector.broadcast %cst_33 : f32 to vector<16x16xf32>
    %50 = arith.mulf %48, %49 : vector<16x16xf32>
    %51 = arith.addf %50, %26 : vector<16x16xf32>
    %cst_34 = arith.constant dense<0xFF800000> : vector<16xf32>
    %52 = vector.multi_reduction <maximumf>, %51, %cst_34 [1] : vector<16x16xf32> to vector<16xf32>
    %53 = vector.shape_cast %52 : vector<16xf32> to vector<16x1xf32>
    %54 = vector.broadcast %53 : vector<16x1xf32> to vector<16x16xf32>
    %55 = arith.subf %51, %54 : vector<16x16xf32>
    %56 = math.exp %55 : vector<16x16xf32>
    %cst_35 = arith.constant dense<0.000000e+00> : vector<16xf32>
    %57 = vector.multi_reduction <add>, %56, %cst_35 [1] : vector<16x16xf32> to vector<16xf32>
    %58 = vector.shape_cast %57 : vector<16xf32> to vector<16x1xf32>
    %59 = tpu.reciprocal %58 {approx = true} : vector<16x1xf32> -> vector<16x1xf32>
    %60 = vector.broadcast %59 : vector<16x1xf32> to vector<16x16xf32>
    %61 = arith.mulf %56, %60 : vector<16x16xf32>
    %62 = vector.extract_strided_slice %24 {offsets = [0, 8], sizes = [16, 8], strides = [1, 1]} : vector<16x32xf32> to vector<16x8xf32>
    %cst_36 = arith.constant dense<0.000000e+00> : vector<16x8xf32>
    %63 = tpu.matmul %61, %62, %cst_36 {dimension_numbers = #tpu.dot_dimension_numbers<[1], [0], [0], [1], [0, 0, 1, 1], [], []>} : vector<16x16xf32>, vector<16x8xf32>, vector<16x8xf32> -> vector<16x8xf32>
    %c0_37 = arith.constant 0 : index
    %c8 = arith.constant 8 : index
    %64 = vector.load %arg27[%c0_37, %c8] : memref<16x32xf32, #tpu.memory_space<vmem>>, vector<16x8xf32>
    tpu.vector_store %arg27[%c0_37, %c8], %63 {strides = array<i32>} : memref<16x32xf32, #tpu.memory_space<vmem>>, vector<16x8xf32>,
    %65 = vector.extract_strided_slice %10 {offsets = [0, 16], sizes = [16, 8], strides = [1, 1]} : vector<16x32xf32> to vector<16x8xf32>
    %66 = vector.extract_strided_slice %17 {offsets = [0, 16], sizes = [16, 8], strides = [1, 1]} : vector<16x32xf32> to vector<16x8xf32>
    %cst_38 = arith.constant dense<0.000000e+00> : vector<16x16xf32>
    %67 = tpu.matmul %65, %66, %cst_38 {dimension_numbers = #tpu.dot_dimension_numbers<[1], [1], [0], [0], [0, 0, 1, 0], [], []>} : vector<16x8xf32>, vector<16x8xf32>, vector<16x16xf32> -> vector<16x16xf32>
    %cst_39 = arith.constant 0.353553385 : f32
    %68 = vector.broadcast %cst_39 : f32 to vector<16x16xf32>
    %69 = arith.mulf %67, %68 : vector<16x16xf32>
    %70 = arith.addf %69, %26 : vector<16x16xf32>
    %cst_40 = arith.constant dense<0xFF800000> : vector<16xf32>
    %71 = vector.multi_reduction <maximumf>, %70, %cst_40 [1] : vector<16x16xf32> to vector<16xf32>
    %72 = vector.shape_cast %71 : vector<16xf32> to vector<16x1xf32>
    %73 = vector.broadcast %72 : vector<16x1xf32> to vector<16x16xf32>
    %74 = arith.subf %70, %73 : vector<16x16xf32>
    %75 = math.exp %74 : vector<16x16xf32>
    %cst_41 = arith.constant dense<0.000000e+00> : vector<16xf32>
    %76 = vector.multi_reduction <add>, %75, %cst_41 [1] : vector<16x16xf32> to vector<16xf32>
    %77 = vector.shape_cast %76 : vector<16xf32> to vector<16x1xf32>
    %78 = tpu.reciprocal %77 {approx = true} : vector<16x1xf32> -> vector<16x1xf32>
    %79 = vector.broadcast %78 : vector<16x1xf32> to vector<16x16xf32>
    %80 = arith.mulf %75, %79 : vector<16x16xf32>
    %81 = vector.extract_strided_slice %24 {offsets = [0, 16], sizes = [16, 8], strides = [1, 1]} : vector<16x32xf32> to vector<16x8xf32>
    %cst_42 = arith.constant dense<0.000000e+00> : vector<16x8xf32>
    %82 = tpu.matmul %80, %81, %cst_42 {dimension_numbers = #tpu.dot_dimension_numbers<[1], [0], [0], [1], [0, 0, 1, 1], [], []>} : vector<16x16xf32>, vector<16x8xf32>, vector<16x8xf32> -> vector<16x8xf32>
    %c0_43 = arith.constant 0 : index
    %c16 = arith.constant 16 : index
    %83 = vector.load %arg27[%c0_43, %c16] : memref<16x32xf32, #tpu.memory_space<vmem>>, vector<16x8xf32>
    tpu.vector_store %arg27[%c0_43, %c16], %82 {strides = array<i32>} : memref<16x32xf32, #tpu.memory_space<vmem>>, vector<16x8xf32>,
    %84 = vector.extract_strided_slice %10 {offsets = [0, 24], sizes = [16, 8], strides = [1, 1]} : vector<16x32xf32> to vector<16x8xf32>
    %85 = vector.extract_strided_slice %17 {offsets = [0, 24], sizes = [16, 8], strides = [1, 1]} : vector<16x32xf32> to vector<16x8xf32>
    %cst_44 = arith.constant dense<0.000000e+00> : vector<16x16xf32>
    %86 = tpu.matmul %84, %85, %cst_44 {dimension_numbers = #tpu.dot_dimension_numbers<[1], [1], [0], [0], [0, 0, 1, 0], [], []>} : vector<16x8xf32>, vector<16x8xf32>, vector<16x16xf32> -> vector<16x16xf32>
    %cst_45 = arith.constant 0.353553385 : f32
    %87 = vector.broadcast %cst_45 : f32 to vector<16x16xf32>
    %88 = arith.mulf %86, %87 : vector<16x16xf32>
    %89 = arith.addf %88, %26 : vector<16x16xf32>
    %cst_46 = arith.constant dense<0xFF800000> : vector<16xf32>
    %90 = vector.multi_reduction <maximumf>, %89, %cst_46 [1] : vector<16x16xf32> to vector<16xf32>
    %91 = vector.shape_cast %90 : vector<16xf32> to vector<16x1xf32>
    %92 = vector.broadcast %91 : vector<16x1xf32> to vector<16x16xf32>
    %93 = arith.subf %89, %92 : vector<16x16xf32>
    %94 = math.exp %93 : vector<16x16xf32>
    %cst_47 = arith.constant dense<0.000000e+00> : vector<16xf32>
    %95 = vector.multi_reduction <add>, %94, %cst_47 [1] : vector<16x16xf32> to vector<16xf32>
    %96 = vector.shape_cast %95 : vector<16xf32> to vector<16x1xf32>
    %97 = tpu.reciprocal %96 {approx = true} : vector<16x1xf32> -> vector<16x1xf32>
    %98 = vector.broadcast %97 : vector<16x1xf32> to vector<16x16xf32>
    %99 = arith.mulf %94, %98 : vector<16x16xf32>
    %100 = vector.extract_strided_slice %24 {offsets = [0, 24], sizes = [16, 8], strides = [1, 1]} : vector<16x32xf32> to vector<16x8xf32>
    %cst_48 = arith.constant dense<0.000000e+00> : vector<16x8xf32>
    %101 = tpu.matmul %99, %100, %cst_48 {dimension_numbers = #tpu.dot_dimension_numbers<[1], [0], [0], [1], [0, 0, 1, 1], [], []>} : vector<16x16xf32>, vector<16x8xf32>, vector<16x8xf32> -> vector<16x8xf32>
    %c0_49 = arith.constant 0 : index
    %c24 = arith.constant 24 : index
    %102 = vector.load %arg27[%c0_49, %c24] : memref<16x32xf32, #tpu.memory_space<vmem>>, vector<16x8xf32>
    tpu.vector_store %arg27[%c0_49, %c24], %101 {strides = array<i32>} : memref<16x32xf32, #tpu.memory_space<vmem>>, vector<16x8xf32>,
    %c0_50 = arith.constant 0 : index
    %c0_51 = arith.constant 0 : index
    %103 = vector.load %arg27[%c0_50, %c0_51] : memref<16x32xf32, #tpu.memory_space<vmem>>, vector<16x32xf32>
    %c0_52 = arith.constant 0 : index
    %c0_53 = arith.constant 0 : index
    %c0_54 = arith.constant 0 : index
    %104 = vector.load %arg13[%c0_52, %c0_53, %c0_54] : memref<1x32x32xf32, #tpu.memory_space<vmem>>, vector<1x32x32xf32>
    %105 = vector.shape_cast %104 : vector<1x32x32xf32> to vector<32x32xf32>
    %cst_55 = arith.constant dense<0.000000e+00> : vector<16x32xf32>
    %106 = tpu.matmul %103, %105, %cst_55 {dimension_numbers = #tpu.dot_dimension_numbers<[1], [0], [0], [1], [0, 0, 1, 1], [], []>} : vector<16x32xf32>, vector<32x32xf32>, vector<16x32xf32> -> vector<16x32xf32>
    %c0_56 = arith.constant 0 : index
    %c0_57 = arith.constant 0 : index
    %c0_58 = arith.constant 0 : index
    %107 = vector.load %arg14[%c0_56, %c0_57, %c0_58] : memref<1x1x32xf32, #tpu.memory_space<vmem>>, vector<1x1x32xf32>
    %108 = vector.shape_cast %107 : vector<1x1x32xf32> to vector<1x32xf32>
    %109 = vector.broadcast %108 : vector<1x32xf32> to vector<16x32xf32>
    %110 = arith.addf %106, %109 : vector<16x32xf32>
    %111 = arith.addf %3, %110 : vector<16x32xf32>
    %c0_59 = arith.constant 0 : index
    %c0_60 = arith.constant 0 : index
    %c0_61 = arith.constant 0 : index
    %112 = vector.load %arg15[%c0_59, %c0_60, %c0_61] : memref<1x1x32xf32, #tpu.memory_space<vmem>>, vector<1x1x32xf32>
    %113 = vector.shape_cast %112 : vector<1x1x32xf32> to vector<1x32xf32>
    %c0_62 = arith.constant 0 : index
    %c0_63 = arith.constant 0 : index
    %c0_64 = arith.constant 0 : index
    %114 = vector.load %arg16[%c0_62, %c0_63, %c0_64] : memref<1x1x32xf32, #tpu.memory_space<vmem>>, vector<1x1x32xf32>
    %115 = vector.shape_cast %114 : vector<1x1x32xf32> to vector<1x32xf32>
    %cst_65 = arith.constant dense<0.000000e+00> : vector<16xf32>
    %116 = vector.multi_reduction <add>, %111, %cst_65 [1] : vector<16x32xf32> to vector<16xf32>
    %117 = vector.shape_cast %116 : vector<16xf32> to vector<16x1xf32>
    %cst_66 = arith.constant 3.200000e+01 : f32
    %118 = vector.broadcast %cst_66 : f32 to vector<16x1xf32>
    %119 = arith.divf %117, %118 : vector<16x1xf32>
    %120 = vector.broadcast %119 : vector<16x1xf32> to vector<16x32xf32>
    %121 = arith.subf %111, %120 : vector<16x32xf32>
    %122 = arith.mulf %121, %121 : vector<16x32xf32>
    %cst_67 = arith.constant dense<0.000000e+00> : vector<16xf32>
    %123 = vector.multi_reduction <add>, %122, %cst_67 [1] : vector<16x32xf32> to vector<16xf32>
    %124 = vector.shape_cast %123 : vector<16xf32> to vector<16x1xf32>
    %cst_68 = arith.constant 3.200000e+01 : f32
    %125 = vector.broadcast %cst_68 : f32 to vector<16x1xf32>
    %126 = arith.divf %124, %125 : vector<16x1xf32>
    %127 = vector.broadcast %119 : vector<16x1xf32> to vector<16x32xf32>
    %128 = arith.subf %111, %127 : vector<16x32xf32>
    %cst_69 = arith.constant 9.99999974E-6 : f32
    %129 = vector.broadcast %cst_69 : f32 to vector<16x1xf32>
    %130 = arith.addf %126, %129 : vector<16x1xf32>
    %131 = math.rsqrt %130 : vector<16x1xf32>
    %132 = vector.broadcast %131 : vector<16x1xf32> to vector<16x32xf32>
    %133 = arith.mulf %128, %132 : vector<16x32xf32>
    %134 = vector.broadcast %113 : vector<1x32xf32> to vector<16x32xf32>
    %135 = arith.mulf %133, %134 : vector<16x32xf32>
    %136 = vector.broadcast %115 : vector<1x32xf32> to vector<16x32xf32>
    %137 = arith.addf %135, %136 : vector<16x32xf32>
    %c0_70 = arith.constant 0 : index
    %c0_71 = arith.constant 0 : index
    %c0_72 = arith.constant 0 : index
    %138 = vector.load %arg17[%c0_70, %c0_71, %c0_72] : memref<1x32x64xf32, #tpu.memory_space<vmem>>, vector<1x32x64xf32>
    %139 = vector.shape_cast %138 : vector<1x32x64xf32> to vector<32x64xf32>
    %cst_73 = arith.constant dense<0.000000e+00> : vector<16x64xf32>
    %140 = tpu.matmul %137, %139, %cst_73 {dimension_numbers = #tpu.dot_dimension_numbers<[1], [0], [0], [1], [0, 0, 1, 1], [], []>} : vector<16x32xf32>, vector<32x64xf32>, vector<16x64xf32> -> vector<16x64xf32>
    %c0_74 = arith.constant 0 : index
    %c0_75 = arith.constant 0 : index
    %c0_76 = arith.constant 0 : index
    %141 = vector.load %arg18[%c0_74, %c0_75, %c0_76] : memref<1x1x64xf32, #tpu.memory_space<vmem>>, vector<1x1x64xf32>
    %142 = vector.shape_cast %141 : vector<1x1x64xf32> to vector<1x64xf32>
    %143 = vector.broadcast %142 : vector<1x64xf32> to vector<16x64xf32>
    %144 = arith.addf %140, %143 : vector<16x64xf32>
    %cst_77 = arith.constant 0.000000e+00 : f32
    %145 = vector.broadcast %cst_77 : f32 to vector<16x64xf32>
    %146 = arith.maximumf %144, %145 : vector<16x64xf32>
    %c0_78 = arith.constant 0 : index
    %c0_79 = arith.constant 0 : index
    %c0_80 = arith.constant 0 : index
    %147 = vector.load %arg19[%c0_78, %c0_79, %c0_80] : memref<1x64x32xf32, #tpu.memory_space<vmem>>, vector<1x64x32xf32>
    %148 = vector.shape_cast %147 : vector<1x64x32xf32> to vector<64x32xf32>
    %cst_81 = arith.constant dense<0.000000e+00> : vector<16x32xf32>
    %149 = tpu.matmul %146, %148, %cst_81 {dimension_numbers = #tpu.dot_dimension_numbers<[1], [0], [0], [1], [0, 0, 1, 1], [], []>} : vector<16x64xf32>, vector<64x32xf32>, vector<16x32xf32> -> vector<16x32xf32>
    %c0_82 = arith.constant 0 : index
    %c0_83 = arith.constant 0 : index
    %c0_84 = arith.constant 0 : index
    %150 = vector.load %arg20[%c0_82, %c0_83, %c0_84] : memref<1x1x32xf32, #tpu.memory_space<vmem>>, vector<1x1x32xf32>
    %151 = vector.shape_cast %150 : vector<1x1x32xf32> to vector<1x32xf32>
    %152 = vector.broadcast %151 : vector<1x32xf32> to vector<16x32xf32>
    %153 = arith.addf %149, %152 : vector<16x32xf32>
    %154 = arith.addf %137, %153 : vector<16x32xf32>
    %c0_85 = arith.constant 0 : index
    %c0_86 = arith.constant 0 : index
    %c0_87 = arith.constant 0 : index
    %155 = vector.load %arg21[%c0_85, %c0_86, %c0_87] : memref<1x1x32xf32, #tpu.memory_space<vmem>>, vector<1x1x32xf32>
    %156 = vector.shape_cast %155 : vector<1x1x32xf32> to vector<1x32xf32>
    %c0_88 = arith.constant 0 : index
    %c0_89 = arith.constant 0 : index
    %c0_90 = arith.constant 0 : index
    %157 = vector.load %arg22[%c0_88, %c0_89, %c0_90] : memref<1x1x32xf32, #tpu.memory_space<vmem>>, vector<1x1x32xf32>
    %158 = vector.shape_cast %157 : vector<1x1x32xf32> to vector<1x32xf32>
    %cst_91 = arith.constant dense<0.000000e+00> : vector<16xf32>
    %159 = vector.multi_reduction <add>, %154, %cst_91 [1] : vector<16x32xf32> to vector<16xf32>
    %160 = vector.shape_cast %159 : vector<16xf32> to vector<16x1xf32>
    %cst_92 = arith.constant 3.200000e+01 : f32
    %161 = vector.broadcast %cst_92 : f32 to vector<16x1xf32>
    %162 = arith.divf %160, %161 : vector<16x1xf32>
    %163 = vector.broadcast %162 : vector<16x1xf32> to vector<16x32xf32>
    %164 = arith.subf %154, %163 : vector<16x32xf32>
    %165 = arith.mulf %164, %164 : vector<16x32xf32>
    %cst_93 = arith.constant dense<0.000000e+00> : vector<16xf32>
    %166 = vector.multi_reduction <add>, %165, %cst_93 [1] : vector<16x32xf32> to vector<16xf32>
    %167 = vector.shape_cast %166 : vector<16xf32> to vector<16x1xf32>
    %cst_94 = arith.constant 3.200000e+01 : f32
    %168 = vector.broadcast %cst_94 : f32 to vector<16x1xf32>
    %169 = arith.divf %167, %168 : vector<16x1xf32>
    %170 = vector.broadcast %162 : vector<16x1xf32> to vector<16x32xf32>
    %171 = arith.subf %154, %170 : vector<16x32xf32>
    %cst_95 = arith.constant 9.99999974E-6 : f32
    %172 = vector.broadcast %cst_95 : f32 to vector<16x1xf32>
    %173 = arith.addf %169, %172 : vector<16x1xf32>
    %174 = math.rsqrt %173 : vector<16x1xf32>
    %175 = vector.broadcast %174 : vector<16x1xf32> to vector<16x32xf32>
    %176 = arith.mulf %171, %175 : vector<16x32xf32>
    %177 = vector.broadcast %156 : vector<1x32xf32> to vector<16x32xf32>
    %178 = arith.mulf %176, %177 : vector<16x32xf32>
    %179 = vector.broadcast %158 : vector<1x32xf32> to vector<16x32xf32>
    %180 = arith.addf %178, %179 : vector<16x32xf32>
    %c0_96 = arith.constant 0 : index
    %c0_97 = arith.constant 0 : index
    %181 = vector.load %arg26[%c0_96, %c0_97] : memref<16x32xf32, #tpu.memory_space<vmem>>, vector<16x32xf32>
    tpu.vector_store %arg26[%c0_96, %c0_97], %180 {strides = array<i32>} : memref<16x32xf32, #tpu.memory_space<vmem>>, vector<16x32xf32>,
    %c1_i32 = arith.constant 1 : i32
    %182 = arith.cmpi eq, %arg1, %c1_i32 : i32
    %183 = arith.extui %182 : i1 to i32
    %c0_i32_98 = arith.constant 0 : i32
    %184 = arith.cmpi ne, %183, %c0_i32_98 : i32
    scf.if %184 {
      %c0_99 = arith.constant 0 : index
      %c0_100 = arith.constant 0 : index
      %185 = vector.load %arg23[%c0_99, %c0_100] : memref<32x128xf32, #tpu.memory_space<vmem>>, vector<32x128xf32>
      %cst_101 = arith.constant dense<0.000000e+00> : vector<16x128xf32>
      %186 = tpu.matmul %180, %185, %cst_101 {dimension_numbers = #tpu.dot_dimension_numbers<[1], [0], [0], [1], [0, 0, 1, 1], [], []>} : vector<16x32xf32>, vector<32x128xf32>, vector<16x128xf32> -> vector<16x128xf32>
      %c0_102 = arith.constant 0 : index
      %c0_103 = arith.constant 0 : index
      %187 = vector.load %arg24[%c0_102, %c0_103] : memref<1x128xf32, #tpu.memory_space<vmem>>, vector<1x128xf32>
      %188 = vector.broadcast %187 : vector<1x128xf32> to vector<16x128xf32>
      %189 = arith.addf %186, %188 : vector<16x128xf32>
      %c0_104 = arith.constant 0 : index
      %c0_105 = arith.constant 0 : index
      %190 = vector.load %arg25[%c0_104, %c0_105] : memref<16x128xf32, #tpu.memory_space<vmem>>, vector<16x128xf32>
      tpu.vector_store %arg25[%c0_104, %c0_105], %189 {strides = array<i32>} : memref<16x128xf32, #tpu.memory_space<vmem>>, vector<16x128xf32>,
    } else {
    }
    return
  }
  func.func @transform_0(%arg0: i32, %arg1: i32) -> (i32, i32) {
    %c0_i32 = arith.constant 0 : i32
    %c0_i32_0 = arith.constant 0 : i32
    return %arg0, %c0_i32 : i32, i32
  }
  func.func @transform_1(%arg0: i32, %arg1: i32) -> (i32, i32, i32) {
    %c0_i32 = arith.constant 0 : i32
    %c0_i32_0 = arith.constant 0 : i32
    %c0_i32_1 = arith.constant 0 : i32
    return %arg0, %c0_i32, %c0_i32_0 : i32, i32, i32
  }
  func.func @transform_2(%arg0: i32, %arg1: i32) -> (i32, i32) {
    %c0_i32 = arith.constant 0 : i32
    %c0_i32_0 = arith.constant 0 : i32
    %c0_i32_1 = arith.constant 0 : i32
    return %c0_i32, %c0_i32_0 : i32, i32
  }
  func.func @transform_3(%arg0: i32, %arg1: i32) -> (i32, i32) {
    %c0_i32 = arith.constant 0 : i32
    %c0_i32_0 = arith.constant 0 : i32
    %c0_i32_1 = arith.constant 0 : i32
    return %c0_i32, %c0_i32_0 : i32, i32
  }
  func.func @transform_4(%arg0: i32, %arg1: i32) -> (i32, i32) {
    %c0_i32 = arith.constant 0 : i32
    %c0_i32_0 = arith.constant 0 : i32
    %c0_i32_1 = arith.constant 0 : i32
    return %c0_i32, %c0_i32_0 : i32, i32
  }
  func.func @transform_5(%arg0: i32, %arg1: i32) -> (i32, i32, i32) {
    %c0_i32 = arith.constant 0 : i32
    %c0_i32_0 = arith.constant 0 : i32
    %c0_i32_1 = arith.constant 0 : i32
    return %arg1, %c0_i32, %c0_i32_0 : i32, i32, i32
  }
  func.func @transform_6(%arg0: i32, %arg1: i32) -> (i32, i32, i32) {
    %c0_i32 = arith.constant 0 : i32
    %c0_i32_0 = arith.constant 0 : i32
    %c0_i32_1 = arith.constant 0 : i32
    return %arg1, %c0_i32, %c0_i32_0 : i32, i32, i32
  }
  func.func @transform_7(%arg0: i32, %arg1: i32) -> (i32, i32, i32) {
    %c0_i32 = arith.constant 0 : i32
    %c0_i32_0 = arith.constant 0 : i32
    %c0_i32_1 = arith.constant 0 : i32
    return %arg1, %c0_i32, %c0_i32_0 : i32, i32, i32
  }
  func.func @transform_8(%arg0: i32, %arg1: i32) -> (i32, i32, i32) {
    %c0_i32 = arith.constant 0 : i32
    %c0_i32_0 = arith.constant 0 : i32
    %c0_i32_1 = arith.constant 0 : i32
    return %arg1, %c0_i32, %c0_i32_0 : i32, i32, i32
  }
  func.func @transform_9(%arg0: i32, %arg1: i32) -> (i32, i32, i32) {
    %c0_i32 = arith.constant 0 : i32
    %c0_i32_0 = arith.constant 0 : i32
    %c0_i32_1 = arith.constant 0 : i32
    return %arg1, %c0_i32, %c0_i32_0 : i32, i32, i32
  }
  func.func @transform_10(%arg0: i32, %arg1: i32) -> (i32, i32, i32) {
    %c0_i32 = arith.constant 0 : i32
    %c0_i32_0 = arith.constant 0 : i32
    %c0_i32_1 = arith.constant 0 : i32
    return %arg1, %c0_i32, %c0_i32_0 : i32, i32, i32
  }
  func.func @transform_11(%arg0: i32, %arg1: i32) -> (i32, i32, i32) {
    %c0_i32 = arith.constant 0 : i32
    %c0_i32_0 = arith.constant 0 : i32
    %c0_i32_1 = arith.constant 0 : i32
    return %arg1, %c0_i32, %c0_i32_0 : i32, i32, i32
  }
  func.func @transform_12(%arg0: i32, %arg1: i32) -> (i32, i32, i32) {
    %c0_i32 = arith.constant 0 : i32
    %c0_i32_0 = arith.constant 0 : i32
    %c0_i32_1 = arith.constant 0 : i32
    return %arg1, %c0_i32, %c0_i32_0 : i32, i32, i32
  }
  func.func @transform_13(%arg0: i32, %arg1: i32) -> (i32, i32, i32) {
    %c0_i32 = arith.constant 0 : i32
    %c0_i32_0 = arith.constant 0 : i32
    %c0_i32_1 = arith.constant 0 : i32
    return %arg1, %c0_i32, %c0_i32_0 : i32, i32, i32
  }
  func.func @transform_14(%arg0: i32, %arg1: i32) -> (i32, i32, i32) {
    %c0_i32 = arith.constant 0 : i32
    %c0_i32_0 = arith.constant 0 : i32
    %c0_i32_1 = arith.constant 0 : i32
    return %arg1, %c0_i32, %c0_i32_0 : i32, i32, i32
  }
  func.func @transform_15(%arg0: i32, %arg1: i32) -> (i32, i32, i32) {
    %c0_i32 = arith.constant 0 : i32
    %c0_i32_0 = arith.constant 0 : i32
    %c0_i32_1 = arith.constant 0 : i32
    return %arg1, %c0_i32, %c0_i32_0 : i32, i32, i32
  }
  func.func @transform_16(%arg0: i32, %arg1: i32) -> (i32, i32, i32) {
    %c0_i32 = arith.constant 0 : i32
    %c0_i32_0 = arith.constant 0 : i32
    %c0_i32_1 = arith.constant 0 : i32
    return %arg1, %c0_i32, %c0_i32_0 : i32, i32, i32
  }
  func.func @transform_17(%arg0: i32, %arg1: i32) -> (i32, i32, i32) {
    %c0_i32 = arith.constant 0 : i32
    %c0_i32_0 = arith.constant 0 : i32
    %c0_i32_1 = arith.constant 0 : i32
    return %arg1, %c0_i32, %c0_i32_0 : i32, i32, i32
  }
  func.func @transform_18(%arg0: i32, %arg1: i32) -> (i32, i32, i32) {
    %c0_i32 = arith.constant 0 : i32
    %c0_i32_0 = arith.constant 0 : i32
    %c0_i32_1 = arith.constant 0 : i32
    return %arg1, %c0_i32, %c0_i32_0 : i32, i32, i32
  }
  func.func @transform_19(%arg0: i32, %arg1: i32) -> (i32, i32, i32) {
    %c0_i32 = arith.constant 0 : i32
    %c0_i32_0 = arith.constant 0 : i32
    %c0_i32_1 = arith.constant 0 : i32
    return %arg1, %c0_i32, %c0_i32_0 : i32, i32, i32
  }
  func.func @transform_20(%arg0: i32, %arg1: i32) -> (i32, i32, i32) {
    %c0_i32 = arith.constant 0 : i32
    %c0_i32_0 = arith.constant 0 : i32
    %c0_i32_1 = arith.constant 0 : i32
    return %arg1, %c0_i32, %c0_i32_0 : i32, i32, i32
  }
  func.func @transform_21(%arg0: i32, %arg1: i32) -> (i32, i32) {
    %c0_i32 = arith.constant 0 : i32
    %c0_i32_0 = arith.constant 0 : i32
    %c0_i32_1 = arith.constant 0 : i32
    return %c0_i32, %c0_i32_0 : i32, i32
  }
  func.func @transform_22(%arg0: i32, %arg1: i32) -> (i32, i32) {
    %c0_i32 = arith.constant 0 : i32
    %c0_i32_0 = arith.constant 0 : i32
    %c0_i32_1 = arith.constant 0 : i32
    return %c0_i32, %c0_i32_0 : i32, i32
  }
  func.func @transform_23(%arg0: i32, %arg1: i32) -> (i32, i32) {
    %c0_i32 = arith.constant 0 : i32
    %c0_i32_0 = arith.constant 0 : i32
    return %arg0, %c0_i32 : i32, i32
  }
}

</mosaic_0001>

<llo_original>
// kernel: tpu_custom_call.1
$region0: #{tpu_custom_call.1}
  #allocation0 [shape = 'u32[]', space=smem, size = 0x4, offset = 0x4, fixed_abs, tag = 'smem constant byte address 0x4 - core index']
  #allocation1 [shape = 'u32[144,128]{1,0:T(1,128)}', space=vmem, size = 0x12000, scoped, tag = 'internal scratch']
  #allocation2 [shape = 'f32[16,32]{1,0:T(8,128)}', space=vmem, size = 0x2000, scoped, tag = 'scratch operand']
  #allocation3 [shape = 'f32[16,32]{1,0:T(8,128)}', space=vmem, size = 0x2000, scoped, tag = 'scratch operand']
  %s0 = inlined_call_operand.hbm [shape: f32[16,16], index: 0, kind: input, shape index: {}]
  %s1 = inlined_call_operand.hbm [shape: f32[1,16,16], index: 1, kind: input, shape index: {}]
  %s2 = inlined_call_operand.hbm [shape: f32[16,32], index: 2, kind: input, shape index: {}]
  %s3 = inlined_call_operand.hbm [shape: f32[1,32], index: 3, kind: input, shape index: {}]
  %s4 = inlined_call_operand.hbm [shape: f32[16,32], index: 4, kind: input, shape index: {}]
  %s5 = inlined_call_operand.vmem [shape: f32[2,32,32], index: 5, kind: input, shape index: {}]
  %s6 = inlined_call_operand.hbm [shape: f32[2,1,32], index: 6, kind: input, shape index: {}]
  %s7 = inlined_call_operand.vmem [shape: f32[2,32,32], index: 7, kind: input, shape index: {}]
  %s8 = inlined_call_operand.hbm [shape: f32[2,1,32], index: 8, kind: input, shape index: {}]
  %s9 = inlined_call_operand.vmem [shape: f32[2,32,32], index: 9, kind: input, shape index: {}]
  %s10 = inlined_call_operand.hbm [shape: f32[2,1,32], index: 10, kind: input, shape index: {}]
  %s11 = inlined_call_operand.hbm [shape: f32[2,32,32], index: 11, kind: input, shape index: {}]
  %s12 = inlined_call_operand.hbm [shape: f32[2,1,32], index: 12, kind: input, shape index: {}]
  %s13 = inlined_call_operand.hbm [shape: f32[2,1,32], index: 13, kind: input, shape index: {}]
  %s14 = inlined_call_operand.hbm [shape: f32[2,1,32], index: 14, kind: input, shape index: {}]
  %s15 = inlined_call_operand.hbm [shape: f32[2,32,64], index: 15, kind: input, shape index: {}]
  %s16 = inlined_call_operand.hbm [shape: f32[2,1,64], index: 16, kind: input, shape index: {}]
  %s17 = inlined_call_operand.vmem [shape: f32[2,64,32], index: 17, kind: input, shape index: {}]
  %s18 = inlined_call_operand.hbm [shape: f32[2,1,32], index: 18, kind: input, shape index: {}]
  %s19 = inlined_call_operand.hbm [shape: f32[2,1,32], index: 19, kind: input, shape index: {}]
  %s20 = inlined_call_operand.vmem [shape: f32[2,1,32], index: 20, kind: input, shape index: {}]
  %s21 = inlined_call_operand.vmem [shape: f32[32,128], index: 21, kind: input, shape index: {}]
  %s22 = inlined_call_operand.vmem [shape: f32[1,128], index: 22, kind: input, shape index: {}]
  %s23 = inlined_call_operand.hbm [shape: f32[16,128], index: 23, kind: output, shape index: {}]
  %s24 = sld [smem:[#allocation0]]
  $region197: #{tpu_custom_call.1} parent=0
    _
  %s26 = ssub.s32 1, %s24
  %s27 = scalar_select 0, %s26, %s24
  $region1: #{tpu_custom_call.1} parent=0
    #allocation4 [shape = 'u8[8192]{0}', space=vmem, size = 0x2000, scoped, tag = 'input window, operand 0, single buffered']
    #allocation5 [shape = 's32[2]{0}', space=sflag, size = 0x8, scoped, tag = 'scoped memory for tpu_custom_call.1']
    #allocation6 [shape = 's32[2]{0}', space=sflag, size = 0x8, scoped, tag = 'scoped memory for tpu_custom_call.1']
    #allocation7 [shape = 'u8[8192]{0}', space=vmem, size = 0x2000, scoped, tag = 'input window, operand 1, single buffered']
    #allocation8 [shape = 's32[1]{0}', space=sflag, size = 0x4, scoped, tag = 'scoped memory for tpu_custom_call.1']
    #allocation9 [shape = 'u8[8192]{0}', space=vmem, size = 0x2000, scoped, tag = 'input window, operand 2, single buffered']
    #allocation10 [shape = 'u8[512]{0}', space=vmem, size = 0x400, scoped, tag = 'input window, operand 3, single buffered']
    #allocation11 [shape = 's32[1]{0}', space=sflag, size = 0x4, scoped, tag = 'scoped memory for tpu_custom_call.1']
    #allocation12 [shape = 'u8[8192]{0}', space=vmem, size = 0x2000, scoped, tag = 'input window, operand 4, single buffered']
    #allocation13 [shape = 'u8[1024]{0}', space=vmem, size = 0x400, scoped, tag = 'input window, operand 6']
    #allocation14 [shape = 's32[2]{0}', space=sflag, size = 0x8, scoped, tag = 'scoped memory for tpu_custom_call.1']
    #allocation15 [shape = 'u8[1024]{0}', space=vmem, size = 0x400, scoped, tag = 'input window, operand 8']
    #allocation16 [shape = 'u8[1024]{0}', space=vmem, size = 0x400, scoped, tag = 'input window, operand 10']
    #allocation17 [shape = 's32[2]{0}', space=sflag, size = 0x8, scoped, tag = 'scoped memory for tpu_custom_call.1']
    #allocation18 [shape = 'u8[32768]{0}', space=vmem, size = 0x8000, scoped, tag = 'input window, operand 11']
    #allocation19 [shape = 'u8[1024]{0}', space=vmem, size = 0x400, scoped, tag = 'input window, operand 12']
    #allocation20 [shape = 's32[2]{0}', space=sflag, size = 0x8, scoped, tag = 'scoped memory for tpu_custom_call.1']
    #allocation21 [shape = 'u8[1024]{0}', space=vmem, size = 0x400, scoped, tag = 'input window, operand 13']
    #allocation22 [shape = 'u8[1024]{0}', space=vmem, size = 0x400, scoped, tag = 'input window, operand 14']
    #allocation23 [shape = 's32[2]{0}', space=sflag, size = 0x8, scoped, tag = 'scoped memory for tpu_custom_call.1']
    #allocation24 [shape = 'u8[32768]{0}', space=vmem, size = 0x8000, scoped, tag = 'input window, operand 15']
    #allocation25 [shape = 'u8[1024]{0}', space=vmem, size = 0x400, scoped, tag = 'input window, operand 16']
    #allocation26 [shape = 's32[2]{0}', space=sflag, size = 0x8, scoped, tag = 'scoped memory for tpu_custom_call.1']
    #allocation27 [shape = 'u8[1024]{0}', space=vmem, size = 0x400, scoped, tag = 'input window, operand 18']
    #allocation28 [shape = 'u8[1024]{0}', space=vmem, size = 0x400, scoped, tag = 'input window, operand 19']
    #allocation29 [shape = 's32[2]{0}', space=sflag, size = 0x8, scoped, tag = 'scoped memory for tpu_custom_call.1']
    #allocation30 [shape = 'u8[8192]{0}', space=vmem, size = 0x2000, scoped, tag = 'output window, operand 0, single buffered']
    %28 = vsyncpa [#allocation5], 0
    %29 = vsyncpa [#allocation8], 0
    %30 = vsyncpa [#allocation11], 0
    %31 = vsyncpa [#allocation14], 0
    %s32 = scalar_lea.sflag [#allocation14], 1
    %33 = vsyncpa %s32, 0
    %34 = vsyncpa [#allocation17], 0
    %s35 = scalar_lea.sflag [#allocation17], 1
    %36 = vsyncpa %s35, 0
    %37 = vsyncpa [#allocation20], 0
    %s38 = scalar_lea.sflag [#allocation20], 1
    %39 = vsyncpa %s38, 0
    %40 = vsyncpa [#allocation23], 0
    %s41 = scalar_lea.sflag [#allocation23], 1
    %42 = vsyncpa %s41, 0
    %43 = vsyncpa [#allocation26], 0
    %s44 = scalar_lea.sflag [#allocation26], 1
    %45 = vsyncpa %s44, 0
    %46 = vsyncpa [#allocation29], 0
    %s47 = scalar_lea.sflag [#allocation29], 1
    %48 = vsyncpa %s47, 0
    %49 = vsyncpa [#allocation6], 0
    loop: start=0, step=1, limit=4
    $region2: #{tpu_custom_call.1} parent=1 // loop_pre_header
      _
    $region3: #{tpu_custom_call.1} parent=1 // loop_header
      %s51 = sphi 0, %s55
      %p52 = scmp.ge.s32.totalorder %s51, 4
      %s58 = sphi 0, %s70
      %s59 = sphi 0, %s66
      %s60 = sphi 0, %s58
      %s61 = sphi 0, %s59
      %s62 = sphi 0, %s60
      %s63 = sphi 0, %s61
      %s73 = sphi 0, %s75
      %s76 = sphi 0, %s73
      %s77 = sphi 0, %s76
      %s93 = sphi 0, %s77
      %s99 = sphi 0, %s101
      %s102 = sphi 0, %s99
      %s103 = sphi 0, %s102
      %s119 = sphi 0, %s103
      %s123 = sphi 0, %s123
      %s125 = sphi 0, %s123
      %s126 = sphi 0, %s125
      %s140 = sphi 0, %s126
      %s144 = sphi 0, %s144
      %s146 = sphi 0, %s144
      %s147 = sphi 0, %s146
      %s161 = sphi 0, %s147
      %s165 = sphi 0, %s165
      %s167 = sphi 0, %s165
      %s168 = sphi 0, %s167
      %s182 = sphi 0, %s168
      %s188 = sphi 0, %s190
      %s191 = sphi 0, %s188
      %s192 = sphi 0, %s191
      %s208 = sphi 0, %s192
      %s214 = sphi 0, %s216
      %s217 = sphi 0, %s214
      %s218 = sphi 0, %s217
      %s234 = sphi 0, %s218
      %s240 = sphi 0, %s242
      %s243 = sphi 0, %s240
      %s244 = sphi 0, %s243
      %s260 = sphi 0, %s244
      %s266 = sphi 0, %s268
      %s269 = sphi 0, %s266
      %s270 = sphi 0, %s269
      %s286 = sphi 0, %s270
      %s292 = sphi 0, %s294
      %s295 = sphi 0, %s292
      %s296 = sphi 0, %s295
      %s312 = sphi 0, %s296
      %s318 = sphi 0, %s320
      %s321 = sphi 0, %s318
      %s322 = sphi 0, %s321
      %s338 = sphi 0, %s322
      %s344 = sphi 0, %s346
      %s347 = sphi 0, %s344
      %s348 = sphi 0, %s347
      %s364 = sphi 0, %s348
      %s370 = sphi 0, %s372
      %s373 = sphi 0, %s370
      %s374 = sphi 0, %s373
      %s390 = sphi 0, %s374
      %s396 = sphi 0, %s398
      %s399 = sphi 0, %s396
      %s400 = sphi 0, %s399
      %s416 = sphi 0, %s400
      %s422 = sphi 0, %s424
      %s425 = sphi 0, %s422
      %s426 = sphi 0, %s425
      %s442 = sphi 0, %s426
      %s448 = sphi 0, %s450
      %s451 = sphi 0, %s448
      %s452 = sphi 0, %s451
      %s468 = sphi 0, %s452
      %s474 = sphi 0, %s476
      %s477 = sphi 0, %s474
      %s478 = sphi 0, %s477
      %s494 = sphi 0, %s478
      %s500 = sphi 0, %s502
      %s503 = sphi 0, %s500
      %s504 = sphi 0, %s503
      %s520 = sphi 0, %s504
      %s526 = sphi 0, %s528
      %s529 = sphi 0, %s526
      %s530 = sphi 0, %s529
      %s546 = sphi 0, %s530
      %s552 = sphi 0, %s554
      %s555 = sphi 0, %s552
      %s556 = sphi 0, %s555
      %s572 = sphi 0, %s556
      %s578 = sphi 0, %s580
      %s581 = sphi 0, %s578
      %s582 = sphi 0, %s581
      %s598 = sphi 0, %s582
      %s602 = sphi 0, %s602
      %s604 = sphi 0, %s602
      %s605 = sphi 0, %s604
      %s619 = sphi 0, %s605
      %s623 = sphi 0, %s623
      %s625 = sphi 0, %s623
      %s626 = sphi 0, %s625
      %s640 = sphi 0, %s626
      %s646 = sphi 0, %s648
      %s649 = sphi 0, %s646
      %s650 = sphi 0, %s649
      %s666 = sphi 0, %s650
    $region4: #{tpu_custom_call.1} parent=1 // loop_header_branch
      %54 = sbr.rel (%p52) target = $region8
    $region5: #{tpu_custom_call.1} parent=1 // loop_body
      %s56 = ssub.s32 %s51, 1
      %s57 = ssub.s32 %s51, 2
      %s64 = sadd.s32 1, %s59
      %p65 = scmp.ge.s32.totalorder %s64, 2
      %s66 = scalar_select %p65, 0, %s64
      %s67 = sadd.s32 1, %s58
      %s68 = scalar_select %p65, %s67, %s58
      %p69 = scmp.ge.s32.totalorder %s68, 1
      %s70 = scalar_select %p69, 0, %s68
      %s71 = ssub.s32 %s58, %s70
      %p72 = scmp.eq.s32.totalorder %s71, 0
      %s74 = sadd.s32 %s73, 1
      %s75 = scalar_select %p72, %s73, %s74
      %p78 = pneg %p72
      %p79 = scmp.eq.s32.totalorder %s51, 1
      %p80 = por %p78, %p79
      %p81 = scmp.ne.s32.totalorder %s73, %s76
      %p82 = scmp.eq.s32.totalorder %s51, 0
      %p83 = por %p81, %p82
      %p84 = scmp.ne.s32.totalorder %s73, %s76
      %p85 = scmp.eq.s32.totalorder %s56, 1
      %p86 = por %p84, %p85
      %p87 = scmp.ne.s32.totalorder %s76, %s77
      %p88 = scmp.eq.s32.totalorder %s56, 0
      %p89 = por %p87, %p88
      %p90 = scmp.ne.s32.totalorder %s76, %s77
      %p91 = scmp.eq.s32.totalorder %s57, 1
      %p92 = por %p90, %p91
      %p94 = scmp.ne.s32.totalorder %s77, %s93
      %p95 = scmp.eq.s32.totalorder %s57, 0
      %p96 = por %p94, %p95
      %s97 = ssub.s32 %s58, %s70
      %p98 = scmp.eq.s32.totalorder %s97, 0
      %s100 = sadd.s32 %s99, 1
      %s101 = scalar_select %p98, %s99, %s100
      %p104 = pneg %p98
      %p105 = scmp.eq.s32.totalorder %s51, 1
      %p106 = por %p104, %p105
      %p107 = scmp.ne.s32.totalorder %s99, %s102
      %p108 = scmp.eq.s32.totalorder %s51, 0
      %p109 = por %p107, %p108
      %p110 = scmp.ne.s32.totalorder %s99, %s102
      %p111 = scmp.eq.s32.totalorder %s56, 1
      %p112 = por %p110, %p111
      %p113 = scmp.ne.s32.totalorder %s102, %s103
      %p114 = scmp.eq.s32.totalorder %s56, 0
      %p115 = por %p113, %p114
      %p116 = scmp.ne.s32.totalorder %s102, %s103
      %p117 = scmp.eq.s32.totalorder %s57, 1
      %p118 = por %p116, %p117
      %p120 = scmp.ne.s32.totalorder %s103, %s119
      %p121 = scmp.eq.s32.totalorder %s57, 0
      %p122 = por %p120, %p121
      %s124 = sadd.s32 %s123, 1
      %p127 = scmp.eq.s32.totalorder %s51, 1
      %p128 = scmp.ne.s32.totalorder %s123, %s125
      %p129 = scmp.eq.s32.totalorder %s51, 0
      %p130 = por %p128, %p129
      %p131 = scmp.ne.s32.totalorder %s123, %s125
      %p132 = scmp.eq.s32.totalorder %s56, 1
      %p133 = por %p131, %p132
      %p134 = scmp.ne.s32.totalorder %s125, %s126
      %p135 = scmp.eq.s32.totalorder %s56, 0
      %p136 = por %p134, %p135
      %p137 = scmp.ne.s32.totalorder %s125, %s126
      %p138 = scmp.eq.s32.totalorder %s57, 1
      %p139 = por %p137, %p138
      %p141 = scmp.ne.s32.totalorder %s126, %s140
      %p142 = scmp.eq.s32.totalorder %s57, 0
      %p143 = por %p141, %p142
      %s145 = sadd.s32 %s144, 1
      %p148 = scmp.eq.s32.totalorder %s51, 1
      %p149 = scmp.ne.s32.totalorder %s144, %s146
      %p150 = scmp.eq.s32.totalorder %s51, 0
      %p151 = por %p149, %p150
      %p152 = scmp.ne.s32.totalorder %s144, %s146
      %p153 = scmp.eq.s32.totalorder %s56, 1
      %p154 = por %p152, %p153
      %p155 = scmp.ne.s32.totalorder %s146, %s147
      %p156 = scmp.eq.s32.totalorder %s56, 0
      %p157 = por %p155, %p156
      %p158 = scmp.ne.s32.totalorder %s146, %s147
      %p159 = scmp.eq.s32.totalorder %s57, 1
      %p160 = por %p158, %p159
      %p162 = scmp.ne.s32.totalorder %s147, %s161
      %p163 = scmp.eq.s32.totalorder %s57, 0
      %p164 = por %p162, %p163
      %s166 = sadd.s32 %s165, 1
      %p169 = scmp.eq.s32.totalorder %s51, 1
      %p170 = scmp.ne.s32.totalorder %s165, %s167
      %p171 = scmp.eq.s32.totalorder %s51, 0
      %p172 = por %p170, %p171
      %p173 = scmp.ne.s32.totalorder %s165, %s167
      %p174 = scmp.eq.s32.totalorder %s56, 1
      %p175 = por %p173, %p174
      %p176 = scmp.ne.s32.totalorder %s167, %s168
      %p177 = scmp.eq.s32.totalorder %s56, 0
      %p178 = por %p176, %p177
      %p179 = scmp.ne.s32.totalorder %s167, %s168
      %p180 = scmp.eq.s32.totalorder %s57, 1
      %p181 = por %p179, %p180
      %p183 = scmp.ne.s32.totalorder %s168, %s182
      %p184 = scmp.eq.s32.totalorder %s57, 0
      %p185 = por %p183, %p184
      %s186 = ssub.s32 %s59, %s66
      %p187 = scmp.eq.s32.totalorder %s186, 0
      %s189 = sadd.s32 %s188, 1
      %s190 = scalar_select %p187, %s188, %s189
      %p193 = pneg %p187
      %p194 = scmp.eq.s32.totalorder %s51, 1
      %p195 = por %p193, %p194
      %p196 = scmp.ne.s32.totalorder %s188, %s191
      %p197 = scmp.eq.s32.totalorder %s51, 0
      %p198 = por %p196, %p197
      %p199 = scmp.ne.s32.totalorder %s188, %s191
      %p200 = scmp.eq.s32.totalorder %s56, 1
      %p201 = por %p199, %p200
      %p202 = scmp.ne.s32.totalorder %s191, %s192
      %p203 = scmp.eq.s32.totalorder %s56, 0
      %p204 = por %p202, %p203
      %p205 = scmp.ne.s32.totalorder %s191, %s192
      %p206 = scmp.eq.s32.totalorder %s57, 1
      %p207 = por %p205, %p206
      %p209 = scmp.ne.s32.totalorder %s192, %s208
      %p210 = scmp.eq.s32.totalorder %s57, 0
      %p211 = por %p209, %p210
      %s212 = ssub.s32 %s59, %s66
      %p213 = scmp.eq.s32.totalorder %s212, 0
      %s215 = sadd.s32 %s214, 1
      %s216 = scalar_select %p213, %s214, %s215
      %p219 = pneg %p213
      %p220 = scmp.eq.s32.totalorder %s51, 1
      %p221 = por %p219, %p220
      %p222 = scmp.ne.s32.totalorder %s214, %s217
      %p223 = scmp.eq.s32.totalorder %s51, 0
      %p224 = por %p222, %p223
      %p225 = scmp.ne.s32.totalorder %s214, %s217
      %p226 = scmp.eq.s32.totalorder %s56, 1
      %p227 = por %p225, %p226
      %p228 = scmp.ne.s32.totalorder %s217, %s218
      %p229 = scmp.eq.s32.totalorder %s56, 0
      %p230 = por %p228, %p229
      %p231 = scmp.ne.s32.totalorder %s217, %s218
      %p232 = scmp.eq.s32.totalorder %s57, 1
      %p233 = por %p231, %p232
      %p235 = scmp.ne.s32.totalorder %s218, %s234
      %p236 = scmp.eq.s32.totalorder %s57, 0
      %p237 = por %p235, %p236
      %s238 = ssub.s32 %s59, %s66
      %p239 = scmp.eq.s32.totalorder %s238, 0
      %s241 = sadd.s32 %s240, 1
      %s242 = scalar_select %p239, %s240, %s241
      %p245 = pneg %p239
      %p246 = scmp.eq.s32.totalorder %s51, 1
      %p247 = por %p245, %p246
      %p248 = scmp.ne.s32.totalorder %s240, %s243
      %p249 = scmp.eq.s32.totalorder %s51, 0
      %p250 = por %p248, %p249
      %p251 = scmp.ne.s32.totalorder %s240, %s243
      %p252 = scmp.eq.s32.totalorder %s56, 1
      %p253 = por %p251, %p252
      %p254 = scmp.ne.s32.totalorder %s243, %s244
      %p255 = scmp.eq.s32.totalorder %s56, 0
      %p256 = por %p254, %p255
      %p257 = scmp.ne.s32.totalorder %s243, %s244
      %p258 = scmp.eq.s32.totalorder %s57, 1
      %p259 = por %p257, %p258
      %p261 = scmp.ne.s32.totalorder %s244, %s260
      %p262 = scmp.eq.s32.totalorder %s57, 0
      %p263 = por %p261, %p262
      %s264 = ssub.s32 %s59, %s66
      %p265 = scmp.eq.s32.totalorder %s264, 0
      %s267 = sadd.s32 %s266, 1
      %s268 = scalar_select %p265, %s266, %s267
      %p271 = pneg %p265
      %p272 = scmp.eq.s32.totalorder %s51, 1
      %p273 = por %p271, %p272
      %p274 = scmp.ne.s32.totalorder %s266, %s269
      %p275 = scmp.eq.s32.totalorder %s51, 0
      %p276 = por %p274, %p275
      %p277 = scmp.ne.s32.totalorder %s266, %s269
      %p278 = scmp.eq.s32.totalorder %s56, 1
      %p279 = por %p277, %p278
      %p280 = scmp.ne.s32.totalorder %s269, %s270
      %p281 = scmp.eq.s32.totalorder %s56, 0
      %p282 = por %p280, %p281
      %p283 = scmp.ne.s32.totalorder %s269, %s270
      %p284 = scmp.eq.s32.totalorder %s57, 1
      %p285 = por %p283, %p284
      %p287 = scmp.ne.s32.totalorder %s270, %s286
      %p288 = scmp.eq.s32.totalorder %s57, 0
      %p289 = por %p287, %p288
      %s290 = ssub.s32 %s59, %s66
      %p291 = scmp.eq.s32.totalorder %s290, 0
      %s293 = sadd.s32 %s292, 1
      %s294 = scalar_select %p291, %s292, %s293
      %p297 = pneg %p291
      %p298 = scmp.eq.s32.totalorder %s51, 1
      %p299 = por %p297, %p298
      %p300 = scmp.ne.s32.totalorder %s292, %s295
      %p301 = scmp.eq.s32.totalorder %s51, 0
      %p302 = por %p300, %p301
      %p303 = scmp.ne.s32.totalorder %s292, %s295
      %p304 = scmp.eq.s32.totalorder %s56, 1
      %p305 = por %p303, %p304
      %p306 = scmp.ne.s32.totalorder %s295, %s296
      %p307 = scmp.eq.s32.totalorder %s56, 0
      %p308 = por %p306, %p307
      %p309 = scmp.ne.s32.totalorder %s295, %s296
      %p310 = scmp.eq.s32.totalorder %s57, 1
      %p311 = por %p309, %p310
      %p313 = scmp.ne.s32.totalorder %s296, %s312
      %p314 = scmp.eq.s32.totalorder %s57, 0
      %p315 = por %p313, %p314
      %s316 = ssub.s32 %s59, %s66
      %p317 = scmp.eq.s32.totalorder %s316, 0
      %s319 = sadd.s32 %s318, 1
      %s320 = scalar_select %p317, %s318, %s319
      %p323 = pneg %p317
      %p324 = scmp.eq.s32.totalorder %s51, 1
      %p325 = por %p323, %p324
      %p326 = scmp.ne.s32.totalorder %s318, %s321
      %p327 = scmp.eq.s32.totalorder %s51, 0
      %p328 = por %p326, %p327
      %p329 = scmp.ne.s32.totalorder %s318, %s321
      %p330 = scmp.eq.s32.totalorder %s56, 1
      %p331 = por %p329, %p330
      %p332 = scmp.ne.s32.totalorder %s321, %s322
      %p333 = scmp.eq.s32.totalorder %s56, 0
      %p334 = por %p332, %p333
      %p335 = scmp.ne.s32.totalorder %s321, %s322
      %p336 = scmp.eq.s32.totalorder %s57, 1
      %p337 = por %p335, %p336
      %p339 = scmp.ne.s32.totalorder %s322, %s338
      %p340 = scmp.eq.s32.totalorder %s57, 0
      %p341 = por %p339, %p340
      %s342 = ssub.s32 %s59, %s66
      %p343 = scmp.eq.s32.totalorder %s342, 0
      %s345 = sadd.s32 %s344, 1
      %s346 = scalar_select %p343, %s344, %s345
      %p349 = pneg %p343
      %p350 = scmp.eq.s32.totalorder %s51, 1
      %p351 = por %p349, %p350
      %p352 = scmp.ne.s32.totalorder %s344, %s347
      %p353 = scmp.eq.s32.totalorder %s51, 0
      %p354 = por %p352, %p353
      %p355 = scmp.ne.s32.totalorder %s344, %s347
      %p356 = scmp.eq.s32.totalorder %s56, 1
      %p357 = por %p355, %p356
      %p358 = scmp.ne.s32.totalorder %s347, %s348
      %p359 = scmp.eq.s32.totalorder %s56, 0
      %p360 = por %p358, %p359
      %p361 = scmp.ne.s32.totalorder %s347, %s348
      %p362 = scmp.eq.s32.totalorder %s57, 1
      %p363 = por %p361, %p362
      %p365 = scmp.ne.s32.totalorder %s348, %s364
      %p366 = scmp.eq.s32.totalorder %s57, 0
      %p367 = por %p365, %p366
      %s368 = ssub.s32 %s59, %s66
      %p369 = scmp.eq.s32.totalorder %s368, 0
      %s371 = sadd.s32 %s370, 1
      %s372 = scalar_select %p369, %s370, %s371
      %p375 = pneg %p369
      %p376 = scmp.eq.s32.totalorder %s51, 1
      %p377 = por %p375, %p376
      %p378 = scmp.ne.s32.totalorder %s370, %s373
      %p379 = scmp.eq.s32.totalorder %s51, 0
      %p380 = por %p378, %p379
      %p381 = scmp.ne.s32.totalorder %s370, %s373
      %p382 = scmp.eq.s32.totalorder %s56, 1
      %p383 = por %p381, %p382
      %p384 = scmp.ne.s32.totalorder %s373, %s374
      %p385 = scmp.eq.s32.totalorder %s56, 0
      %p386 = por %p384, %p385
      %p387 = scmp.ne.s32.totalorder %s373, %s374
      %p388 = scmp.eq.s32.totalorder %s57, 1
      %p389 = por %p387, %p388
      %p391 = scmp.ne.s32.totalorder %s374, %s390
      %p392 = scmp.eq.s32.totalorder %s57, 0
      %p393 = por %p391, %p392
      %s394 = ssub.s32 %s59, %s66
      %p395 = scmp.eq.s32.totalorder %s394, 0
      %s397 = sadd.s32 %s396, 1
      %s398 = scalar_select %p395, %s396, %s397
      %p401 = pneg %p395
      %p402 = scmp.eq.s32.totalorder %s51, 1
      %p403 = por %p401, %p402
      %p404 = scmp.ne.s32.totalorder %s396, %s399
      %p405 = scmp.eq.s32.totalorder %s51, 0
      %p406 = por %p404, %p405
      %p407 = scmp.ne.s32.totalorder %s396, %s399
      %p408 = scmp.eq.s32.totalorder %s56, 1
      %p409 = por %p407, %p408
      %p410 = scmp.ne.s32.totalorder %s399, %s400
      %p411 = scmp.eq.s32.totalorder %s56, 0
      %p412 = por %p410, %p411
      %p413 = scmp.ne.s32.totalorder %s399, %s400
      %p414 = scmp.eq.s32.totalorder %s57, 1
      %p415 = por %p413, %p414
      %p417 = scmp.ne.s32.totalorder %s400, %s416
      %p418 = scmp.eq.s32.totalorder %s57, 0
      %p419 = por %p417, %p418
      %s420 = ssub.s32 %s59, %s66
      %p421 = scmp.eq.s32.totalorder %s420, 0
      %s423 = sadd.s32 %s422, 1
      %s424 = scalar_select %p421, %s422, %s423
      %p427 = pneg %p421
      %p428 = scmp.eq.s32.totalorder %s51, 1
      %p429 = por %p427, %p428
      %p430 = scmp.ne.s32.totalorder %s422, %s425
      %p431 = scmp.eq.s32.totalorder %s51, 0
      %p432 = por %p430, %p431
      %p433 = scmp.ne.s32.totalorder %s422, %s425
      %p434 = scmp.eq.s32.totalorder %s56, 1
      %p435 = por %p433, %p434
      %p436 = scmp.ne.s32.totalorder %s425, %s426
      %p437 = scmp.eq.s32.totalorder %s56, 0
      %p438 = por %p436, %p437
      %p439 = scmp.ne.s32.totalorder %s425, %s426
      %p440 = scmp.eq.s32.totalorder %s57, 1
      %p441 = por %p439, %p440
      %p443 = scmp.ne.s32.totalorder %s426, %s442
      %p444 = scmp.eq.s32.totalorder %s57, 0
      %p445 = por %p443, %p444
      %s446 = ssub.s32 %s59, %s66
      %p447 = scmp.eq.s32.totalorder %s446, 0
      %s449 = sadd.s32 %s448, 1
      %s450 = scalar_select %p447, %s448, %s449
      %p453 = pneg %p447
      %p454 = scmp.eq.s32.totalorder %s51, 1
      %p455 = por %p453, %p454
      %p456 = scmp.ne.s32.totalorder %s448, %s451
      %p457 = scmp.eq.s32.totalorder %s51, 0
      %p458 = por %p456, %p457
      %p459 = scmp.ne.s32.totalorder %s448, %s451
      %p460 = scmp.eq.s32.totalorder %s56, 1
      %p461 = por %p459, %p460
      %p462 = scmp.ne.s32.totalorder %s451, %s452
      %p463 = scmp.eq.s32.totalorder %s56, 0
      %p464 = por %p462, %p463
      %p465 = scmp.ne.s32.totalorder %s451, %s452
      %p466 = scmp.eq.s32.totalorder %s57, 1
      %p467 = por %p465, %p466
      %p469 = scmp.ne.s32.totalorder %s452, %s468
      %p470 = scmp.eq.s32.totalorder %s57, 0
      %p471 = por %p469, %p470
      %s472 = ssub.s32 %s59, %s66
      %p473 = scmp.eq.s32.totalorder %s472, 0
      %s475 = sadd.s32 %s474, 1
      %s476 = scalar_select %p473, %s474, %s475
      %p479 = pneg %p473
      %p480 = scmp.eq.s32.totalorder %s51, 1
      %p481 = por %p479, %p480
      %p482 = scmp.ne.s32.totalorder %s474, %s477
      %p483 = scmp.eq.s32.totalorder %s51, 0
      %p484 = por %p482, %p483
      %p485 = scmp.ne.s32.totalorder %s474, %s477
      %p486 = scmp.eq.s32.totalorder %s56, 1
      %p487 = por %p485, %p486
      %p488 = scmp.ne.s32.totalorder %s477, %s478
      %p489 = scmp.eq.s32.totalorder %s56, 0
      %p490 = por %p488, %p489
      %p491 = scmp.ne.s32.totalorder %s477, %s478
      %p492 = scmp.eq.s32.totalorder %s57, 1
      %p493 = por %p491, %p492
      %p495 = scmp.ne.s32.totalorder %s478, %s494
      %p496 = scmp.eq.s32.totalorder %s57, 0
      %p497 = por %p495, %p496
      %s498 = ssub.s32 %s59, %s66
      %p499 = scmp.eq.s32.totalorder %s498, 0
      %s501 = sadd.s32 %s500, 1
      %s502 = scalar_select %p499, %s500, %s501
      %p505 = pneg %p499
      %p506 = scmp.eq.s32.totalorder %s51, 1
      %p507 = por %p505, %p506
      %p508 = scmp.ne.s32.totalorder %s500, %s503
      %p509 = scmp.eq.s32.totalorder %s51, 0
      %p510 = por %p508, %p509
      %p511 = scmp.ne.s32.totalorder %s500, %s503
      %p512 = scmp.eq.s32.totalorder %s56, 1
      %p513 = por %p511, %p512
      %p514 = scmp.ne.s32.totalorder %s503, %s504
      %p515 = scmp.eq.s32.totalorder %s56, 0
      %p516 = por %p514, %p515
      %p517 = scmp.ne.s32.totalorder %s503, %s504
      %p518 = scmp.eq.s32.totalorder %s57, 1
      %p519 = por %p517, %p518
      %p521 = scmp.ne.s32.totalorder %s504, %s520
      %p522 = scmp.eq.s32.totalorder %s57, 0
      %p523 = por %p521, %p522
      %s524 = ssub.s32 %s59, %s66
      %p525 = scmp.eq.s32.totalorder %s524, 0
      %s527 = sadd.s32 %s526, 1
      %s528 = scalar_select %p525, %s526, %s527
      %p531 = pneg %p525
      %p532 = scmp.eq.s32.totalorder %s51, 1
      %p533 = por %p531, %p532
      %p534 = scmp.ne.s32.totalorder %s526, %s529
      %p535 = scmp.eq.s32.totalorder %s51, 0
      %p536 = por %p534, %p535
      %p537 = scmp.ne.s32.totalorder %s526, %s529
      %p538 = scmp.eq.s32.totalorder %s56, 1
      %p539 = por %p537, %p538
      %p540 = scmp.ne.s32.totalorder %s529, %s530
      %p541 = scmp.eq.s32.totalorder %s56, 0
      %p542 = por %p540, %p541
      %p543 = scmp.ne.s32.totalorder %s529, %s530
      %p544 = scmp.eq.s32.totalorder %s57, 1
      %p545 = por %p543, %p544
      %p547 = scmp.ne.s32.totalorder %s530, %s546
      %p548 = scmp.eq.s32.totalorder %s57, 0
      %p549 = por %p547, %p548
      %s550 = ssub.s32 %s59, %s66
      %p551 = scmp.eq.s32.totalorder %s550, 0
      %s553 = sadd.s32 %s552, 1
      %s554 = scalar_select %p551, %s552, %s553
      %p557 = pneg %p551
      %p558 = scmp.eq.s32.totalorder %s51, 1
      %p559 = por %p557, %p558
      %p560 = scmp.ne.s32.totalorder %s552, %s555
      %p561 = scmp.eq.s32.totalorder %s51, 0
      %p562 = por %p560, %p561
      %p563 = scmp.ne.s32.totalorder %s552, %s555
      %p564 = scmp.eq.s32.totalorder %s56, 1
      %p565 = por %p563, %p564
      %p566 = scmp.ne.s32.totalorder %s555, %s556
      %p567 = scmp.eq.s32.totalorder %s56, 0
      %p568 = por %p566, %p567
      %p569 = scmp.ne.s32.totalorder %s555, %s556
      %p570 = scmp.eq.s32.totalorder %s57, 1
      %p571 = por %p569, %p570
      %p573 = scmp.ne.s32.totalorder %s556, %s572
      %p574 = scmp.eq.s32.totalorder %s57, 0
      %p575 = por %p573, %p574
      %s576 = ssub.s32 %s59, %s66
      %p577 = scmp.eq.s32.totalorder %s576, 0
      %s579 = sadd.s32 %s578, 1
      %s580 = scalar_select %p577, %s578, %s579
      %p583 = pneg %p577
      %p584 = scmp.eq.s32.totalorder %s51, 1
      %p585 = por %p583, %p584
      %p586 = scmp.ne.s32.totalorder %s578, %s581
      %p587 = scmp.eq.s32.totalorder %s51, 0
      %p588 = por %p586, %p587
      %p589 = scmp.ne.s32.totalorder %s578, %s581
      %p590 = scmp.eq.s32.totalorder %s56, 1
      %p591 = por %p589, %p590
      %p592 = scmp.ne.s32.totalorder %s581, %s582
      %p593 = scmp.eq.s32.totalorder %s56, 0
      %p594 = por %p592, %p593
      %p595 = scmp.ne.s32.totalorder %s581, %s582
      %p596 = scmp.eq.s32.totalorder %s57, 1
      %p597 = por %p595, %p596
      %p599 = scmp.ne.s32.totalorder %s582, %s598
      %p600 = scmp.eq.s32.totalorder %s57, 0
      %p601 = por %p599, %p600
      %s603 = sadd.s32 %s602, 1
      %p606 = scmp.eq.s32.totalorder %s51, 1
      %p607 = scmp.ne.s32.totalorder %s602, %s604
      %p608 = scmp.eq.s32.totalorder %s51, 0
      %p609 = por %p607, %p608
      %p610 = scmp.ne.s32.totalorder %s602, %s604
      %p611 = scmp.eq.s32.totalorder %s56, 1
      %p612 = por %p610, %p611
      %p613 = scmp.ne.s32.totalorder %s604, %s605
      %p614 = scmp.eq.s32.totalorder %s56, 0
      %p615 = por %p613, %p614
      %p616 = scmp.ne.s32.totalorder %s604, %s605
      %p617 = scmp.eq.s32.totalorder %s57, 1
      %p618 = por %p616, %p617
      %p620 = scmp.ne.s32.totalorder %s605, %s619
      %p621 = scmp.eq.s32.totalorder %s57, 0
      %p622 = por %p620, %p621
      %s624 = sadd.s32 %s623, 1
      %p627 = scmp.eq.s32.totalorder %s51, 1
      %p628 = scmp.ne.s32.totalorder %s623, %s625
      %p629 = scmp.eq.s32.totalorder %s51, 0
      %p630 = por %p628, %p629
      %p631 = scmp.ne.s32.totalorder %s623, %s625
      %p632 = scmp.eq.s32.totalorder %s56, 1
      %p633 = por %p631, %p632
      %p634 = scmp.ne.s32.totalorder %s625, %s626
      %p635 = scmp.eq.s32.totalorder %s56, 0
      %p636 = por %p634, %p635
      %p637 = scmp.ne.s32.totalorder %s625, %s626
      %p638 = scmp.eq.s32.totalorder %s57, 1
      %p639 = por %p637, %p638
      %p641 = scmp.ne.s32.totalorder %s626, %s640
      %p642 = scmp.eq.s32.totalorder %s57, 0
      %p643 = por %p641, %p642
      %s644 = ssub.s32 %s58, %s70
      %p645 = scmp.eq.s32.totalorder %s644, 0
      %s647 = sadd.s32 %s646, 1
      %s648 = scalar_select %p645, %s646, %s647
      %p651 = pneg %p645
      %p652 = scmp.eq.s32.totalorder %s51, 1
      %p653 = por %p651, %p652
      %p654 = scmp.ne.s32.totalorder %s646, %s649
      %p655 = scmp.eq.s32.totalorder %s51, 0
      %p656 = por %p654, %p655
      %p657 = scmp.ne.s32.totalorder %s646, %s649
      %p658 = scmp.eq.s32.totalorder %s56, 1
      %p659 = por %p657, %p658
      %p660 = scmp.ne.s32.totalorder %s649, %s650
      %p661 = scmp.eq.s32.totalorder %s56, 0
      %p662 = por %p660, %p661
      %p663 = scmp.ne.s32.totalorder %s649, %s650
      %p664 = scmp.eq.s32.totalorder %s57, 1
      %p665 = por %p663, %p664
      %p667 = scmp.ne.s32.totalorder %s650, %s666
      %p668 = scmp.eq.s32.totalorder %s57, 0
      %p669 = por %p667, %p668
      %p670 = scmp.le.s32.totalorder 1, %s51
      %p671 = scmp.lt.s32.totalorder %s51, 3
      %p672 = pnand %p670, %p671
      %p673 = pneg %p672
      // Predicated region
      $region9: #{tpu_custom_call.1} parent=5 // pred_check
        _
      $region10: #{tpu_custom_call.1} parent=5 // pred_check_branch
        %675 = sbr.rel (%p672) target = $region12
      $region11: #{tpu_custom_call.1} parent=5 // pred_region
        %s676 = ssub.s32 %s51, 1
        // Predicated region
        $region13: #{tpu_custom_call.1} parent=11 // pred_check
          %p677 = pneg %p89
        $region14: #{tpu_custom_call.1} parent=11 // pred_check_branch
          %679 = sbr.rel (%p677) target = $region16
        $region15: #{tpu_custom_call.1} parent=11 // pred_region
          %s680 = smul.u32 2, %s60
          %s682 = ssub.s32 256, 256
          %683 = vsyncadd [#allocation5], %s682
          %s684 = smul.addr %s680, 128
          %s685 = scalar_lea.hbm %s0, %s684
          %s686 = sshll.u32 [#allocation4], 4
          %s687 = int_to_ptr.vmem [resolvable:$true] %s686
          %692 = dma.hbm_to_vmem [thread:$0]  %s685, 256, %s687, [#allocation5], 128, 128, 8
        $region16: #{tpu_custom_call.1} parent=11 // pred_fallthru
          _
        // Predicated region
        $region17: #{tpu_custom_call.1} parent=11 // pred_check
          %p693 = pneg %p115
        $region18: #{tpu_custom_call.1} parent=11 // pred_check_branch
          %695 = sbr.rel (%p693) target = $region20
        $region19: #{tpu_custom_call.1} parent=11 // pred_region
          %s697 = ssub.s32 256, 256
          %698 = vsyncadd [#allocation8], %s697
          %s699 = smul.addr %s60, 2
          %s700 = smul.addr %s699, 128
          %s701 = scalar_lea.hbm %s1, %s700
          %s702 = sshll.u32 [#allocation7], 4
          %s703 = int_to_ptr.vmem [resolvable:$true] %s702
          %708 = dma.hbm_to_vmem [thread:$0]  %s701, 256, %s703, [#allocation8], 128, 128, 8
        $region20: #{tpu_custom_call.1} parent=11 // pred_fallthru
          _
        // Predicated region
        $region21: #{tpu_custom_call.1} parent=11 // pred_check
          %p709 = pneg %p136
        $region22: #{tpu_custom_call.1} parent=11 // pred_check_branch
          %711 = sbr.rel (%p709) target = $region24
        $region23: #{tpu_custom_call.1} parent=11 // pred_region
          %s713 = ssub.s32 256, 256
          %714 = vsyncadd [#allocation8], %s713
          %s715 = sshll.u32 [#allocation9], 4
          %s716 = int_to_ptr.vmem [resolvable:$true] %s715
          %721 = dma.hbm_to_vmem [thread:$0]  %s2, 256, %s716, [#allocation8], 128, 128, 8
        $region24: #{tpu_custom_call.1} parent=11 // pred_fallthru
          _
        // Predicated region
        $region25: #{tpu_custom_call.1} parent=11 // pred_check
          %p722 = pneg %p157
        $region26: #{tpu_custom_call.1} parent=11 // pred_check_branch
          %724 = sbr.rel (%p722) target = $region28
        $region27: #{tpu_custom_call.1} parent=11 // pred_region
          %s726 = ssub.s32 16, 16
          %727 = vsyncadd [#allocation11], %s726
          %s729 = sshll.u32 [#allocation10], 4
          %s730 = int_to_ptr.vmem [resolvable:$true] %s729
          %732 = dma.hbm_to_vmem [thread:$0]  %s3, 16, %s730, [#allocation11]
        $region28: #{tpu_custom_call.1} parent=11 // pred_fallthru
          _
        // Predicated region
        $region29: #{tpu_custom_call.1} parent=11 // pred_check
          %p733 = pneg %p178
        $region30: #{tpu_custom_call.1} parent=11 // pred_check_branch
          %735 = sbr.rel (%p733) target = $region32
        $region31: #{tpu_custom_call.1} parent=11 // pred_region
          %s737 = ssub.s32 256, 256
          %738 = vsyncadd [#allocation11], %s737
          %s739 = sshll.u32 [#allocation12], 4
          %s740 = int_to_ptr.vmem [resolvable:$true] %s739
          %745 = dma.hbm_to_vmem [thread:$0]  %s4, 256, %s740, [#allocation11], 128, 128, 8
        $region32: #{tpu_custom_call.1} parent=11 // pred_fallthru
          _
        // Predicated region
        $region33: #{tpu_custom_call.1} parent=11 // pred_check
          %p746 = pneg %p615
        $region34: #{tpu_custom_call.1} parent=11 // pred_check_branch
          %748 = sbr.rel (%p746) target = $region36
        $region35: #{tpu_custom_call.1} parent=11 // pred_region
          _
        $region36: #{tpu_custom_call.1} parent=11 // pred_fallthru
          _
        // Predicated region
        $region37: #{tpu_custom_call.1} parent=11 // pred_check
          %p749 = pneg %p636
        $region38: #{tpu_custom_call.1} parent=11 // pred_check_branch
          %751 = sbr.rel (%p749) target = $region40
        $region39: #{tpu_custom_call.1} parent=11 // pred_region
          _
        $region40: #{tpu_custom_call.1} parent=11 // pred_fallthru
          _
      $region12: #{tpu_custom_call.1} parent=5 // pred_fallthru
        _
      %p752 = scmp.lt.s32.totalorder %s51, 2
      // Predicated region
      $region41: #{tpu_custom_call.1} parent=5 // pred_check
        %p753 = pneg %p752
      $region42: #{tpu_custom_call.1} parent=5 // pred_check_branch
        %755 = sbr.rel (%p753) target = $region44
      $region43: #{tpu_custom_call.1} parent=5 // pred_region
        // Predicated region
        $region45: #{tpu_custom_call.1} parent=43 // pred_check
          %p756 = pneg %p198
        $region46: #{tpu_custom_call.1} parent=43 // pred_check_branch
          %758 = sbr.rel (%p756) target = $region48
        $region47: #{tpu_custom_call.1} parent=43 // pred_region
          %p759 = scmp.lt.s32.totalorder %s59, 1
          %s760 = scalar_select %p759, %s59, 1
          %s761 = smul.addr %s760, 4
          %s762 = smul.addr %s761, 8
          %s763 = scalar_lea.vmem %s5, %s762
        $region48: #{tpu_custom_call.1} parent=43 // pred_fallthru
          _
        // Predicated region
        $region49: #{tpu_custom_call.1} parent=43 // pred_check
          %p764 = pneg %p224
        $region50: #{tpu_custom_call.1} parent=43 // pred_check_branch
          %766 = sbr.rel (%p764) target = $region52
        $region51: #{tpu_custom_call.1} parent=43 // pred_region
          %s767 = sand.u32 %s51, 1
          %s768 = scalar_lea.sflag [#allocation14], %s767
          %s769 = sand.u32 %s214, 1
          %s770 = scalar_lea.vmem [#allocation13], %s769
          %s772 = ssub.s32 16, 16
          %773 = vsyncadd %s768, %s772
          %s774 = smul.addr %s59, 16
          %s775 = scalar_lea.hbm %s6, %s774
          %s777 = sshll.u32 %s770, 4
          %s778 = int_to_ptr.vmem [resolvable:$true] %s777
          %780 = dma.hbm_to_vmem [thread:$0]  %s775, 16, %s778, %s768
        $region52: #{tpu_custom_call.1} parent=43 // pred_fallthru
          _
        // Predicated region
        $region53: #{tpu_custom_call.1} parent=43 // pred_check
          %p781 = pneg %p250
        $region54: #{tpu_custom_call.1} parent=43 // pred_check_branch
          %783 = sbr.rel (%p781) target = $region56
        $region55: #{tpu_custom_call.1} parent=43 // pred_region
          %p784 = scmp.lt.s32.totalorder %s59, 1
          %s785 = scalar_select %p784, %s59, 1
          %s786 = smul.addr %s785, 4
          %s787 = smul.addr %s786, 8
          %s788 = scalar_lea.vmem %s7, %s787
        $region56: #{tpu_custom_call.1} parent=43 // pred_fallthru
          _
        // Predicated region
        $region57: #{tpu_custom_call.1} parent=43 // pred_check
          %p789 = pneg %p276
        $region58: #{tpu_custom_call.1} parent=43 // pred_check_branch
          %791 = sbr.rel (%p789) target = $region60
        $region59: #{tpu_custom_call.1} parent=43 // pred_region
          %s792 = sand.u32 %s51, 1
          %s793 = scalar_lea.sflag [#allocation14], %s792
          %s794 = sand.u32 %s266, 1
          %s795 = scalar_lea.vmem [#allocation15], %s794
          %s797 = ssub.s32 16, 16
          %798 = vsyncadd %s793, %s797
          %s799 = smul.addr %s59, 16
          %s800 = scalar_lea.hbm %s8, %s799
          %s802 = sshll.u32 %s795, 4
          %s803 = int_to_ptr.vmem [resolvable:$true] %s802
          %805 = dma.hbm_to_vmem [thread:$0]  %s800, 16, %s803, %s793
        $region60: #{tpu_custom_call.1} parent=43 // pred_fallthru
          _
        // Predicated region
        $region61: #{tpu_custom_call.1} parent=43 // pred_check
          %p806 = pneg %p302
        $region62: #{tpu_custom_call.1} parent=43 // pred_check_branch
          %808 = sbr.rel (%p806) target = $region64
        $region63: #{tpu_custom_call.1} parent=43 // pred_region
          %p809 = scmp.lt.s32.totalorder %s59, 1
          %s810 = scalar_select %p809, %s59, 1
          %s811 = smul.addr %s810, 4
          %s812 = smul.addr %s811, 8
          %s813 = scalar_lea.vmem %s9, %s812
        $region64: #{tpu_custom_call.1} parent=43 // pred_fallthru
          _
        // Predicated region
        $region65: #{tpu_custom_call.1} parent=43 // pred_check
          %p814 = pneg %p328
        $region66: #{tpu_custom_call.1} parent=43 // pred_check_branch
          %816 = sbr.rel (%p814) target = $region68
        $region67: #{tpu_custom_call.1} parent=43 // pred_region
          %s817 = sand.u32 %s51, 1
          %s818 = scalar_lea.sflag [#allocation17], %s817
          %s819 = sand.u32 %s318, 1
          %s820 = scalar_lea.vmem [#allocation16], %s819
          %s822 = ssub.s32 16, 16
          %823 = vsyncadd %s818, %s822
          %s824 = smul.addr %s59, 16
          %s825 = scalar_lea.hbm %s10, %s824
          %s827 = sshll.u32 %s820, 4
          %s828 = int_to_ptr.vmem [resolvable:$true] %s827
          %830 = dma.hbm_to_vmem [thread:$0]  %s825, 16, %s828, %s818
        $region68: #{tpu_custom_call.1} parent=43 // pred_fallthru
          _
        // Predicated region
        $region69: #{tpu_custom_call.1} parent=43 // pred_check
          %p831 = pneg %p354
        $region70: #{tpu_custom_call.1} parent=43 // pred_check_branch
          %833 = sbr.rel (%p831) target = $region72
        $region71: #{tpu_custom_call.1} parent=43 // pred_region
          %s834 = sand.u32 %s51, 1
          %s835 = scalar_lea.sflag [#allocation17], %s834
          %s836 = sand.u32 %s344, 1
          %s837 = smul.addr %s836, 32
          %s838 = scalar_lea.vmem [#allocation18], %s837
          %s840 = ssub.s32 512, 512
          %841 = vsyncadd %s835, %s840
          %s842 = smul.addr %s59, 4
          %s843 = smul.addr %s842, 128
          %s844 = scalar_lea.hbm %s11, %s843
          %s845 = sshll.u32 %s838, 4
          %s846 = int_to_ptr.vmem [resolvable:$true] %s845
          %851 = dma.hbm_to_vmem [thread:$0]  %s844, 512, %s846, %s835, 128, 128, 8
        $region72: #{tpu_custom_call.1} parent=43 // pred_fallthru
          _
        // Predicated region
        $region73: #{tpu_custom_call.1} parent=43 // pred_check
          %p852 = pneg %p380
        $region74: #{tpu_custom_call.1} parent=43 // pred_check_branch
          %854 = sbr.rel (%p852) target = $region76
        $region75: #{tpu_custom_call.1} parent=43 // pred_region
          %s855 = sand.u32 %s51, 1
          %s856 = scalar_lea.sflag [#allocation20], %s855
          %s857 = sand.u32 %s370, 1
          %s858 = scalar_lea.vmem [#allocation19], %s857
          %s860 = ssub.s32 16, 16
          %861 = vsyncadd %s856, %s860
          %s862 = smul.addr %s59, 16
          %s863 = scalar_lea.hbm %s12, %s862
          %s865 = sshll.u32 %s858, 4
          %s866 = int_to_ptr.vmem [resolvable:$true] %s865
          %868 = dma.hbm_to_vmem [thread:$0]  %s863, 16, %s866, %s856
        $region76: #{tpu_custom_call.1} parent=43 // pred_fallthru
          _
        // Predicated region
        $region77: #{tpu_custom_call.1} parent=43 // pred_check
          %p869 = pneg %p406
        $region78: #{tpu_custom_call.1} parent=43 // pred_check_branch
          %871 = sbr.rel (%p869) target = $region80
        $region79: #{tpu_custom_call.1} parent=43 // pred_region
          %s872 = sand.u32 %s51, 1
          %s873 = scalar_lea.sflag [#allocation20], %s872
          %s874 = sand.u32 %s396, 1
          %s875 = scalar_lea.vmem [#allocation21], %s874
          %s877 = ssub.s32 16, 16
          %878 = vsyncadd %s873, %s877
          %s879 = smul.addr %s59, 16
          %s880 = scalar_lea.hbm %s13, %s879
          %s882 = sshll.u32 %s875, 4
          %s883 = int_to_ptr.vmem [resolvable:$true] %s882
          %885 = dma.hbm_to_vmem [thread:$0]  %s880, 16, %s883, %s873
        $region80: #{tpu_custom_call.1} parent=43 // pred_fallthru
          _
        // Predicated region
        $region81: #{tpu_custom_call.1} parent=43 // pred_check
          %p886 = pneg %p432
        $region82: #{tpu_custom_call.1} parent=43 // pred_check_branch
          %888 = sbr.rel (%p886) target = $region84
        $region83: #{tpu_custom_call.1} parent=43 // pred_region
          %s889 = sand.u32 %s51, 1
          %s890 = scalar_lea.sflag [#allocation23], %s889
          %s891 = sand.u32 %s422, 1
          %s892 = scalar_lea.vmem [#allocation22], %s891
          %s894 = ssub.s32 16, 16
          %895 = vsyncadd %s890, %s894
          %s896 = smul.addr %s59, 16
          %s897 = scalar_lea.hbm %s14, %s896
          %s899 = sshll.u32 %s892, 4
          %s900 = int_to_ptr.vmem [resolvable:$true] %s899
          %902 = dma.hbm_to_vmem [thread:$0]  %s897, 16, %s900, %s890
        $region84: #{tpu_custom_call.1} parent=43 // pred_fallthru
          _
        // Predicated region
        $region85: #{tpu_custom_call.1} parent=43 // pred_check
          %p903 = pneg %p458
        $region86: #{tpu_custom_call.1} parent=43 // pred_check_branch
          %905 = sbr.rel (%p903) target = $region88
        $region87: #{tpu_custom_call.1} parent=43 // pred_region
          %s906 = sand.u32 %s51, 1
          %s907 = scalar_lea.sflag [#allocation23], %s906
          %s908 = sand.u32 %s448, 1
          %s909 = smul.addr %s908, 32
          %s910 = scalar_lea.vmem [#allocation24], %s909
          %s912 = ssub.s32 512, 512
          %913 = vsyncadd %s907, %s912
          %s914 = smul.addr %s59, 4
          %s915 = smul.addr %s914, 128
          %s916 = scalar_lea.hbm %s15, %s915
          %s917 = sshll.u32 %s910, 4
          %s918 = int_to_ptr.vmem [resolvable:$true] %s917
          %923 = dma.hbm_to_vmem [thread:$0]  %s916, 512, %s918, %s907, 128, 128, 8
        $region88: #{tpu_custom_call.1} parent=43 // pred_fallthru
          _
        // Predicated region
        $region89: #{tpu_custom_call.1} parent=43 // pred_check
          %p924 = pneg %p484
        $region90: #{tpu_custom_call.1} parent=43 // pred_check_branch
          %926 = sbr.rel (%p924) target = $region92
        $region91: #{tpu_custom_call.1} parent=43 // pred_region
          %s927 = sand.u32 %s51, 1
          %s928 = scalar_lea.sflag [#allocation26], %s927
          %s929 = sand.u32 %s474, 1
          %s930 = scalar_lea.vmem [#allocation25], %s929
          %s932 = ssub.s32 16, 16
          %933 = vsyncadd %s928, %s932
          %s934 = smul.addr %s59, 16
          %s935 = scalar_lea.hbm %s16, %s934
          %s937 = sshll.u32 %s930, 4
          %s938 = int_to_ptr.vmem [resolvable:$true] %s937
          %940 = dma.hbm_to_vmem [thread:$0]  %s935, 16, %s938, %s928
        $region92: #{tpu_custom_call.1} parent=43 // pred_fallthru
          _
        // Predicated region
        $region93: #{tpu_custom_call.1} parent=43 // pred_check
          %p941 = pneg %p510
        $region94: #{tpu_custom_call.1} parent=43 // pred_check_branch
          %943 = sbr.rel (%p941) target = $region96
        $region95: #{tpu_custom_call.1} parent=43 // pred_region
          %p944 = scmp.lt.s32.totalorder %s59, 1
          %s945 = scalar_select %p944, %s59, 1
          %s946 = smul.addr %s945, 8
          %s947 = smul.addr %s946, 8
          %s948 = scalar_lea.vmem %s17, %s947
        $region96: #{tpu_custom_call.1} parent=43 // pred_fallthru
          _
        // Predicated region
        $region97: #{tpu_custom_call.1} parent=43 // pred_check
          %p949 = pneg %p536
        $region98: #{tpu_custom_call.1} parent=43 // pred_check_branch
          %951 = sbr.rel (%p949) target = $region100
        $region99: #{tpu_custom_call.1} parent=43 // pred_region
          %s952 = sand.u32 %s51, 1
          %s953 = scalar_lea.sflag [#allocation26], %s952
          %s954 = sand.u32 %s526, 1
          %s955 = scalar_lea.vmem [#allocation27], %s954
          %s957 = ssub.s32 16, 16
          %958 = vsyncadd %s953, %s957
          %s959 = smul.addr %s59, 16
          %s960 = scalar_lea.hbm %s18, %s959
          %s962 = sshll.u32 %s955, 4
          %s963 = int_to_ptr.vmem [resolvable:$true] %s962
          %965 = dma.hbm_to_vmem [thread:$0]  %s960, 16, %s963, %s953
        $region100: #{tpu_custom_call.1} parent=43 // pred_fallthru
          _
        // Predicated region
        $region101: #{tpu_custom_call.1} parent=43 // pred_check
          %p966 = pneg %p562
        $region102: #{tpu_custom_call.1} parent=43 // pred_check_branch
          %968 = sbr.rel (%p966) target = $region104
        $region103: #{tpu_custom_call.1} parent=43 // pred_region
          %s969 = sand.u32 %s552, 1
          %s970 = scalar_lea.sflag [#allocation29], %s969
          %s971 = sand.u32 %s552, 1
          %s972 = scalar_lea.vmem [#allocation28], %s971
          %s974 = ssub.s32 16, 16
          %975 = vsyncadd %s970, %s974
          %s976 = smul.addr %s59, 16
          %s977 = scalar_lea.hbm %s19, %s976
          %s979 = sshll.u32 %s972, 4
          %s980 = int_to_ptr.vmem [resolvable:$true] %s979
          %982 = dma.hbm_to_vmem [thread:$0]  %s977, 16, %s980, %s970
        $region104: #{tpu_custom_call.1} parent=43 // pred_fallthru
          _
        // Predicated region
        $region105: #{tpu_custom_call.1} parent=43 // pred_check
          %p983 = pneg %p588
        $region106: #{tpu_custom_call.1} parent=43 // pred_check_branch
          %985 = sbr.rel (%p983) target = $region108
        $region107: #{tpu_custom_call.1} parent=43 // pred_region
          %p986 = scmp.lt.s32.totalorder %s59, 1
          %s987 = scalar_select %p986, %s59, 1
          %s988 = scalar_lea.vmem %s20, %s987
        $region108: #{tpu_custom_call.1} parent=43 // pred_fallthru
          _
      $region44: #{tpu_custom_call.1} parent=5 // pred_fallthru
        _
      %p989 = scmp.le.s32.totalorder 1, %s51
      %p990 = scmp.lt.s32.totalorder %s51, 3
      %p991 = pnand %p989, %p990
      %p992 = pneg %p991
      // Predicated region
      $region109: #{tpu_custom_call.1} parent=5 // pred_check
        _
      $region110: #{tpu_custom_call.1} parent=5 // pred_check_branch
        %994 = sbr.rel (%p991) target = $region112
      $region111: #{tpu_custom_call.1} parent=5 // pred_region
        %s995 = ssub.s32 %s51, 1
        // Predicated region
        $region113: #{tpu_custom_call.1} parent=111 // pred_check
          %p996 = pneg %p89
        $region114: #{tpu_custom_call.1} parent=111 // pred_check_branch
          %998 = sbr.rel (%p996) target = $region116
        $region115: #{tpu_custom_call.1} parent=111 // pred_region
          %999 = dma.done [#allocation5], 256
        $region116: #{tpu_custom_call.1} parent=111 // pred_fallthru
          _
        // Predicated region
        $region117: #{tpu_custom_call.1} parent=111 // pred_check
          %p1000 = pneg %p115
        $region118: #{tpu_custom_call.1} parent=111 // pred_check_branch
          %1002 = sbr.rel (%p1000) target = $region120
        $region119: #{tpu_custom_call.1} parent=111 // pred_region
          %1003 = dma.done [#allocation8], 256
        $region120: #{tpu_custom_call.1} parent=111 // pred_fallthru
          _
        // Predicated region
        $region121: #{tpu_custom_call.1} parent=111 // pred_check
          %p1004 = pneg %p136
        $region122: #{tpu_custom_call.1} parent=111 // pred_check_branch
          %1006 = sbr.rel (%p1004) target = $region124
        $region123: #{tpu_custom_call.1} parent=111 // pred_region
          %1007 = dma.done [#allocation8], 256
        $region124: #{tpu_custom_call.1} parent=111 // pred_fallthru
          _
        // Predicated region
        $region125: #{tpu_custom_call.1} parent=111 // pred_check
          %p1008 = pneg %p157
        $region126: #{tpu_custom_call.1} parent=111 // pred_check_branch
          %1010 = sbr.rel (%p1008) target = $region128
        $region127: #{tpu_custom_call.1} parent=111 // pred_region
          %1011 = dma.done [#allocation11], 16
        $region128: #{tpu_custom_call.1} parent=111 // pred_fallthru
          _
        // Predicated region
        $region129: #{tpu_custom_call.1} parent=111 // pred_check
          %p1012 = pneg %p178
        $region130: #{tpu_custom_call.1} parent=111 // pred_check_branch
          %1014 = sbr.rel (%p1012) target = $region132
        $region131: #{tpu_custom_call.1} parent=111 // pred_region
          %1015 = dma.done [#allocation11], 256
        $region132: #{tpu_custom_call.1} parent=111 // pred_fallthru
          _
        %s1016 = sand.u32 %s56, 1
        %s1017 = scalar_lea.sflag [#allocation14], %s1016
        %s1018 = sand.u32 %s217, 1
        %s1019 = scalar_lea.vmem [#allocation13], %s1018
        // Predicated region
        $region133: #{tpu_custom_call.1} parent=111 // pred_check
          %p1020 = pneg %p230
        $region134: #{tpu_custom_call.1} parent=111 // pred_check_branch
          %1022 = sbr.rel (%p1020) target = $region136
        $region135: #{tpu_custom_call.1} parent=111 // pred_region
          %1023 = dma.done %s1017, 16
        $region136: #{tpu_custom_call.1} parent=111 // pred_fallthru
          _
        %s1024 = sand.u32 %s56, 1
        %s1025 = scalar_lea.sflag [#allocation14], %s1024
        %s1026 = sand.u32 %s269, 1
        %s1027 = scalar_lea.vmem [#allocation15], %s1026
        // Predicated region
        $region137: #{tpu_custom_call.1} parent=111 // pred_check
          %p1028 = pneg %p282
        $region138: #{tpu_custom_call.1} parent=111 // pred_check_branch
          %1030 = sbr.rel (%p1028) target = $region140
        $region139: #{tpu_custom_call.1} parent=111 // pred_region
          %1031 = dma.done %s1025, 16
        $region140: #{tpu_custom_call.1} parent=111 // pred_fallthru
          _
        %s1032 = sand.u32 %s56, 1
        %s1033 = scalar_lea.sflag [#allocation17], %s1032
        %s1034 = sand.u32 %s321, 1
        %s1035 = scalar_lea.vmem [#allocation16], %s1034
        // Predicated region
        $region141: #{tpu_custom_call.1} parent=111 // pred_check
          %p1036 = pneg %p334
        $region142: #{tpu_custom_call.1} parent=111 // pred_check_branch
          %1038 = sbr.rel (%p1036) target = $region144
        $region143: #{tpu_custom_call.1} parent=111 // pred_region
          %1039 = dma.done %s1033, 16
        $region144: #{tpu_custom_call.1} parent=111 // pred_fallthru
          _
        %s1040 = sand.u32 %s56, 1
        %s1041 = scalar_lea.sflag [#allocation17], %s1040
        %s1042 = sand.u32 %s347, 1
        %s1043 = smul.addr %s1042, 32
        %s1044 = scalar_lea.vmem [#allocation18], %s1043
        // Predicated region
        $region145: #{tpu_custom_call.1} parent=111 // pred_check
          %p1045 = pneg %p360
        $region146: #{tpu_custom_call.1} parent=111 // pred_check_branch
          %1047 = sbr.rel (%p1045) target = $region148
        $region147: #{tpu_custom_call.1} parent=111 // pred_region
          %1048 = dma.done %s1041, 512
        $region148: #{tpu_custom_call.1} parent=111 // pred_fallthru
          _
        %s1049 = sand.u32 %s56, 1
        %s1050 = scalar_lea.sflag [#allocation20], %s1049
        %s1051 = sand.u32 %s373, 1
        %s1052 = scalar_lea.vmem [#allocation19], %s1051
        // Predicated region
        $region149: #{tpu_custom_call.1} parent=111 // pred_check
          %p1053 = pneg %p386
        $region150: #{tpu_custom_call.1} parent=111 // pred_check_branch
          %1055 = sbr.rel (%p1053) target = $region152
        $region151: #{tpu_custom_call.1} parent=111 // pred_region
          %1056 = dma.done %s1050, 16
        $region152: #{tpu_custom_call.1} parent=111 // pred_fallthru
          _
        %s1057 = sand.u32 %s56, 1
        %s1058 = scalar_lea.sflag [#allocation20], %s1057
        %s1059 = sand.u32 %s399, 1
        %s1060 = scalar_lea.vmem [#allocation21], %s1059
        // Predicated region
        $region153: #{tpu_custom_call.1} parent=111 // pred_check
          %p1061 = pneg %p412
        $region154: #{tpu_custom_call.1} parent=111 // pred_check_branch
          %1063 = sbr.rel (%p1061) target = $region156
        $region155: #{tpu_custom_call.1} parent=111 // pred_region
          %1064 = dma.done %s1058, 16
        $region156: #{tpu_custom_call.1} parent=111 // pred_fallthru
          _
        %s1065 = sand.u32 %s56, 1
        %s1066 = scalar_lea.sflag [#allocation23], %s1065
        %s1067 = sand.u32 %s425, 1
        %s1068 = scalar_lea.vmem [#allocation22], %s1067
        // Predicated region
        $region157: #{tpu_custom_call.1} parent=111 // pred_check
          %p1069 = pneg %p438
        $region158: #{tpu_custom_call.1} parent=111 // pred_check_branch
          %1071 = sbr.rel (%p1069) target = $region160
        $region159: #{tpu_custom_call.1} parent=111 // pred_region
          %1072 = dma.done %s1066, 16
        $region160: #{tpu_custom_call.1} parent=111 // pred_fallthru
          _
        %s1073 = sand.u32 %s56, 1
        %s1074 = scalar_lea.sflag [#allocation23], %s1073
        %s1075 = sand.u32 %s451, 1
        %s1076 = smul.addr %s1075, 32
        %s1077 = scalar_lea.vmem [#allocation24], %s1076
        // Predicated region
        $region161: #{tpu_custom_call.1} parent=111 // pred_check
          %p1078 = pneg %p464
        $region162: #{tpu_custom_call.1} parent=111 // pred_check_branch
          %1080 = sbr.rel (%p1078) target = $region164
        $region163: #{tpu_custom_call.1} parent=111 // pred_region
          %1081 = dma.done %s1074, 512
        $region164: #{tpu_custom_call.1} parent=111 // pred_fallthru
          _
        %s1082 = sand.u32 %s56, 1
        %s1083 = scalar_lea.sflag [#allocation26], %s1082
        %s1084 = sand.u32 %s477, 1
        %s1085 = scalar_lea.vmem [#allocation25], %s1084
        // Predicated region
        $region165: #{tpu_custom_call.1} parent=111 // pred_check
          %p1086 = pneg %p490
        $region166: #{tpu_custom_call.1} parent=111 // pred_check_branch
          %1088 = sbr.rel (%p1086) target = $region168
        $region167: #{tpu_custom_call.1} parent=111 // pred_region
          %1089 = dma.done %s1083, 16
        $region168: #{tpu_custom_call.1} parent=111 // pred_fallthru
          _
        %s1090 = sand.u32 %s56, 1
        %s1091 = scalar_lea.sflag [#allocation26], %s1090
        %s1092 = sand.u32 %s529, 1
        %s1093 = scalar_lea.vmem [#allocation27], %s1092
        // Predicated region
        $region169: #{tpu_custom_call.1} parent=111 // pred_check
          %p1094 = pneg %p542
        $region170: #{tpu_custom_call.1} parent=111 // pred_check_branch
          %1096 = sbr.rel (%p1094) target = $region172
        $region171: #{tpu_custom_call.1} parent=111 // pred_region
          %1097 = dma.done %s1091, 16
        $region172: #{tpu_custom_call.1} parent=111 // pred_fallthru
          _
        %s1098 = sand.u32 %s555, 1
        %s1099 = scalar_lea.sflag [#allocation29], %s1098
        %s1100 = sand.u32 %s555, 1
        %s1101 = scalar_lea.vmem [#allocation28], %s1100
        // Predicated region
        $region173: #{tpu_custom_call.1} parent=111 // pred_check
          %p1102 = pneg %p568
        $region174: #{tpu_custom_call.1} parent=111 // pred_check_branch
          %1104 = sbr.rel (%p1102) target = $region176
        $region175: #{tpu_custom_call.1} parent=111 // pred_region
          %1105 = dma.done %s1099, 16
        $region176: #{tpu_custom_call.1} parent=111 // pred_fallthru
          _
        %p1106 = pneg %p89
        %p1107 = pneg %p86
        %p1108 = pneg %p115
        %p1109 = pneg %p112
        %p1110 = pneg %p136
        %p1111 = pneg %p133
        %p1112 = pneg %p157
        %p1113 = pneg %p154
        %p1114 = pneg %p178
        %p1115 = pneg %p175
        %p1116 = scmp.lt.s32.totalorder %s61, 1
        %s1117 = scalar_select %p1116, %s61, 1
        %s1118 = smul.addr %s1117, 4
        %s1119 = smul.addr %s1118, 8
        %s1120 = scalar_lea.vmem %s5, %s1119
        %p1121 = pneg %p204
        %p1122 = pneg %p201
        %s1123 = sand.u32 %s56, 1
        %s1124 = scalar_lea.sflag [#allocation14], %s1123
        %s1125 = sand.u32 %s217, 1
        %s1126 = scalar_lea.vmem [#allocation13], %s1125
        %p1127 = pneg %p230
        %p1128 = pneg %p227
        %p1129 = scmp.lt.s32.totalorder %s61, 1
        %s1130 = scalar_select %p1129, %s61, 1
        %s1131 = smul.addr %s1130, 4
        %s1132 = smul.addr %s1131, 8
        %s1133 = scalar_lea.vmem %s7, %s1132
        %p1134 = pneg %p256
        %p1135 = pneg %p253
        %s1136 = sand.u32 %s56, 1
        %s1137 = scalar_lea.sflag [#allocation14], %s1136
        %s1138 = sand.u32 %s269, 1
        %s1139 = scalar_lea.vmem [#allocation15], %s1138
        %p1140 = pneg %p282
        %p1141 = pneg %p279
        %p1142 = scmp.lt.s32.totalorder %s61, 1
        %s1143 = scalar_select %p1142, %s61, 1
        %s1144 = smul.addr %s1143, 4
        %s1145 = smul.addr %s1144, 8
        %s1146 = scalar_lea.vmem %s9, %s1145
        %p1147 = pneg %p308
        %p1148 = pneg %p305
        %s1149 = sand.u32 %s56, 1
        %s1150 = scalar_lea.sflag [#allocation17], %s1149
        %s1151 = sand.u32 %s321, 1
        %s1152 = scalar_lea.vmem [#allocation16], %s1151
        %p1153 = pneg %p334
        %p1154 = pneg %p331
        %s1155 = sand.u32 %s56, 1
        %s1156 = scalar_lea.sflag [#allocation17], %s1155
        %s1157 = sand.u32 %s347, 1
        %s1158 = smul.addr %s1157, 32
        %s1159 = scalar_lea.vmem [#allocation18], %s1158
        %p1160 = pneg %p360
        %p1161 = pneg %p357
        %s1162 = sand.u32 %s56, 1
        %s1163 = scalar_lea.sflag [#allocation20], %s1162
        %s1164 = sand.u32 %s373, 1
        %s1165 = scalar_lea.vmem [#allocation19], %s1164
        %p1166 = pneg %p386
        %p1167 = pneg %p383
        %s1168 = sand.u32 %s56, 1
        %s1169 = scalar_lea.sflag [#allocation20], %s1168
        %s1170 = sand.u32 %s399, 1
        %s1171 = scalar_lea.vmem [#allocation21], %s1170
        %p1172 = pneg %p412
        %p1173 = pneg %p409
        %s1174 = sand.u32 %s56, 1
        %s1175 = scalar_lea.sflag [#allocation23], %s1174
        %s1176 = sand.u32 %s425, 1
        %s1177 = scalar_lea.vmem [#allocation22], %s1176
        %p1178 = pneg %p438
        %p1179 = pneg %p435
        %s1180 = sand.u32 %s56, 1
        %s1181 = scalar_lea.sflag [#allocation23], %s1180
        %s1182 = sand.u32 %s451, 1
        %s1183 = smul.addr %s1182, 32
        %s1184 = scalar_lea.vmem [#allocation24], %s1183
        %p1185 = pneg %p464
        %p1186 = pneg %p461
        %s1187 = sand.u32 %s56, 1
        %s1188 = scalar_lea.sflag [#allocation26], %s1187
        %s1189 = sand.u32 %s477, 1
        %s1190 = scalar_lea.vmem [#allocation25], %s1189
        %p1191 = pneg %p490
        %p1192 = pneg %p487
        %p1193 = scmp.lt.s32.totalorder %s61, 1
        %s1194 = scalar_select %p1193, %s61, 1
        %s1195 = smul.addr %s1194, 8
        %s1196 = smul.addr %s1195, 8
        %s1197 = scalar_lea.vmem %s17, %s1196
        %p1198 = pneg %p516
        %p1199 = pneg %p513
        %s1200 = sand.u32 %s56, 1
        %s1201 = scalar_lea.sflag [#allocation26], %s1200
        %s1202 = sand.u32 %s529, 1
        %s1203 = scalar_lea.vmem [#allocation27], %s1202
        %p1204 = pneg %p542
        %p1205 = pneg %p539
        %s1206 = sand.u32 %s555, 1
        %s1207 = scalar_lea.sflag [#allocation29], %s1206
        %s1208 = sand.u32 %s555, 1
        %s1209 = scalar_lea.vmem [#allocation28], %s1208
        %p1210 = pneg %p568
        %p1211 = pneg %p565
        %p1212 = scmp.lt.s32.totalorder %s61, 1
        %s1213 = scalar_select %p1212, %s61, 1
        %s1214 = scalar_lea.vmem %s20, %s1213
        %p1215 = pneg %p594
        %p1216 = pneg %p591
        %p1217 = pneg %p615
        %p1218 = pneg %p612
        %p1219 = pneg %p636
        %p1220 = pneg %p633
        %p1221 = pneg %p662
        %p1222 = pneg %p659
        %s1223 = smul.u32 2, %s60
        %p1224 = scmp.lt.s32.totalorder %s61, 1
        %s1225 = scalar_select %p1224, %s61, 1
        %s1226 = smul.addr %s1225, 4
        %s1227 = smul.addr %s1226, 8
        %s1228 = scalar_lea.vmem %s5, %s1227
        %p1229 = scmp.lt.s32.totalorder %s61, 1
        %s1230 = scalar_select %p1229, %s61, 1
        %s1231 = smul.addr %s1230, 4
        %s1232 = smul.addr %s1231, 8
        %s1233 = scalar_lea.vmem %s7, %s1232
        %p1234 = scmp.lt.s32.totalorder %s61, 1
        %s1235 = scalar_select %p1234, %s61, 1
        %s1236 = smul.addr %s1235, 4
        %s1237 = smul.addr %s1236, 8
        %s1238 = scalar_lea.vmem %s9, %s1237
        %p1239 = scmp.lt.s32.totalorder %s61, 1
        %s1240 = scalar_select %p1239, %s61, 1
        %s1241 = smul.addr %s1240, 8
        %s1242 = smul.addr %s1241, 8
        %s1243 = scalar_lea.vmem %s17, %s1242
        %p1244 = scmp.lt.s32.totalorder %s61, 1
        %s1245 = scalar_select %p1244, %s61, 1
        %s1246 = scalar_lea.vmem %s20, %s1245
        %s1247 = smul.u32 2, %s60
        %p1248 = scmp.eq.s32.totalorder %s61, 0
        // Predicated region
        $region177: #{tpu_custom_call.1} parent=111 // pred_check
          %p1249 = pneg %p1248
        $region178: #{tpu_custom_call.1} parent=111 // pred_check_branch
          %1251 = sbr.rel (%p1249) target = $region180
        $region179: #{tpu_custom_call.1} parent=111 // pred_region
          %v1252 = vld [vmem:[#allocation4] sm:$0xff]
          %v1253 = vld [vmem:[#allocation4 + $0x8] sm:$0xff]
          %v1254 = vld [vmem:[#allocation9] sm:$0xff]
          %v1255 = vld [vmem:[#allocation9 + $0x8] sm:$0xff]
          %v1256 = vld [vmem:[#allocation10] sm:$0x1]
          %v1258 = vlaneseq
          %v1259 = vshrl.u32 %v1258, 7
          %v1260 = vsub.s32 0, %v1259
          %v1261 = vrot.slane %v1256, %v1260
          %vm1263 = vcmask 130048
          %v1265 = vsel %vm1263, %v1252, 0
          %v1268 = vsel %vm1263, %v1253, 0
          %1270 = vmatprep.subr.mxu0 0.0
          %1271 = vmatpush1.msra.mxu0 0.0
          %1272 = vmatprep.subr.mxu0 0.0
          %1273 = vmatpush1.msra.mxu0 0.0
          %1274 = vmatprep.subr.mxu0 0.0
          %1275 = vmatpush1.msra.mxu0 0.0
          %1276 = vmatprep.subr.mxu0 0.0
          %1277 = vmatpush1.msra.mxu0 0.0
          %1278 = vmatprep.subr.mxu0 0.0
          %1279 = vmatpush1.msra.mxu0 0.0
          %1280 = vmatprep.subr.mxu0 0.0
          %1281 = vmatpush1.msra.mxu0 0.0
          %1282 = vmatprep.subr.mxu0 0.0
          %1283 = vmatpush1.msra.mxu0 0.0
          %1284 = vmatprep.subr.mxu0 0.0
          %1285 = vmatpush1.msra.mxu0 0.0
          %1286 = vmatprep.subr.mxu0 0.0
          %1287 = vmatpush1.msra.mxu0 0.0
          %1288 = vmatprep.subr.mxu0 0.0
          %1289 = vmatpush1.msra.mxu0 0.0
          %1290 = vmatprep.subr.mxu0 0.0
          %1291 = vmatpush1.msra.mxu0 0.0
          %1292 = vmatprep.subr.mxu0 0.0
          %1293 = vmatpush1.msra.mxu0 0.0
          %1294 = vmatprep.subr.mxu0 0.0
          %1295 = vmatpush1.msra.mxu0 0.0
          %1296 = vmatprep.subr.mxu0 0.0
          %1297 = vmatpush1.msra.mxu0 0.0
          %1298 = vmatprep.subr.mxu0 0.0
          %1299 = vmatpush1.msra.mxu0 %v1255
          %1300 = vmatprep.subr.mxu0 0.0
          %1301 = vmatpush1.msra.mxu0 %v1254
          %1302 = vmatprep.subr.mxu0 0.0
          %1303 = vmatpush2.msra.mxu0 0.0
          %1304 = vmatprep.subr.mxu0 0.0
          %1305 = vmatpush2.msra.mxu0 0.0
          %1306 = vmatprep.subr.mxu0 0.0
          %1307 = vmatpush2.msra.mxu0 0.0
          %1308 = vmatprep.subr.mxu0 0.0
          %1309 = vmatpush2.msra.mxu0 0.0
          %1310 = vmatprep.subr.mxu0 0.0
          %1311 = vmatpush2.msra.mxu0 0.0
          %1312 = vmatprep.subr.mxu0 0.0
          %1313 = vmatpush2.msra.mxu0 0.0
          %1314 = vmatprep.subr.mxu0 0.0
          %1315 = vmatpush2.msra.mxu0 0.0
          %1316 = vmatprep.subr.mxu0 0.0
          %1317 = vmatpush2.msra.mxu0 0.0
          %1318 = vmatprep.subr.mxu0 0.0
          %1319 = vmatpush2.msra.mxu0 0.0
          %1320 = vmatprep.subr.mxu0 0.0
          %1321 = vmatpush2.msra.mxu0 0.0
          %1322 = vmatprep.subr.mxu0 0.0
          %1323 = vmatpush2.msra.mxu0 0.0
          %1324 = vmatprep.subr.mxu0 0.0
          %1325 = vmatpush2.msra.mxu0 0.0
          %1326 = vmatprep.subr.mxu0 0.0
          %1327 = vmatpush2.msra.mxu0 0.0
          %1328 = vmatprep.subr.mxu0 0.0
          %1329 = vmatpush2.msra.mxu0 0.0
          %1330 = vmatprep.subr.mxu0 0.0
          %1331 = vmatpush2.msra.mxu0 0.0
          %1332 = vmatprep.subr.mxu0 0.0
          %1333 = vmatpush2.msra.mxu0 0.0
          %1334 = vmatprep.mubr.f32.mxu0 0.0
          %1335 = vmatmul.mubr.f32.gmra.mxu0 %v1265
          %v1336 = vpop.f32.mrf.mxu0
          %v1337 = vadd.f32 %v1261, %v1336
          %v1338 = vpop.f32.mrf.mxu0
          %1339 = vmatprep.mubr.f32.mxu0 0.0
          %1340 = vmatmul.mubr.f32.gmra.mxu0 %v1268
          %v1341 = vpop.f32.mrf.mxu0
          %v1342 = vadd.f32 %v1261, %v1341
          %v1343 = vpop.f32.mrf.mxu0
          %1344 = vdwg.mxu0
          %v1345 = vmul.f32 %v1337, 5.656854
          %v1346 = vmul.f32 %v1342, 5.656854
          %v1347 = vld [vmem:[#allocation12] sm:$0xff]
          %v1348 = vld [vmem:[#allocation12 + $0x8] sm:$0xff]
          %v1349 = vadd.f32 %v1345, %v1347
          %v1350 = vadd.f32 %v1346, %v1348
          %vm1351 = vcmask 261120
          %1352 = vst.msk [vmem:[#allocation2] sm:$0xff] %vm1351, %v1349
          %1353 = vst.msk [vmem:[#allocation2 + $0x8] sm:$0xff] %vm1351, %v1350
        $region180: #{tpu_custom_call.1} parent=111 // pred_fallthru
          _
        %v1354 = vld [vmem:[#allocation2] sm:$0xff]
        %v1355 = vld [vmem:[#allocation2 + $0x8] sm:$0xff]
        %v1356 = vld [vmem:[%s1228] sm:$0xff]
        %v1357 = vld [vmem:[%s1228 + $0x8] sm:$0xff]
        %v1358 = vld [vmem:[%s1228 + $0x10] sm:$0xff]
        %v1359 = vld [vmem:[%s1228 + $0x18] sm:$0xff]
        %v1360 = vld [vmem:[%s1019] sm:$0x1]
        %v1362 = vlaneseq
        %v1363 = vshrl.u32 %v1362, 7
        %v1364 = vsub.s32 0, %v1363
        %v1365 = vrot.slane %v1360, %v1364
        %vm1367 = vcmask 261120
        %v1369 = vsel %vm1367, %v1354, 0
        %v1372 = vsel %vm1367, %v1355, 0
        %1374 = vmatprep.subr.mxu0 0.0
        %1375 = vmatpush1.msra.mxu0 0.0
        %1376 = vmatprep.subr.mxu0 0.0
        %1377 = vmatpush1.msra.mxu0 0.0
        %1378 = vmatprep.subr.mxu0 0.0
        %1379 = vmatpush1.msra.mxu0 0.0
        %1380 = vmatprep.subr.mxu0 0.0
        %1381 = vmatpush1.msra.mxu0 0.0
        %1382 = vmatprep.subr.mxu0 0.0
        %1383 = vmatpush1.msra.mxu0 0.0
        %1384 = vmatprep.subr.mxu0 0.0
        %1385 = vmatpush1.msra.mxu0 0.0
        %1386 = vmatprep.subr.mxu0 0.0
        %1387 = vmatpush1.msra.mxu0 0.0
        %1388 = vmatprep.subr.mxu0 0.0
        %1389 = vmatpush1.msra.mxu0 0.0
        %1390 = vmatprep.subr.mxu0 0.0
        %1391 = vmatpush1.msra.mxu0 0.0
        %1392 = vmatprep.subr.mxu0 0.0
        %1393 = vmatpush1.msra.mxu0 0.0
        %1394 = vmatprep.subr.mxu0 0.0
        %1395 = vmatpush1.msra.mxu0 0.0
        %1396 = vmatprep.subr.mxu0 0.0
        %1397 = vmatpush1.msra.mxu0 0.0
        %1398 = vmatprep.subr.mxu0 0.0
        %1399 = vmatpush1.msra.mxu0 %v1359
        %1400 = vmatprep.subr.mxu0 0.0
        %1401 = vmatpush1.msra.mxu0 %v1358
        %1402 = vmatprep.subr.mxu0 0.0
        %1403 = vmatpush1.msra.mxu0 %v1357
        %1404 = vmatprep.subr.mxu0 0.0
        %1405 = vmatpush1.msra.mxu0 %v1356
        %1406 = vmatprep.subr.mxu0 0.0
        %1407 = vmatpush2.msra.mxu0 0.0
        %1408 = vmatprep.subr.mxu0 0.0
        %1409 = vmatpush2.msra.mxu0 0.0
        %1410 = vmatprep.subr.mxu0 0.0
        %1411 = vmatpush2.msra.mxu0 0.0
        %1412 = vmatprep.subr.mxu0 0.0
        %1413 = vmatpush2.msra.mxu0 0.0
        %1414 = vmatprep.subr.mxu0 0.0
        %1415 = vmatpush2.msra.mxu0 0.0
        %1416 = vmatprep.subr.mxu0 0.0
        %1417 = vmatpush2.msra.mxu0 0.0
        %1418 = vmatprep.subr.mxu0 0.0
        %1419 = vmatpush2.msra.mxu0 0.0
        %1420 = vmatprep.subr.mxu0 0.0
        %1421 = vmatpush2.msra.mxu0 0.0
        %1422 = vmatprep.subr.mxu0 0.0
        %1423 = vmatpush2.msra.mxu0 0.0
        %1424 = vmatprep.subr.mxu0 0.0
        %1425 = vmatpush2.msra.mxu0 0.0
        %1426 = vmatprep.subr.mxu0 0.0
        %1427 = vmatpush2.msra.mxu0 0.0
        %1428 = vmatprep.subr.mxu0 0.0
        %1429 = vmatpush2.msra.mxu0 0.0
        %1430 = vmatprep.subr.mxu0 0.0
        %1431 = vmatpush2.msra.mxu0 0.0
        %1432 = vmatprep.subr.mxu0 0.0
        %1433 = vmatpush2.msra.mxu0 0.0
        %1434 = vmatprep.subr.mxu0 0.0
        %1435 = vmatpush2.msra.mxu0 0.0
        %1436 = vmatprep.subr.mxu0 0.0
        %1437 = vmatpush2.msra.mxu0 0.0
        %1438 = vmatprep.mubr.f32.mxu0 0.0
        %1439 = vmatmul.mubr.f32.gmra.mxu0 %v1369
        %v1440 = vpop.f32.mrf.mxu0
        %v1441 = vadd.f32 %v1365, %v1440
        %v1442 = vpop.f32.mrf.mxu0
        %1443 = vmatprep.mubr.f32.mxu0 0.0
        %1444 = vmatmul.mubr.f32.gmra.mxu0 %v1372
        %v1445 = vpop.f32.mrf.mxu0
        %v1446 = vadd.f32 %v1365, %v1445
        %v1447 = vpop.f32.mrf.mxu0
        %1448 = vdwg.mxu0
        %v1449 = vld [vmem:[%s1233] sm:$0xff]
        %v1450 = vld [vmem:[%s1233 + $0x8] sm:$0xff]
        %v1451 = vld [vmem:[%s1233 + $0x10] sm:$0xff]
        %v1452 = vld [vmem:[%s1233 + $0x18] sm:$0xff]
        %v1453 = vld [vmem:[%s1027] sm:$0x1]
        %v1455 = vlaneseq
        %v1456 = vshrl.u32 %v1455, 7
        %v1457 = vsub.s32 0, %v1456
        %v1458 = vrot.slane %v1453, %v1457
        %1460 = vmatprep.subr.mxu0 0.0
        %1461 = vmatpush1.msra.mxu0 0.0
        %1462 = vmatprep.subr.mxu0 0.0
        %1463 = vmatpush1.msra.mxu0 0.0
        %1464 = vmatprep.subr.mxu0 0.0
        %1465 = vmatpush1.msra.mxu0 0.0
        %1466 = vmatprep.subr.mxu0 0.0
        %1467 = vmatpush1.msra.mxu0 0.0
        %1468 = vmatprep.subr.mxu0 0.0
        %1469 = vmatpush1.msra.mxu0 0.0
        %1470 = vmatprep.subr.mxu0 0.0
        %1471 = vmatpush1.msra.mxu0 0.0
        %1472 = vmatprep.subr.mxu0 0.0
        %1473 = vmatpush1.msra.mxu0 0.0
        %1474 = vmatprep.subr.mxu0 0.0
        %1475 = vmatpush1.msra.mxu0 0.0
        %1476 = vmatprep.subr.mxu0 0.0
        %1477 = vmatpush1.msra.mxu0 0.0
        %1478 = vmatprep.subr.mxu0 0.0
        %1479 = vmatpush1.msra.mxu0 0.0
        %1480 = vmatprep.subr.mxu0 0.0
        %1481 = vmatpush1.msra.mxu0 0.0
        %1482 = vmatprep.subr.mxu0 0.0
        %1483 = vmatpush1.msra.mxu0 0.0
        %1484 = vmatprep.subr.mxu0 0.0
        %1485 = vmatpush1.msra.mxu0 %v1452
        %1486 = vmatprep.subr.mxu0 0.0
        %1487 = vmatpush1.msra.mxu0 %v1451
        %1488 = vmatprep.subr.mxu0 0.0
        %1489 = vmatpush1.msra.mxu0 %v1450
        %1490 = vmatprep.subr.mxu0 0.0
        %1491 = vmatpush1.msra.mxu0 %v1449
        %1492 = vmatprep.subr.mxu0 0.0
        %1493 = vmatpush2.msra.mxu0 0.0
        %1494 = vmatprep.subr.mxu0 0.0
        %1495 = vmatpush2.msra.mxu0 0.0
        %1496 = vmatprep.subr.mxu0 0.0
        %1497 = vmatpush2.msra.mxu0 0.0
        %1498 = vmatprep.subr.mxu0 0.0
        %1499 = vmatpush2.msra.mxu0 0.0
        %1500 = vmatprep.subr.mxu0 0.0
        %1501 = vmatpush2.msra.mxu0 0.0
        %1502 = vmatprep.subr.mxu0 0.0
        %1503 = vmatpush2.msra.mxu0 0.0
        %1504 = vmatprep.subr.mxu0 0.0
        %1505 = vmatpush2.msra.mxu0 0.0
        %1506 = vmatprep.subr.mxu0 0.0
        %1507 = vmatpush2.msra.mxu0 0.0
        %1508 = vmatprep.subr.mxu0 0.0
        %1509 = vmatpush2.msra.mxu0 0.0
        %1510 = vmatprep.subr.mxu0 0.0
        %1511 = vmatpush2.msra.mxu0 0.0
        %1512 = vmatprep.subr.mxu0 0.0
        %1513 = vmatpush2.msra.mxu0 0.0
        %1514 = vmatprep.subr.mxu0 0.0
        %1515 = vmatpush2.msra.mxu0 0.0
        %1516 = vmatprep.subr.mxu0 0.0
        %1517 = vmatpush2.msra.mxu0 0.0
        %1518 = vmatprep.subr.mxu0 0.0
        %1519 = vmatpush2.msra.mxu0 0.0
        %1520 = vmatprep.subr.mxu0 0.0
        %1521 = vmatpush2.msra.mxu0 0.0
        %1522 = vmatprep.subr.mxu0 0.0
        %1523 = vmatpush2.msra.mxu0 0.0
        %1524 = vmatprep.mubr.f32.mxu0 0.0
        %1525 = vmatmul.mubr.f32.gmra.mxu0 %v1369
        %v1526 = vpop.f32.mrf.mxu0
        %v1527 = vadd.f32 %v1458, %v1526
        %v1528 = vpop.f32.mrf.mxu0
        %1529 = vmatprep.mubr.f32.mxu0 0.0
        %1530 = vmatmul.mubr.f32.gmra.mxu0 %v1372
        %v1531 = vpop.f32.mrf.mxu0
        %v1532 = vadd.f32 %v1458, %v1531
        %v1533 = vpop.f32.mrf.mxu0
        %1534 = vdwg.mxu0
        %v1535 = vld [vmem:[%s1238] sm:$0xff]
        %v1536 = vld [vmem:[%s1238 + $0x8] sm:$0xff]
        %v1537 = vld [vmem:[%s1238 + $0x10] sm:$0xff]
        %v1538 = vld [vmem:[%s1238 + $0x18] sm:$0xff]
        %v1539 = vld [vmem:[%s1035] sm:$0x1]
        %v1541 = vlaneseq
        %v1542 = vshrl.u32 %v1541, 7
        %v1543 = vsub.s32 0, %v1542
        %v1544 = vrot.slane %v1539, %v1543
        %1546 = vmatprep.subr.mxu0 0.0
        %1547 = vmatpush1.msra.mxu0 0.0
        %1548 = vmatprep.subr.mxu0 0.0
        %1549 = vmatpush1.msra.mxu0 0.0
        %1550 = vmatprep.subr.mxu0 0.0
        %1551 = vmatpush1.msra.mxu0 0.0
        %1552 = vmatprep.subr.mxu0 0.0
        %1553 = vmatpush1.msra.mxu0 0.0
        %1554 = vmatprep.subr.mxu0 0.0
        %1555 = vmatpush1.msra.mxu0 0.0
        %1556 = vmatprep.subr.mxu0 0.0
        %1557 = vmatpush1.msra.mxu0 0.0
        %1558 = vmatprep.subr.mxu0 0.0
        %1559 = vmatpush1.msra.mxu0 0.0
        %1560 = vmatprep.subr.mxu0 0.0
        %1561 = vmatpush1.msra.mxu0 0.0
        %1562 = vmatprep.subr.mxu0 0.0
        %1563 = vmatpush1.msra.mxu0 0.0
        %1564 = vmatprep.subr.mxu0 0.0
        %1565 = vmatpush1.msra.mxu0 0.0
        %1566 = vmatprep.subr.mxu0 0.0
        %1567 = vmatpush1.msra.mxu0 0.0
        %1568 = vmatprep.subr.mxu0 0.0
        %1569 = vmatpush1.msra.mxu0 0.0
        %1570 = vmatprep.subr.mxu0 0.0
        %1571 = vmatpush1.msra.mxu0 %v1538
        %1572 = vmatprep.subr.mxu0 0.0
        %1573 = vmatpush1.msra.mxu0 %v1537
        %1574 = vmatprep.subr.mxu0 0.0
        %1575 = vmatpush1.msra.mxu0 %v1536
        %1576 = vmatprep.subr.mxu0 0.0
        %1577 = vmatpush1.msra.mxu0 %v1535
        %1578 = vmatprep.subr.mxu0 0.0
        %1579 = vmatpush2.msra.mxu0 0.0
        %1580 = vmatprep.subr.mxu0 0.0
        %1581 = vmatpush2.msra.mxu0 0.0
        %1582 = vmatprep.subr.mxu0 0.0
        %1583 = vmatpush2.msra.mxu0 0.0
        %1584 = vmatprep.subr.mxu0 0.0
        %1585 = vmatpush2.msra.mxu0 0.0
        %1586 = vmatprep.subr.mxu0 0.0
        %1587 = vmatpush2.msra.mxu0 0.0
        %1588 = vmatprep.subr.mxu0 0.0
        %1589 = vmatpush2.msra.mxu0 0.0
        %1590 = vmatprep.subr.mxu0 0.0
        %1591 = vmatpush2.msra.mxu0 0.0
        %1592 = vmatprep.subr.mxu0 0.0
        %1593 = vmatpush2.msra.mxu0 0.0
        %1594 = vmatprep.subr.mxu0 0.0
        %1595 = vmatpush2.msra.mxu0 0.0
        %1596 = vmatprep.subr.mxu0 0.0
        %1597 = vmatpush2.msra.mxu0 0.0
        %1598 = vmatprep.subr.mxu0 0.0
        %1599 = vmatpush2.msra.mxu0 0.0
        %1600 = vmatprep.subr.mxu0 0.0
        %1601 = vmatpush2.msra.mxu0 0.0
        %1602 = vmatprep.subr.mxu0 0.0
        %1603 = vmatpush2.msra.mxu0 0.0
        %1604 = vmatprep.subr.mxu0 0.0
        %1605 = vmatpush2.msra.mxu0 0.0
        %1606 = vmatprep.subr.mxu0 0.0
        %1607 = vmatpush2.msra.mxu0 0.0
        %1608 = vmatprep.subr.mxu0 0.0
        %1609 = vmatpush2.msra.mxu0 0.0
        %1610 = vmatprep.mubr.f32.mxu0 0.0
        %1611 = vmatmul.mubr.f32.gmra.mxu0 %v1369
        %v1612 = vpop.f32.mrf.mxu0
        %v1613 = vadd.f32 %v1544, %v1612
        %v1614 = vpop.f32.mrf.mxu0
        %1615 = vmatprep.mubr.f32.mxu0 0.0
        %1616 = vmatmul.mubr.f32.gmra.mxu0 %v1372
        %v1617 = vpop.f32.mrf.mxu0
        %v1618 = vadd.f32 %v1544, %v1617
        %v1619 = vpop.f32.mrf.mxu0
        %1620 = vdwg.mxu0
        %v1621 = vld [vmem:[#allocation7] sm:$0xff]
        %v1622 = vld [vmem:[#allocation7 + $0x8] sm:$0xff]
        %vm1623 = vcmask 64512
        %v1625 = vsel %vm1623, %v1441, 0
        %v1628 = vsel %vm1623, %v1446, 0
        %v1631 = vsel %vm1623, %v1527, 0
        %v1634 = vsel %vm1623, %v1532, 0
        %1636 = vmatprep.subr.mxu0 0.0
        %1637 = vmatpush1.xpose.msra.mxu0 0.0
        %1638 = vmatprep.subr.mxu0 0.0
        %1639 = vmatpush1.xpose.msra.mxu0 0.0
        %1640 = vmatprep.subr.mxu0 0.0
        %1641 = vmatpush1.xpose.msra.mxu0 0.0
        %1642 = vmatprep.subr.mxu0 0.0
        %1643 = vmatpush1.xpose.msra.mxu0 0.0
        %1644 = vmatprep.subr.mxu0 0.0
        %1645 = vmatpush1.xpose.msra.mxu0 0.0
        %1646 = vmatprep.subr.mxu0 0.0
        %1647 = vmatpush1.xpose.msra.mxu0 0.0
        %1648 = vmatprep.subr.mxu0 0.0
        %1649 = vmatpush1.xpose.msra.mxu0 0.0
        %1650 = vmatprep.subr.mxu0 0.0
        %1651 = vmatpush1.xpose.msra.mxu0 0.0
        %1652 = vmatprep.subr.mxu0 0.0
        %1653 = vmatpush1.xpose.msra.mxu0 0.0
        %1654 = vmatprep.subr.mxu0 0.0
        %1655 = vmatpush1.xpose.msra.mxu0 0.0
        %1656 = vmatprep.subr.mxu0 0.0
        %1657 = vmatpush1.xpose.msra.mxu0 0.0
        %1658 = vmatprep.subr.mxu0 0.0
        %1659 = vmatpush1.xpose.msra.mxu0 0.0
        %1660 = vmatprep.subr.mxu0 0.0
        %1661 = vmatpush1.xpose.msra.mxu0 0.0
        %1662 = vmatprep.subr.mxu0 0.0
        %1663 = vmatpush1.xpose.msra.mxu0 0.0
        %1664 = vmatprep.subr.mxu0 0.0
        %1665 = vmatpush1.xpose.msra.mxu0 %v1634
        %1666 = vmatprep.subr.mxu0 0.0
        %1667 = vmatpush1.xpose.msra.mxu0 %v1631
        %1668 = vmatprep.subr.mxu0 0.0
        %1669 = vmatpush2.xpose.msra.mxu0 0.0
        %1670 = vmatprep.subr.mxu0 0.0
        %1671 = vmatpush2.xpose.msra.mxu0 0.0
        %1672 = vmatprep.subr.mxu0 0.0
        %1673 = vmatpush2.xpose.msra.mxu0 0.0
        %1674 = vmatprep.subr.mxu0 0.0
        %1675 = vmatpush2.xpose.msra.mxu0 0.0
        %1676 = vmatprep.subr.mxu0 0.0
        %1677 = vmatpush2.xpose.msra.mxu0 0.0
        %1678 = vmatprep.subr.mxu0 0.0
        %1679 = vmatpush2.xpose.msra.mxu0 0.0
        %1680 = vmatprep.subr.mxu0 0.0
        %1681 = vmatpush2.xpose.msra.mxu0 0.0
        %1682 = vmatprep.subr.mxu0 0.0
        %1683 = vmatpush2.xpose.msra.mxu0 0.0
        %1684 = vmatprep.subr.mxu0 0.0
        %1685 = vmatpush2.xpose.msra.mxu0 0.0
        %1686 = vmatprep.subr.mxu0 0.0
        %1687 = vmatpush2.xpose.msra.mxu0 0.0
        %1688 = vmatprep.subr.mxu0 0.0
        %1689 = vmatpush2.xpose.msra.mxu0 0.0
        %1690 = vmatprep.subr.mxu0 0.0
        %1691 = vmatpush2.xpose.msra.mxu0 0.0
        %1692 = vmatprep.subr.mxu0 0.0
        %1693 = vmatpush2.xpose.msra.mxu0 0.0
        %1694 = vmatprep.subr.mxu0 0.0
        %1695 = vmatpush2.xpose.msra.mxu0 0.0
        %1696 = vmatprep.subr.mxu0 0.0
        %1697 = vmatpush2.xpose.msra.mxu0 0.0
        %1698 = vmatprep.subr.mxu0 0.0
        %1699 = vmatpush2.xpose.msra.mxu0 0.0
        %1700 = vmatprep.mubr.f32.mxu0 0.0
        %1701 = vmatmul.mubr.f32.gmra.mxu0 %v1625
        %v1702 = vpop.f32.mrf.mxu0
        %v1703 = vadd.f32 0.0, %v1702
        %v1704 = vpop.f32.mrf.mxu0
        %1705 = vmatprep.mubr.f32.mxu0 0.0
        %1706 = vmatmul.mubr.f32.gmra.mxu0 %v1628
        %v1707 = vpop.f32.mrf.mxu0
        %v1708 = vadd.f32 0.0, %v1707
        %v1709 = vpop.f32.mrf.mxu0
        %1710 = vdwg.mxu0
        %v1711 = vmul.f32 %v1703, 0.35355338
        %v1712 = vmul.f32 %v1708, 0.35355338
        %v1713 = vadd.f32 %v1711, %v1621
        %v1714 = vadd.f32 %v1712, %v1622
        %vm1715 = vcmask 130048
        %v1716 = vsel %vm1715, %v1713, -inf
        %1717 = vmax.xlane.f32.xlu0 %v1716
        %v1718 = vpop.xlane.xlu0 %1717
        %v1719 = vsel %vm1715, %v1714, -inf
        %1720 = vmax.xlane.f32.xlu0 %v1719
        %v1721 = vpop.xlane.xlu0 %1720
        %v1722 = vsub.f32 %v1713, %v1718
        %v1723 = vsub.f32 %v1714, %v1721
        %v1724 = vmul.f32 %v1722, 1.442695
        %v1725 = vpow.pop %v1724
        %v1726 = vmul.f32 %v1723, 1.442695
        %v1727 = vpow.pop %v1726
        %v1728 = vsel %vm1715, %v1725, 0.0
        %1729 = vadd.xlane.f32.xlu0 %v1728
        %v1730 = vpop.xlane.xlu0 %1729
        %v1731 = vsel %vm1715, %v1727, 0.0
        %1732 = vadd.xlane.f32.xlu0 %v1731
        %v1733 = vpop.xlane.xlu0 %1732
        %v1734 = vrcp.pop %v1730
        %v1735 = vrcp.pop %v1733
        %v1736 = vmul.f32 %v1725, %v1734
        %v1737 = vmul.f32 %v1727, %v1735
        %v1739 = vsel %vm1715, %v1736, 0
        %v1742 = vsel %vm1715, %v1737, 0
        %1744 = vmatprep.subr.mxu0 0.0
        %1745 = vmatpush1.msra.mxu0 0.0
        %1746 = vmatprep.subr.mxu0 0.0
        %1747 = vmatpush1.msra.mxu0 0.0
        %1748 = vmatprep.subr.mxu0 0.0
        %1749 = vmatpush1.msra.mxu0 0.0
        %1750 = vmatprep.subr.mxu0 0.0
        %1751 = vmatpush1.msra.mxu0 0.0
        %1752 = vmatprep.subr.mxu0 0.0
        %1753 = vmatpush1.msra.mxu0 0.0
        %1754 = vmatprep.subr.mxu0 0.0
        %1755 = vmatpush1.msra.mxu0 0.0
        %1756 = vmatprep.subr.mxu0 0.0
        %1757 = vmatpush1.msra.mxu0 0.0
        %1758 = vmatprep.subr.mxu0 0.0
        %1759 = vmatpush1.msra.mxu0 0.0
        %1760 = vmatprep.subr.mxu0 0.0
        %1761 = vmatpush1.msra.mxu0 0.0
        %1762 = vmatprep.subr.mxu0 0.0
        %1763 = vmatpush1.msra.mxu0 0.0
        %1764 = vmatprep.subr.mxu0 0.0
        %1765 = vmatpush1.msra.mxu0 0.0
        %1766 = vmatprep.subr.mxu0 0.0
        %1767 = vmatpush1.msra.mxu0 0.0
        %1768 = vmatprep.subr.mxu0 0.0
        %1769 = vmatpush1.msra.mxu0 0.0
        %1770 = vmatprep.subr.mxu0 0.0
        %1771 = vmatpush1.msra.mxu0 0.0
        %1772 = vmatprep.subr.mxu0 0.0
        %1773 = vmatpush1.msra.mxu0 %v1618
        %1774 = vmatprep.subr.mxu0 0.0
        %1775 = vmatpush1.msra.mxu0 %v1613
        %1776 = vmatprep.subr.mxu0 0.0
        %1777 = vmatpush2.msra.mxu0 0.0
        %1778 = vmatprep.subr.mxu0 0.0
        %1779 = vmatpush2.msra.mxu0 0.0
        %1780 = vmatprep.subr.mxu0 0.0
        %1781 = vmatpush2.msra.mxu0 0.0
        %1782 = vmatprep.subr.mxu0 0.0
        %1783 = vmatpush2.msra.mxu0 0.0
        %1784 = vmatprep.subr.mxu0 0.0
        %1785 = vmatpush2.msra.mxu0 0.0
        %1786 = vmatprep.subr.mxu0 0.0
        %1787 = vmatpush2.msra.mxu0 0.0
        %1788 = vmatprep.subr.mxu0 0.0
        %1789 = vmatpush2.msra.mxu0 0.0
        %1790 = vmatprep.subr.mxu0 0.0
        %1791 = vmatpush2.msra.mxu0 0.0
        %1792 = vmatprep.subr.mxu0 0.0
        %1793 = vmatpush2.msra.mxu0 0.0
        %1794 = vmatprep.subr.mxu0 0.0
        %1795 = vmatpush2.msra.mxu0 0.0
        %1796 = vmatprep.subr.mxu0 0.0
        %1797 = vmatpush2.msra.mxu0 0.0
        %1798 = vmatprep.subr.mxu0 0.0
        %1799 = vmatpush2.msra.mxu0 0.0
        %1800 = vmatprep.subr.mxu0 0.0
        %1801 = vmatpush2.msra.mxu0 0.0
        %1802 = vmatprep.subr.mxu0 0.0
        %1803 = vmatpush2.msra.mxu0 0.0
        %1804 = vmatprep.subr.mxu0 0.0
        %1805 = vmatpush2.msra.mxu0 0.0
        %1806 = vmatprep.subr.mxu0 0.0
        %1807 = vmatpush2.msra.mxu0 0.0
        %1808 = vmatprep.mubr.f32.mxu0 0.0
        %1809 = vmatmul.mubr.f32.gmra.mxu0 %v1739
        %v1810 = vpop.f32.mrf.mxu0
        %v1811 = vadd.f32 0.0, %v1810
        %v1812 = vpop.f32.mrf.mxu0
        %1813 = vmatprep.mubr.f32.mxu0 0.0
        %1814 = vmatmul.mubr.f32.gmra.mxu0 %v1742
        %v1815 = vpop.f32.mrf.mxu0
        %v1816 = vadd.f32 0.0, %v1815
        %v1817 = vpop.f32.mrf.mxu0
        %1818 = vdwg.mxu0
        %1819 = vst.msk [vmem:[#allocation3] sm:$0xff] %vm1623, %v1811
        %1820 = vst.msk [vmem:[#allocation3 + $0x8] sm:$0xff] %vm1623, %v1816
        %1821 = vrot.lane.b32.xlu0 %v1441, 120
        %v1822 = vpop.permute.xlu0 %1821
        %1823 = vrot.lane.b32.xlu0 %v1446, 120
        %v1824 = vpop.permute.xlu0 %1823
        %1825 = vrot.lane.b32.xlu0 %v1527, 120
        %v1826 = vpop.permute.xlu0 %1825
        %1827 = vrot.lane.b32.xlu0 %v1532, 120
        %v1828 = vpop.permute.xlu0 %1827
        %v1829 = vsel %vm1623, %v1822, 0
        %v1831 = vsel %vm1623, %v1824, 0
        %v1833 = vsel %vm1623, %v1826, 0
        %v1835 = vsel %vm1623, %v1828, 0
        %1837 = vmatprep.subr.mxu0 0.0
        %1838 = vmatpush1.xpose.msra.mxu0 0.0
        %1839 = vmatprep.subr.mxu0 0.0
        %1840 = vmatpush1.xpose.msra.mxu0 0.0
        %1841 = vmatprep.subr.mxu0 0.0
        %1842 = vmatpush1.xpose.msra.mxu0 0.0
        %1843 = vmatprep.subr.mxu0 0.0
        %1844 = vmatpush1.xpose.msra.mxu0 0.0
        %1845 = vmatprep.subr.mxu0 0.0
        %1846 = vmatpush1.xpose.msra.mxu0 0.0
        %1847 = vmatprep.subr.mxu0 0.0
        %1848 = vmatpush1.xpose.msra.mxu0 0.0
        %1849 = vmatprep.subr.mxu0 0.0
        %1850 = vmatpush1.xpose.msra.mxu0 0.0
        %1851 = vmatprep.subr.mxu0 0.0
        %1852 = vmatpush1.xpose.msra.mxu0 0.0
        %1853 = vmatprep.subr.mxu0 0.0
        %1854 = vmatpush1.xpose.msra.mxu0 0.0
        %1855 = vmatprep.subr.mxu0 0.0
        %1856 = vmatpush1.xpose.msra.mxu0 0.0
        %1857 = vmatprep.subr.mxu0 0.0
        %1858 = vmatpush1.xpose.msra.mxu0 0.0
        %1859 = vmatprep.subr.mxu0 0.0
        %1860 = vmatpush1.xpose.msra.mxu0 0.0
        %1861 = vmatprep.subr.mxu0 0.0
        %1862 = vmatpush1.xpose.msra.mxu0 0.0
        %1863 = vmatprep.subr.mxu0 0.0
        %1864 = vmatpush1.xpose.msra.mxu0 0.0
        %1865 = vmatprep.subr.mxu0 0.0
        %1866 = vmatpush1.xpose.msra.mxu0 %v1835
        %1867 = vmatprep.subr.mxu0 0.0
        %1868 = vmatpush1.xpose.msra.mxu0 %v1833
        %1869 = vmatprep.subr.mxu0 0.0
        %1870 = vmatpush2.xpose.msra.mxu0 0.0
        %1871 = vmatprep.subr.mxu0 0.0
        %1872 = vmatpush2.xpose.msra.mxu0 0.0
        %1873 = vmatprep.subr.mxu0 0.0
        %1874 = vmatpush2.xpose.msra.mxu0 0.0
        %1875 = vmatprep.subr.mxu0 0.0
        %1876 = vmatpush2.xpose.msra.mxu0 0.0
        %1877 = vmatprep.subr.mxu0 0.0
        %1878 = vmatpush2.xpose.msra.mxu0 0.0
        %1879 = vmatprep.subr.mxu0 0.0
        %1880 = vmatpush2.xpose.msra.mxu0 0.0
        %1881 = vmatprep.subr.mxu0 0.0
        %1882 = vmatpush2.xpose.msra.mxu0 0.0
        %1883 = vmatprep.subr.mxu0 0.0
        %1884 = vmatpush2.xpose.msra.mxu0 0.0
        %1885 = vmatprep.subr.mxu0 0.0
        %1886 = vmatpush2.xpose.msra.mxu0 0.0
        %1887 = vmatprep.subr.mxu0 0.0
        %1888 = vmatpush2.xpose.msra.mxu0 0.0
        %1889 = vmatprep.subr.mxu0 0.0
        %1890 = vmatpush2.xpose.msra.mxu0 0.0
        %1891 = vmatprep.subr.mxu0 0.0
        %1892 = vmatpush2.xpose.msra.mxu0 0.0
        %1893 = vmatprep.subr.mxu0 0.0
        %1894 = vmatpush2.xpose.msra.mxu0 0.0
        %1895 = vmatprep.subr.mxu0 0.0
        %1896 = vmatpush2.xpose.msra.mxu0 0.0
        %1897 = vmatprep.subr.mxu0 0.0
        %1898 = vmatpush2.xpose.msra.mxu0 0.0
        %1899 = vmatprep.subr.mxu0 0.0
        %1900 = vmatpush2.xpose.msra.mxu0 0.0
        %1901 = vmatprep.mubr.f32.mxu0 0.0
        %1902 = vmatmul.mubr.f32.gmra.mxu0 %v1829
        %v1903 = vpop.f32.mrf.mxu0
        %v1904 = vadd.f32 0.0, %v1903
        %v1905 = vpop.f32.mrf.mxu0
        %1906 = vmatprep.mubr.f32.mxu0 0.0
        %1907 = vmatmul.mubr.f32.gmra.mxu0 %v1831
        %v1908 = vpop.f32.mrf.mxu0
        %v1909 = vadd.f32 0.0, %v1908
        %v1910 = vpop.f32.mrf.mxu0
        %1911 = vdwg.mxu0
        %v1912 = vmul.f32 %v1904, 0.35355338
        %v1913 = vmul.f32 %v1909, 0.35355338
        %v1914 = vadd.f32 %v1912, %v1621
        %v1915 = vadd.f32 %v1913, %v1622
        %v1916 = vsel %vm1715, %v1914, -inf
        %1917 = vmax.xlane.f32.xlu0 %v1916
        %v1918 = vpop.xlane.xlu0 %1917
        %v1919 = vsel %vm1715, %v1915, -inf
        %1920 = vmax.xlane.f32.xlu0 %v1919
        %v1921 = vpop.xlane.xlu0 %1920
        %v1922 = vsub.f32 %v1914, %v1918
        %v1923 = vsub.f32 %v1915, %v1921
        %v1924 = vmul.f32 %v1922, 1.442695
        %v1925 = vpow.pop %v1924
        %v1926 = vmul.f32 %v1923, 1.442695
        %v1927 = vpow.pop %v1926
        %v1928 = vsel %vm1715, %v1925, 0.0
        %1929 = vadd.xlane.f32.xlu0 %v1928
        %v1930 = vpop.xlane.xlu0 %1929
        %v1931 = vsel %vm1715, %v1927, 0.0
        %1932 = vadd.xlane.f32.xlu0 %v1931
        %v1933 = vpop.xlane.xlu0 %1932
        %v1934 = vrcp.pop %v1930
        %v1935 = vrcp.pop %v1933
        %v1936 = vmul.f32 %v1925, %v1934
        %v1937 = vmul.f32 %v1927, %v1935
        %1940 = vrot.lane.b32.xlu0 %v1613, 120
        %v1941 = vpop.permute.xlu0 %1940
        %1942 = vrot.lane.b32.xlu0 %v1618, 120
        %v1943 = vpop.permute.xlu0 %1942
        %v1947 = vsel %vm1715, %v1936, 0
        %v1950 = vsel %vm1715, %v1937, 0
        %1952 = vmatprep.subr.mxu0 0.0
        %1953 = vmatpush1.msra.mxu0 0.0
        %1954 = vmatprep.subr.mxu0 0.0
        %1955 = vmatpush1.msra.mxu0 0.0
        %1956 = vmatprep.subr.mxu0 0.0
        %1957 = vmatpush1.msra.mxu0 0.0
        %1958 = vmatprep.subr.mxu0 0.0
        %1959 = vmatpush1.msra.mxu0 0.0
        %1960 = vmatprep.subr.mxu0 0.0
        %1961 = vmatpush1.msra.mxu0 0.0
        %1962 = vmatprep.subr.mxu0 0.0
        %1963 = vmatpush1.msra.mxu0 0.0
        %1964 = vmatprep.subr.mxu0 0.0
        %1965 = vmatpush1.msra.mxu0 0.0
        %1966 = vmatprep.subr.mxu0 0.0
        %1967 = vmatpush1.msra.mxu0 0.0
        %1968 = vmatprep.subr.mxu0 0.0
        %1969 = vmatpush1.msra.mxu0 0.0
        %1970 = vmatprep.subr.mxu0 0.0
        %1971 = vmatpush1.msra.mxu0 0.0
        %1972 = vmatprep.subr.mxu0 0.0
        %1973 = vmatpush1.msra.mxu0 0.0
        %1974 = vmatprep.subr.mxu0 0.0
        %1975 = vmatpush1.msra.mxu0 0.0
        %1976 = vmatprep.subr.mxu0 0.0
        %1977 = vmatpush1.msra.mxu0 0.0
        %1978 = vmatprep.subr.mxu0 0.0
        %1979 = vmatpush1.msra.mxu0 0.0
        %1980 = vmatprep.subr.mxu0 0.0
        %1981 = vmatpush1.msra.mxu0 %v1943
        %1982 = vmatprep.subr.mxu0 0.0
        %1983 = vmatpush1.msra.mxu0 %v1941
        %1984 = vmatprep.subr.mxu0 0.0
        %1985 = vmatpush2.msra.mxu0 0.0
        %1986 = vmatprep.subr.mxu0 0.0
        %1987 = vmatpush2.msra.mxu0 0.0
        %1988 = vmatprep.subr.mxu0 0.0
        %1989 = vmatpush2.msra.mxu0 0.0
        %1990 = vmatprep.subr.mxu0 0.0
        %1991 = vmatpush2.msra.mxu0 0.0
        %1992 = vmatprep.subr.mxu0 0.0
        %1993 = vmatpush2.msra.mxu0 0.0
        %1994 = vmatprep.subr.mxu0 0.0
        %1995 = vmatpush2.msra.mxu0 0.0
        %1996 = vmatprep.subr.mxu0 0.0
        %1997 = vmatpush2.msra.mxu0 0.0
        %1998 = vmatprep.subr.mxu0 0.0
        %1999 = vmatpush2.msra.mxu0 0.0
        %2000 = vmatprep.subr.mxu0 0.0
        %2001 = vmatpush2.msra.mxu0 0.0
        %2002 = vmatprep.subr.mxu0 0.0
        %2003 = vmatpush2.msra.mxu0 0.0
        %2004 = vmatprep.subr.mxu0 0.0
        %2005 = vmatpush2.msra.mxu0 0.0
        %2006 = vmatprep.subr.mxu0 0.0
        %2007 = vmatpush2.msra.mxu0 0.0
        %2008 = vmatprep.subr.mxu0 0.0
        %2009 = vmatpush2.msra.mxu0 0.0
        %2010 = vmatprep.subr.mxu0 0.0
        %2011 = vmatpush2.msra.mxu0 0.0
        %2012 = vmatprep.subr.mxu0 0.0
        %2013 = vmatpush2.msra.mxu0 0.0
        %2014 = vmatprep.subr.mxu0 0.0
        %2015 = vmatpush2.msra.mxu0 0.0
        %2016 = vmatprep.mubr.f32.mxu0 0.0
        %2017 = vmatmul.mubr.f32.gmra.mxu0 %v1947
        %v2018 = vpop.f32.mrf.mxu0
        %v2019 = vadd.f32 0.0, %v2018
        %v2020 = vpop.f32.mrf.mxu0
        %2021 = vmatprep.mubr.f32.mxu0 0.0
        %2022 = vmatmul.mubr.f32.gmra.mxu0 %v1950
        %v2023 = vpop.f32.mrf.mxu0
        %v2024 = vadd.f32 0.0, %v2023
        %v2025 = vpop.f32.mrf.mxu0
        %2026 = vdwg.mxu0
        %2029 = vrot.lane.b32.xlu0 %v2019, 8
        %v2030 = vpop.permute.xlu0 %2029
        %2031 = vrot.lane.b32.xlu0 %v2024, 8
        %v2032 = vpop.permute.xlu0 %2031
        %vm2035 = vcmask 130112
        %2036 = vst.msk [vmem:[#allocation3] sm:$0xff] %vm2035, %v2030
        %2037 = vst.msk [vmem:[#allocation3 + $0x8] sm:$0xff] %vm2035, %v2032
        %2038 = vrot.lane.b32.xlu0 %v1441, 112
        %v2039 = vpop.permute.xlu0 %2038
        %2040 = vrot.lane.b32.xlu0 %v1446, 112
        %v2041 = vpop.permute.xlu0 %2040
        %2042 = vrot.lane.b32.xlu0 %v1527, 112
        %v2043 = vpop.permute.xlu0 %2042
        %2044 = vrot.lane.b32.xlu0 %v1532, 112
        %v2045 = vpop.permute.xlu0 %2044
        %v2046 = vsel %vm1623, %v2039, 0
        %v2048 = vsel %vm1623, %v2041, 0
        %v2050 = vsel %vm1623, %v2043, 0
        %v2052 = vsel %vm1623, %v2045, 0
        %2054 = vmatprep.subr.mxu0 0.0
        %2055 = vmatpush1.xpose.msra.mxu0 0.0
        %2056 = vmatprep.subr.mxu0 0.0
        %2057 = vmatpush1.xpose.msra.mxu0 0.0
        %2058 = vmatprep.subr.mxu0 0.0
        %2059 = vmatpush1.xpose.msra.mxu0 0.0
        %2060 = vmatprep.subr.mxu0 0.0
        %2061 = vmatpush1.xpose.msra.mxu0 0.0
        %2062 = vmatprep.subr.mxu0 0.0
        %2063 = vmatpush1.xpose.msra.mxu0 0.0
        %2064 = vmatprep.subr.mxu0 0.0
        %2065 = vmatpush1.xpose.msra.mxu0 0.0
        %2066 = vmatprep.subr.mxu0 0.0
        %2067 = vmatpush1.xpose.msra.mxu0 0.0
        %2068 = vmatprep.subr.mxu0 0.0
        %2069 = vmatpush1.xpose.msra.mxu0 0.0
        %2070 = vmatprep.subr.mxu0 0.0
        %2071 = vmatpush1.xpose.msra.mxu0 0.0
        %2072 = vmatprep.subr.mxu0 0.0
        %2073 = vmatpush1.xpose.msra.mxu0 0.0
        %2074 = vmatprep.subr.mxu0 0.0
        %2075 = vmatpush1.xpose.msra.mxu0 0.0
        %2076 = vmatprep.subr.mxu0 0.0
        %2077 = vmatpush1.xpose.msra.mxu0 0.0
        %2078 = vmatprep.subr.mxu0 0.0
        %2079 = vmatpush1.xpose.msra.mxu0 0.0
        %2080 = vmatprep.subr.mxu0 0.0
        %2081 = vmatpush1.xpose.msra.mxu0 0.0
        %2082 = vmatprep.subr.mxu0 0.0
        %2083 = vmatpush1.xpose.msra.mxu0 %v2052
        %2084 = vmatprep.subr.mxu0 0.0
        %2085 = vmatpush1.xpose.msra.mxu0 %v2050
        %2086 = vmatprep.subr.mxu0 0.0
        %2087 = vmatpush2.xpose.msra.mxu0 0.0
        %2088 = vmatprep.subr.mxu0 0.0
        %2089 = vmatpush2.xpose.msra.mxu0 0.0
        %2090 = vmatprep.subr.mxu0 0.0
        %2091 = vmatpush2.xpose.msra.mxu0 0.0
        %2092 = vmatprep.subr.mxu0 0.0
        %2093 = vmatpush2.xpose.msra.mxu0 0.0
        %2094 = vmatprep.subr.mxu0 0.0
        %2095 = vmatpush2.xpose.msra.mxu0 0.0
        %2096 = vmatprep.subr.mxu0 0.0
        %2097 = vmatpush2.xpose.msra.mxu0 0.0
        %2098 = vmatprep.subr.mxu0 0.0
        %2099 = vmatpush2.xpose.msra.mxu0 0.0
        %2100 = vmatprep.subr.mxu0 0.0
        %2101 = vmatpush2.xpose.msra.mxu0 0.0
        %2102 = vmatprep.subr.mxu0 0.0
        %2103 = vmatpush2.xpose.msra.mxu0 0.0
        %2104 = vmatprep.subr.mxu0 0.0
        %2105 = vmatpush2.xpose.msra.mxu0 0.0
        %2106 = vmatprep.subr.mxu0 0.0
        %2107 = vmatpush2.xpose.msra.mxu0 0.0
        %2108 = vmatprep.subr.mxu0 0.0
        %2109 = vmatpush2.xpose.msra.mxu0 0.0
        %2110 = vmatprep.subr.mxu0 0.0
        %2111 = vmatpush2.xpose.msra.mxu0 0.0
        %2112 = vmatprep.subr.mxu0 0.0
        %2113 = vmatpush2.xpose.msra.mxu0 0.0
        %2114 = vmatprep.subr.mxu0 0.0
        %2115 = vmatpush2.xpose.msra.mxu0 0.0
        %2116 = vmatprep.subr.mxu0 0.0
        %2117 = vmatpush2.xpose.msra.mxu0 0.0
        %2118 = vmatprep.mubr.f32.mxu0 0.0
        %2119 = vmatmul.mubr.f32.gmra.mxu0 %v2046
        %v2120 = vpop.f32.mrf.mxu0
        %v2121 = vadd.f32 0.0, %v2120
        %v2122 = vpop.f32.mrf.mxu0
        %2123 = vmatprep.mubr.f32.mxu0 0.0
        %2124 = vmatmul.mubr.f32.gmra.mxu0 %v2048
        %v2125 = vpop.f32.mrf.mxu0
        %v2126 = vadd.f32 0.0, %v2125
        %v2127 = vpop.f32.mrf.mxu0
        %2128 = vdwg.mxu0
        %v2129 = vmul.f32 %v2121, 0.35355338
        %v2130 = vmul.f32 %v2126, 0.35355338
        %v2131 = vadd.f32 %v2129, %v1621
        %v2132 = vadd.f32 %v2130, %v1622
        %v2133 = vsel %vm1715, %v2131, -inf
        %2134 = vmax.xlane.f32.xlu0 %v2133
        %v2135 = vpop.xlane.xlu0 %2134
        %v2136 = vsel %vm1715, %v2132, -inf
        %2137 = vmax.xlane.f32.xlu0 %v2136
        %v2138 = vpop.xlane.xlu0 %2137
        %v2139 = vsub.f32 %v2131, %v2135
        %v2140 = vsub.f32 %v2132, %v2138
        %v2141 = vmul.f32 %v2139, 1.442695
        %v2142 = vpow.pop %v2141
        %v2143 = vmul.f32 %v2140, 1.442695
        %v2144 = vpow.pop %v2143
        %v2145 = vsel %vm1715, %v2142, 0.0
        %2146 = vadd.xlane.f32.xlu0 %v2145
        %v2147 = vpop.xlane.xlu0 %2146
        %v2148 = vsel %vm1715, %v2144, 0.0
        %2149 = vadd.xlane.f32.xlu0 %v2148
        %v2150 = vpop.xlane.xlu0 %2149
        %v2151 = vrcp.pop %v2147
        %v2152 = vrcp.pop %v2150
        %v2153 = vmul.f32 %v2142, %v2151
        %v2154 = vmul.f32 %v2144, %v2152
        %2155 = vrot.lane.b32.xlu0 %v1613, 112
        %v2156 = vpop.permute.xlu0 %2155
        %2157 = vrot.lane.b32.xlu0 %v1618, 112
        %v2158 = vpop.permute.xlu0 %2157
        %v2162 = vsel %vm1715, %v2153, 0
        %v2165 = vsel %vm1715, %v2154, 0
        %2167 = vmatprep.subr.mxu0 0.0
        %2168 = vmatpush1.msra.mxu0 0.0
        %2169 = vmatprep.subr.mxu0 0.0
        %2170 = vmatpush1.msra.mxu0 0.0
        %2171 = vmatprep.subr.mxu0 0.0
        %2172 = vmatpush1.msra.mxu0 0.0
        %2173 = vmatprep.subr.mxu0 0.0
        %2174 = vmatpush1.msra.mxu0 0.0
        %2175 = vmatprep.subr.mxu0 0.0
        %2176 = vmatpush1.msra.mxu0 0.0
        %2177 = vmatprep.subr.mxu0 0.0
        %2178 = vmatpush1.msra.mxu0 0.0
        %2179 = vmatprep.subr.mxu0 0.0
        %2180 = vmatpush1.msra.mxu0 0.0
        %2181 = vmatprep.subr.mxu0 0.0
        %2182 = vmatpush1.msra.mxu0 0.0
        %2183 = vmatprep.subr.mxu0 0.0
        %2184 = vmatpush1.msra.mxu0 0.0
        %2185 = vmatprep.subr.mxu0 0.0
        %2186 = vmatpush1.msra.mxu0 0.0
        %2187 = vmatprep.subr.mxu0 0.0
        %2188 = vmatpush1.msra.mxu0 0.0
        %2189 = vmatprep.subr.mxu0 0.0
        %2190 = vmatpush1.msra.mxu0 0.0
        %2191 = vmatprep.subr.mxu0 0.0
        %2192 = vmatpush1.msra.mxu0 0.0
        %2193 = vmatprep.subr.mxu0 0.0
        %2194 = vmatpush1.msra.mxu0 0.0
        %2195 = vmatprep.subr.mxu0 0.0
        %2196 = vmatpush1.msra.mxu0 %v2158
        %2197 = vmatprep.subr.mxu0 0.0
        %2198 = vmatpush1.msra.mxu0 %v2156
        %2199 = vmatprep.subr.mxu0 0.0
        %2200 = vmatpush2.msra.mxu0 0.0
        %2201 = vmatprep.subr.mxu0 0.0
        %2202 = vmatpush2.msra.mxu0 0.0
        %2203 = vmatprep.subr.mxu0 0.0
        %2204 = vmatpush2.msra.mxu0 0.0
        %2205 = vmatprep.subr.mxu0 0.0
        %2206 = vmatpush2.msra.mxu0 0.0
        %2207 = vmatprep.subr.mxu0 0.0
        %2208 = vmatpush2.msra.mxu0 0.0
        %2209 = vmatprep.subr.mxu0 0.0
        %2210 = vmatpush2.msra.mxu0 0.0
        %2211 = vmatprep.subr.mxu0 0.0
        %2212 = vmatpush2.msra.mxu0 0.0
        %2213 = vmatprep.subr.mxu0 0.0
        %2214 = vmatpush2.msra.mxu0 0.0
        %2215 = vmatprep.subr.mxu0 0.0
        %2216 = vmatpush2.msra.mxu0 0.0
        %2217 = vmatprep.subr.mxu0 0.0
        %2218 = vmatpush2.msra.mxu0 0.0
        %2219 = vmatprep.subr.mxu0 0.0
        %2220 = vmatpush2.msra.mxu0 0.0
        %2221 = vmatprep.subr.mxu0 0.0
        %2222 = vmatpush2.msra.mxu0 0.0
        %2223 = vmatprep.subr.mxu0 0.0
        %2224 = vmatpush2.msra.mxu0 0.0
        %2225 = vmatprep.subr.mxu0 0.0
        %2226 = vmatpush2.msra.mxu0 0.0
        %2227 = vmatprep.subr.mxu0 0.0
        %2228 = vmatpush2.msra.mxu0 0.0
        %2229 = vmatprep.subr.mxu0 0.0
        %2230 = vmatpush2.msra.mxu0 0.0
        %2231 = vmatprep.mubr.f32.mxu0 0.0
        %2232 = vmatmul.mubr.f32.gmra.mxu0 %v2162
        %v2233 = vpop.f32.mrf.mxu0
        %v2234 = vadd.f32 0.0, %v2233
        %v2235 = vpop.f32.mrf.mxu0
        %2236 = vmatprep.mubr.f32.mxu0 0.0
        %2237 = vmatmul.mubr.f32.gmra.mxu0 %v2165
        %v2238 = vpop.f32.mrf.mxu0
        %v2239 = vadd.f32 0.0, %v2238
        %v2240 = vpop.f32.mrf.mxu0
        %2241 = vdwg.mxu0
        %2244 = vrot.lane.b32.xlu0 %v2234, 16
        %v2245 = vpop.permute.xlu0 %2244
        %2246 = vrot.lane.b32.xlu0 %v2239, 16
        %v2247 = vpop.permute.xlu0 %2246
        %vm2250 = vcmask 195712
        %2251 = vst.msk [vmem:[#allocation3] sm:$0xff] %vm2250, %v2245
        %2252 = vst.msk [vmem:[#allocation3 + $0x8] sm:$0xff] %vm2250, %v2247
        %2253 = vrot.lane.b32.xlu0 %v1441, 104
        %v2254 = vpop.permute.xlu0 %2253
        %2255 = vrot.lane.b32.xlu0 %v1446, 104
        %v2256 = vpop.permute.xlu0 %2255
        %2257 = vrot.lane.b32.xlu0 %v1527, 104
        %v2258 = vpop.permute.xlu0 %2257
        %2259 = vrot.lane.b32.xlu0 %v1532, 104
        %v2260 = vpop.permute.xlu0 %2259
        %v2261 = vsel %vm1623, %v2254, 0
        %v2263 = vsel %vm1623, %v2256, 0
        %v2265 = vsel %vm1623, %v2258, 0
        %v2267 = vsel %vm1623, %v2260, 0
        %2269 = vmatprep.subr.mxu0 0.0
        %2270 = vmatpush1.xpose.msra.mxu0 0.0
        %2271 = vmatprep.subr.mxu0 0.0
        %2272 = vmatpush1.xpose.msra.mxu0 0.0
        %2273 = vmatprep.subr.mxu0 0.0
        %2274 = vmatpush1.xpose.msra.mxu0 0.0
        %2275 = vmatprep.subr.mxu0 0.0
        %2276 = vmatpush1.xpose.msra.mxu0 0.0
        %2277 = vmatprep.subr.mxu0 0.0
        %2278 = vmatpush1.xpose.msra.mxu0 0.0
        %2279 = vmatprep.subr.mxu0 0.0
        %2280 = vmatpush1.xpose.msra.mxu0 0.0
        %2281 = vmatprep.subr.mxu0 0.0
        %2282 = vmatpush1.xpose.msra.mxu0 0.0
        %2283 = vmatprep.subr.mxu0 0.0
        %2284 = vmatpush1.xpose.msra.mxu0 0.0
        %2285 = vmatprep.subr.mxu0 0.0
        %2286 = vmatpush1.xpose.msra.mxu0 0.0
        %2287 = vmatprep.subr.mxu0 0.0
        %2288 = vmatpush1.xpose.msra.mxu0 0.0
        %2289 = vmatprep.subr.mxu0 0.0
        %2290 = vmatpush1.xpose.msra.mxu0 0.0
        %2291 = vmatprep.subr.mxu0 0.0
        %2292 = vmatpush1.xpose.msra.mxu0 0.0
        %2293 = vmatprep.subr.mxu0 0.0
        %2294 = vmatpush1.xpose.msra.mxu0 0.0
        %2295 = vmatprep.subr.mxu0 0.0
        %2296 = vmatpush1.xpose.msra.mxu0 0.0
        %2297 = vmatprep.subr.mxu0 0.0
        %2298 = vmatpush1.xpose.msra.mxu0 %v2267
        %2299 = vmatprep.subr.mxu0 0.0
        %2300 = vmatpush1.xpose.msra.mxu0 %v2265
        %2301 = vmatprep.subr.mxu0 0.0
        %2302 = vmatpush2.xpose.msra.mxu0 0.0
        %2303 = vmatprep.subr.mxu0 0.0
        %2304 = vmatpush2.xpose.msra.mxu0 0.0
        %2305 = vmatprep.subr.mxu0 0.0
        %2306 = vmatpush2.xpose.msra.mxu0 0.0
        %2307 = vmatprep.subr.mxu0 0.0
        %2308 = vmatpush2.xpose.msra.mxu0 0.0
        %2309 = vmatprep.subr.mxu0 0.0
        %2310 = vmatpush2.xpose.msra.mxu0 0.0
        %2311 = vmatprep.subr.mxu0 0.0
        %2312 = vmatpush2.xpose.msra.mxu0 0.0
        %2313 = vmatprep.subr.mxu0 0.0
        %2314 = vmatpush2.xpose.msra.mxu0 0.0
        %2315 = vmatprep.subr.mxu0 0.0
        %2316 = vmatpush2.xpose.msra.mxu0 0.0
        %2317 = vmatprep.subr.mxu0 0.0
        %2318 = vmatpush2.xpose.msra.mxu0 0.0
        %2319 = vmatprep.subr.mxu0 0.0
        %2320 = vmatpush2.xpose.msra.mxu0 0.0
        %2321 = vmatprep.subr.mxu0 0.0
        %2322 = vmatpush2.xpose.msra.mxu0 0.0
        %2323 = vmatprep.subr.mxu0 0.0
        %2324 = vmatpush2.xpose.msra.mxu0 0.0
        %2325 = vmatprep.subr.mxu0 0.0
        %2326 = vmatpush2.xpose.msra.mxu0 0.0
        %2327 = vmatprep.subr.mxu0 0.0
        %2328 = vmatpush2.xpose.msra.mxu0 0.0
        %2329 = vmatprep.subr.mxu0 0.0
        %2330 = vmatpush2.xpose.msra.mxu0 0.0
        %2331 = vmatprep.subr.mxu0 0.0
        %2332 = vmatpush2.xpose.msra.mxu0 0.0
        %2333 = vmatprep.mubr.f32.mxu0 0.0
        %2334 = vmatmul.mubr.f32.gmra.mxu0 %v2261
        %v2335 = vpop.f32.mrf.mxu0
        %v2336 = vadd.f32 0.0, %v2335
        %v2337 = vpop.f32.mrf.mxu0
        %2338 = vmatprep.mubr.f32.mxu0 0.0
        %2339 = vmatmul.mubr.f32.gmra.mxu0 %v2263
        %v2340 = vpop.f32.mrf.mxu0
        %v2341 = vadd.f32 0.0, %v2340
        %v2342 = vpop.f32.mrf.mxu0
        %2343 = vdwg.mxu0
        %v2344 = vmul.f32 %v2336, 0.35355338
        %v2345 = vmul.f32 %v2341, 0.35355338
        %v2346 = vadd.f32 %v2344, %v1621
        %v2347 = vadd.f32 %v2345, %v1622
        %v2348 = vsel %vm1715, %v2346, -inf
        %2349 = vmax.xlane.f32.xlu0 %v2348
        %v2350 = vpop.xlane.xlu0 %2349
        %v2351 = vsel %vm1715, %v2347, -inf
        %2352 = vmax.xlane.f32.xlu0 %v2351
        %v2353 = vpop.xlane.xlu0 %2352
        %v2354 = vsub.f32 %v2346, %v2350
        %v2355 = vsub.f32 %v2347, %v2353
        %v2356 = vmul.f32 %v2354, 1.442695
        %v2357 = vpow.pop %v2356
        %v2358 = vmul.f32 %v2355, 1.442695
        %v2359 = vpow.pop %v2358
        %v2360 = vsel %vm1715, %v2357, 0.0
        %2361 = vadd.xlane.f32.xlu0 %v2360
        %v2362 = vpop.xlane.xlu0 %2361
        %v2363 = vsel %vm1715, %v2359, 0.0
        %2364 = vadd.xlane.f32.xlu0 %v2363
        %v2365 = vpop.xlane.xlu0 %2364
        %v2366 = vrcp.pop %v2362
        %v2367 = vrcp.pop %v2365
        %v2368 = vmul.f32 %v2357, %v2366
        %v2369 = vmul.f32 %v2359, %v2367
        %2370 = vrot.lane.b32.xlu0 %v1613, 104
        %v2371 = vpop.permute.xlu0 %2370
        %2372 = vrot.lane.b32.xlu0 %v1618, 104
        %v2373 = vpop.permute.xlu0 %2372
        %v2377 = vsel %vm1715, %v2368, 0
        %v2380 = vsel %vm1715, %v2369, 0
        %2382 = vmatprep.subr.mxu0 0.0
        %2383 = vmatpush1.msra.mxu0 0.0
        %2384 = vmatprep.subr.mxu0 0.0
        %2385 = vmatpush1.msra.mxu0 0.0
        %2386 = vmatprep.subr.mxu0 0.0
        %2387 = vmatpush1.msra.mxu0 0.0
        %2388 = vmatprep.subr.mxu0 0.0
        %2389 = vmatpush1.msra.mxu0 0.0
        %2390 = vmatprep.subr.mxu0 0.0
        %2391 = vmatpush1.msra.mxu0 0.0
        %2392 = vmatprep.subr.mxu0 0.0
        %2393 = vmatpush1.msra.mxu0 0.0
        %2394 = vmatprep.subr.mxu0 0.0
        %2395 = vmatpush1.msra.mxu0 0.0
        %2396 = vmatprep.subr.mxu0 0.0
        %2397 = vmatpush1.msra.mxu0 0.0
        %2398 = vmatprep.subr.mxu0 0.0
        %2399 = vmatpush1.msra.mxu0 0.0
        %2400 = vmatprep.subr.mxu0 0.0
        %2401 = vmatpush1.msra.mxu0 0.0
        %2402 = vmatprep.subr.mxu0 0.0
        %2403 = vmatpush1.msra.mxu0 0.0
        %2404 = vmatprep.subr.mxu0 0.0
        %2405 = vmatpush1.msra.mxu0 0.0
        %2406 = vmatprep.subr.mxu0 0.0
        %2407 = vmatpush1.msra.mxu0 0.0
        %2408 = vmatprep.subr.mxu0 0.0
        %2409 = vmatpush1.msra.mxu0 0.0
        %2410 = vmatprep.subr.mxu0 0.0
        %2411 = vmatpush1.msra.mxu0 %v2373
        %2412 = vmatprep.subr.mxu0 0.0
        %2413 = vmatpush1.msra.mxu0 %v2371
        %2414 = vmatprep.subr.mxu0 0.0
        %2415 = vmatpush2.msra.mxu0 0.0
        %2416 = vmatprep.subr.mxu0 0.0
        %2417 = vmatpush2.msra.mxu0 0.0
        %2418 = vmatprep.subr.mxu0 0.0
        %2419 = vmatpush2.msra.mxu0 0.0
        %2420 = vmatprep.subr.mxu0 0.0
        %2421 = vmatpush2.msra.mxu0 0.0
        %2422 = vmatprep.subr.mxu0 0.0
        %2423 = vmatpush2.msra.mxu0 0.0
        %2424 = vmatprep.subr.mxu0 0.0
        %2425 = vmatpush2.msra.mxu0 0.0
        %2426 = vmatprep.subr.mxu0 0.0
        %2427 = vmatpush2.msra.mxu0 0.0
        %2428 = vmatprep.subr.mxu0 0.0
        %2429 = vmatpush2.msra.mxu0 0.0
        %2430 = vmatprep.subr.mxu0 0.0
        %2431 = vmatpush2.msra.mxu0 0.0
        %2432 = vmatprep.subr.mxu0 0.0
        %2433 = vmatpush2.msra.mxu0 0.0
        %2434 = vmatprep.subr.mxu0 0.0
        %2435 = vmatpush2.msra.mxu0 0.0
        %2436 = vmatprep.subr.mxu0 0.0
        %2437 = vmatpush2.msra.mxu0 0.0
        %2438 = vmatprep.subr.mxu0 0.0
        %2439 = vmatpush2.msra.mxu0 0.0
        %2440 = vmatprep.subr.mxu0 0.0
        %2441 = vmatpush2.msra.mxu0 0.0
        %2442 = vmatprep.subr.mxu0 0.0
        %2443 = vmatpush2.msra.mxu0 0.0
        %2444 = vmatprep.subr.mxu0 0.0
        %2445 = vmatpush2.msra.mxu0 0.0
        %2446 = vmatprep.mubr.f32.mxu0 0.0
        %2447 = vmatmul.mubr.f32.gmra.mxu0 %v2377
        %v2448 = vpop.f32.mrf.mxu0
        %v2449 = vadd.f32 0.0, %v2448
        %v2450 = vpop.f32.mrf.mxu0
        %2451 = vmatprep.mubr.f32.mxu0 0.0
        %2452 = vmatmul.mubr.f32.gmra.mxu0 %v2380
        %v2453 = vpop.f32.mrf.mxu0
        %v2454 = vadd.f32 0.0, %v2453
        %v2455 = vpop.f32.mrf.mxu0
        %2456 = vdwg.mxu0
        %2459 = vrot.lane.b32.xlu0 %v2449, 24
        %v2460 = vpop.permute.xlu0 %2459
        %2461 = vrot.lane.b32.xlu0 %v2454, 24
        %v2462 = vpop.permute.xlu0 %2461
        %vm2465 = vcmask 261312
        %2466 = vst.msk [vmem:[#allocation3] sm:$0xff] %vm2465, %v2460
        %2467 = vst.msk [vmem:[#allocation3 + $0x8] sm:$0xff] %vm2465, %v2462
        %v2468 = vld [vmem:[#allocation3] sm:$0xff]
        %v2469 = vld [vmem:[#allocation3 + $0x8] sm:$0xff]
        %v2470 = vld [vmem:[%s1044] sm:$0xff]
        %v2471 = vld [vmem:[%s1044 + $0x8] sm:$0xff]
        %v2472 = vld [vmem:[%s1044 + $0x10] sm:$0xff]
        %v2473 = vld [vmem:[%s1044 + $0x18] sm:$0xff]
        %v2474 = vld [vmem:[%s1052] sm:$0x1]
        %v2476 = vlaneseq
        %v2477 = vshrl.u32 %v2476, 7
        %v2478 = vsub.s32 0, %v2477
        %v2479 = vrot.slane %v2474, %v2478
        %v2482 = vsel %vm1367, %v2468, 0
        %v2485 = vsel %vm1367, %v2469, 0
        %2487 = vmatprep.subr.mxu0 0.0
        %2488 = vmatpush1.msra.mxu0 0.0
        %2489 = vmatprep.subr.mxu0 0.0
        %2490 = vmatpush1.msra.mxu0 0.0
        %2491 = vmatprep.subr.mxu0 0.0
        %2492 = vmatpush1.msra.mxu0 0.0
        %2493 = vmatprep.subr.mxu0 0.0
        %2494 = vmatpush1.msra.mxu0 0.0
        %2495 = vmatprep.subr.mxu0 0.0
        %2496 = vmatpush1.msra.mxu0 0.0
        %2497 = vmatprep.subr.mxu0 0.0
        %2498 = vmatpush1.msra.mxu0 0.0
        %2499 = vmatprep.subr.mxu0 0.0
        %2500 = vmatpush1.msra.mxu0 0.0
        %2501 = vmatprep.subr.mxu0 0.0
        %2502 = vmatpush1.msra.mxu0 0.0
        %2503 = vmatprep.subr.mxu0 0.0
        %2504 = vmatpush1.msra.mxu0 0.0
        %2505 = vmatprep.subr.mxu0 0.0
        %2506 = vmatpush1.msra.mxu0 0.0
        %2507 = vmatprep.subr.mxu0 0.0
        %2508 = vmatpush1.msra.mxu0 0.0
        %2509 = vmatprep.subr.mxu0 0.0
        %2510 = vmatpush1.msra.mxu0 0.0
        %2511 = vmatprep.subr.mxu0 0.0
        %2512 = vmatpush1.msra.mxu0 %v2473
        %2513 = vmatprep.subr.mxu0 0.0
        %2514 = vmatpush1.msra.mxu0 %v2472
        %2515 = vmatprep.subr.mxu0 0.0
        %2516 = vmatpush1.msra.mxu0 %v2471
        %2517 = vmatprep.subr.mxu0 0.0
        %2518 = vmatpush1.msra.mxu0 %v2470
        %2519 = vmatprep.subr.mxu0 0.0
        %2520 = vmatpush2.msra.mxu0 0.0
        %2521 = vmatprep.subr.mxu0 0.0
        %2522 = vmatpush2.msra.mxu0 0.0
        %2523 = vmatprep.subr.mxu0 0.0
        %2524 = vmatpush2.msra.mxu0 0.0
        %2525 = vmatprep.subr.mxu0 0.0
        %2526 = vmatpush2.msra.mxu0 0.0
        %2527 = vmatprep.subr.mxu0 0.0
        %2528 = vmatpush2.msra.mxu0 0.0
        %2529 = vmatprep.subr.mxu0 0.0
        %2530 = vmatpush2.msra.mxu0 0.0
        %2531 = vmatprep.subr.mxu0 0.0
        %2532 = vmatpush2.msra.mxu0 0.0
        %2533 = vmatprep.subr.mxu0 0.0
        %2534 = vmatpush2.msra.mxu0 0.0
        %2535 = vmatprep.subr.mxu0 0.0
        %2536 = vmatpush2.msra.mxu0 0.0
        %2537 = vmatprep.subr.mxu0 0.0
        %2538 = vmatpush2.msra.mxu0 0.0
        %2539 = vmatprep.subr.mxu0 0.0
        %2540 = vmatpush2.msra.mxu0 0.0
        %2541 = vmatprep.subr.mxu0 0.0
        %2542 = vmatpush2.msra.mxu0 0.0
        %2543 = vmatprep.subr.mxu0 0.0
        %2544 = vmatpush2.msra.mxu0 0.0
        %2545 = vmatprep.subr.mxu0 0.0
        %2546 = vmatpush2.msra.mxu0 0.0
        %2547 = vmatprep.subr.mxu0 0.0
        %2548 = vmatpush2.msra.mxu0 0.0
        %2549 = vmatprep.subr.mxu0 0.0
        %2550 = vmatpush2.msra.mxu0 0.0
        %2551 = vmatprep.mubr.f32.mxu0 0.0
        %2552 = vmatmul.mubr.f32.gmra.mxu0 %v2482
        %v2553 = vpop.f32.mrf.mxu0
        %v2554 = vadd.f32 %v2479, %v2553
        %v2555 = vpop.f32.mrf.mxu0
        %2556 = vmatprep.mubr.f32.mxu0 0.0
        %2557 = vmatmul.mubr.f32.gmra.mxu0 %v2485
        %v2558 = vpop.f32.mrf.mxu0
        %v2559 = vadd.f32 %v2479, %v2558
        %v2560 = vpop.f32.mrf.mxu0
        %2561 = vdwg.mxu0
        %v2562 = vadd.f32 %v1354, %v2554
        %v2563 = vadd.f32 %v1355, %v2559
        %v2564 = vld [vmem:[%s1060] sm:$0x1]
        %v2565 = vld [vmem:[%s1068] sm:$0x1]
        %v2566 = vsel %vm1367, %v2562, 0.0
        %2567 = vadd.xlane.f32.xlu0 %v2566
        %v2568 = vpop.xlane.xlu0 %2567
        %v2569 = vsel %vm1367, %v2563, 0.0
        %2570 = vadd.xlane.f32.xlu0 %v2569
        %v2571 = vpop.xlane.xlu0 %2570
        %v2572 = vrcp.pop 32.0
        %v2573 = vmul.f32 %v2568, %v2572
        %v2574 = vmul.f32 %v2571, %v2572
        %v2575 = vsub.f32 %v2562, %v2573
        %v2576 = vsub.f32 %v2563, %v2574
        %v2577 = vmul.f32 %v2575, %v2575
        %v2578 = vmul.f32 %v2576, %v2576
        %v2579 = vsel %vm1367, %v2577, 0.0
        %2580 = vadd.xlane.f32.xlu0 %v2579
        %v2581 = vpop.xlane.xlu0 %2580
        %v2582 = vsel %vm1367, %v2578, 0.0
        %2583 = vadd.xlane.f32.xlu0 %v2582
        %v2584 = vpop.xlane.xlu0 %2583
        %v2585 = vmul.f32 %v2581, %v2572
        %v2586 = vmul.f32 %v2584, %v2572
        %v2587 = vadd.f32 %v2585, 1e-05
        %v2588 = vadd.f32 %v2586, 1e-05
        %v2589 = vrsqrt.pop %v2587
        %v2590 = vrsqrt.pop %v2588
        %v2591 = vmul.f32 %v2575, %v2589
        %v2592 = vmul.f32 %v2576, %v2590
        %v2594 = vlaneseq
        %v2595 = vshrl.u32 %v2594, 7
        %v2596 = vsub.s32 0, %v2595
        %v2597 = vrot.slane %v2564, %v2596
        %v2599 = vmul.f32 %v2591, %v2597
        %v2600 = vmul.f32 %v2592, %v2597
        %v2602 = vlaneseq
        %v2603 = vshrl.u32 %v2602, 7
        %v2604 = vsub.s32 0, %v2603
        %v2605 = vrot.slane %v2565, %v2604
        %v2607 = vadd.f32 %v2599, %v2605
        %v2608 = vadd.f32 %v2600, %v2605
        %v2609 = vld [vmem:[%s1077] sm:$0xff]
        %v2610 = vld [vmem:[%s1077 + $0x8] sm:$0xff]
        %v2611 = vld [vmem:[%s1077 + $0x10] sm:$0xff]
        %v2612 = vld [vmem:[%s1077 + $0x18] sm:$0xff]
        %v2613 = vld [vmem:[%s1085] sm:$0x1]
        %v2615 = vlaneseq
        %v2616 = vshrl.u32 %v2615, 7
        %v2617 = vsub.s32 0, %v2616
        %v2618 = vrot.slane %v2613, %v2617
        %v2621 = vsel %vm1367, %v2607, 0
        %v2624 = vsel %vm1367, %v2608, 0
        %2626 = vmatprep.subr.mxu0 0.0
        %2627 = vmatpush1.msra.mxu0 0.0
        %2628 = vmatprep.subr.mxu0 0.0
        %2629 = vmatpush1.msra.mxu0 0.0
        %2630 = vmatprep.subr.mxu0 0.0
        %2631 = vmatpush1.msra.mxu0 0.0
        %2632 = vmatprep.subr.mxu0 0.0
        %2633 = vmatpush1.msra.mxu0 0.0
        %2634 = vmatprep.subr.mxu0 0.0
        %2635 = vmatpush1.msra.mxu0 0.0
        %2636 = vmatprep.subr.mxu0 0.0
        %2637 = vmatpush1.msra.mxu0 0.0
        %2638 = vmatprep.subr.mxu0 0.0
        %2639 = vmatpush1.msra.mxu0 0.0
        %2640 = vmatprep.subr.mxu0 0.0
        %2641 = vmatpush1.msra.mxu0 0.0
        %2642 = vmatprep.subr.mxu0 0.0
        %2643 = vmatpush1.msra.mxu0 0.0
        %2644 = vmatprep.subr.mxu0 0.0
        %2645 = vmatpush1.msra.mxu0 0.0
        %2646 = vmatprep.subr.mxu0 0.0
        %2647 = vmatpush1.msra.mxu0 0.0
        %2648 = vmatprep.subr.mxu0 0.0
        %2649 = vmatpush1.msra.mxu0 0.0
        %2650 = vmatprep.subr.mxu0 0.0
        %2651 = vmatpush1.msra.mxu0 %v2612
        %2652 = vmatprep.subr.mxu0 0.0
        %2653 = vmatpush1.msra.mxu0 %v2611
        %2654 = vmatprep.subr.mxu0 0.0
        %2655 = vmatpush1.msra.mxu0 %v2610
        %2656 = vmatprep.subr.mxu0 0.0
        %2657 = vmatpush1.msra.mxu0 %v2609
        %2658 = vmatprep.subr.mxu0 0.0
        %2659 = vmatpush2.msra.mxu0 0.0
        %2660 = vmatprep.subr.mxu0 0.0
        %2661 = vmatpush2.msra.mxu0 0.0
        %2662 = vmatprep.subr.mxu0 0.0
        %2663 = vmatpush2.msra.mxu0 0.0
        %2664 = vmatprep.subr.mxu0 0.0
        %2665 = vmatpush2.msra.mxu0 0.0
        %2666 = vmatprep.subr.mxu0 0.0
        %2667 = vmatpush2.msra.mxu0 0.0
        %2668 = vmatprep.subr.mxu0 0.0
        %2669 = vmatpush2.msra.mxu0 0.0
        %2670 = vmatprep.subr.mxu0 0.0
        %2671 = vmatpush2.msra.mxu0 0.0
        %2672 = vmatprep.subr.mxu0 0.0
        %2673 = vmatpush2.msra.mxu0 0.0
        %2674 = vmatprep.subr.mxu0 0.0
        %2675 = vmatpush2.msra.mxu0 0.0
        %2676 = vmatprep.subr.mxu0 0.0
        %2677 = vmatpush2.msra.mxu0 0.0
        %2678 = vmatprep.subr.mxu0 0.0
        %2679 = vmatpush2.msra.mxu0 0.0
        %2680 = vmatprep.subr.mxu0 0.0
        %2681 = vmatpush2.msra.mxu0 0.0
        %2682 = vmatprep.subr.mxu0 0.0
        %2683 = vmatpush2.msra.mxu0 0.0
        %2684 = vmatprep.subr.mxu0 0.0
        %2685 = vmatpush2.msra.mxu0 0.0
        %2686 = vmatprep.subr.mxu0 0.0
        %2687 = vmatpush2.msra.mxu0 0.0
        %2688 = vmatprep.subr.mxu0 0.0
        %2689 = vmatpush2.msra.mxu0 0.0
        %2690 = vmatprep.mubr.f32.mxu0 0.0
        %2691 = vmatmul.mubr.f32.gmra.mxu0 %v2621
        %v2692 = vpop.f32.mrf.mxu0
        %v2693 = vadd.f32 %v2618, %v2692
        %v2694 = vpop.f32.mrf.mxu0
        %2695 = vmatprep.mubr.f32.mxu0 0.0
        %2696 = vmatmul.mubr.f32.gmra.mxu0 %v2624
        %v2697 = vpop.f32.mrf.mxu0
        %v2698 = vadd.f32 %v2618, %v2697
        %v2699 = vpop.f32.mrf.mxu0
        %2700 = vdwg.mxu0
        %v2701 = vmax.f32 %v2693, 0.0
        %v2702 = vmax.f32 %v2698, 0.0
        %v2703 = vld [vmem:[%s1243] sm:$0xff]
        %v2704 = vld [vmem:[%s1243 + $0x8] sm:$0xff]
        %v2705 = vld [vmem:[%s1243 + $0x10] sm:$0xff]
        %v2706 = vld [vmem:[%s1243 + $0x18] sm:$0xff]
        %v2707 = vld [vmem:[%s1243 + $0x20] sm:$0xff]
        %v2708 = vld [vmem:[%s1243 + $0x28] sm:$0xff]
        %v2709 = vld [vmem:[%s1243 + $0x30] sm:$0xff]
        %v2710 = vld [vmem:[%s1243 + $0x38] sm:$0xff]
        %v2711 = vld [vmem:[%s1093] sm:$0x1]
        %v2713 = vlaneseq
        %v2714 = vshrl.u32 %v2713, 7
        %v2715 = vsub.s32 0, %v2714
        %v2716 = vrot.slane %v2711, %v2715
        %vm2718 = vcmask 523264
        %v2720 = vsel %vm2718, %v2701, 0
        %v2723 = vsel %vm2718, %v2702, 0
        %2725 = vmatprep.subr.mxu0 0.0
        %2726 = vmatpush1.msra.mxu0 0.0
        %2727 = vmatprep.subr.mxu0 0.0
        %2728 = vmatpush1.msra.mxu0 0.0
        %2729 = vmatprep.subr.mxu0 0.0
        %2730 = vmatpush1.msra.mxu0 0.0
        %2731 = vmatprep.subr.mxu0 0.0
        %2732 = vmatpush1.msra.mxu0 0.0
        %2733 = vmatprep.subr.mxu0 0.0
        %2734 = vmatpush1.msra.mxu0 0.0
        %2735 = vmatprep.subr.mxu0 0.0
        %2736 = vmatpush1.msra.mxu0 0.0
        %2737 = vmatprep.subr.mxu0 0.0
        %2738 = vmatpush1.msra.mxu0 0.0
        %2739 = vmatprep.subr.mxu0 0.0
        %2740 = vmatpush1.msra.mxu0 0.0
        %2741 = vmatprep.subr.mxu0 0.0
        %2742 = vmatpush1.msra.mxu0 %v2710
        %2743 = vmatprep.subr.mxu0 0.0
        %2744 = vmatpush1.msra.mxu0 %v2709
        %2745 = vmatprep.subr.mxu0 0.0
        %2746 = vmatpush1.msra.mxu0 %v2708
        %2747 = vmatprep.subr.mxu0 0.0
        %2748 = vmatpush1.msra.mxu0 %v2707
        %2749 = vmatprep.subr.mxu0 0.0
        %2750 = vmatpush1.msra.mxu0 %v2706
        %2751 = vmatprep.subr.mxu0 0.0
        %2752 = vmatpush1.msra.mxu0 %v2705
        %2753 = vmatprep.subr.mxu0 0.0
        %2754 = vmatpush1.msra.mxu0 %v2704
        %2755 = vmatprep.subr.mxu0 0.0
        %2756 = vmatpush1.msra.mxu0 %v2703
        %2757 = vmatprep.subr.mxu0 0.0
        %2758 = vmatpush2.msra.mxu0 0.0
        %2759 = vmatprep.subr.mxu0 0.0
        %2760 = vmatpush2.msra.mxu0 0.0
        %2761 = vmatprep.subr.mxu0 0.0
        %2762 = vmatpush2.msra.mxu0 0.0
        %2763 = vmatprep.subr.mxu0 0.0
        %2764 = vmatpush2.msra.mxu0 0.0
        %2765 = vmatprep.subr.mxu0 0.0
        %2766 = vmatpush2.msra.mxu0 0.0
        %2767 = vmatprep.subr.mxu0 0.0
        %2768 = vmatpush2.msra.mxu0 0.0
        %2769 = vmatprep.subr.mxu0 0.0
        %2770 = vmatpush2.msra.mxu0 0.0
        %2771 = vmatprep.subr.mxu0 0.0
        %2772 = vmatpush2.msra.mxu0 0.0
        %2773 = vmatprep.subr.mxu0 0.0
        %2774 = vmatpush2.msra.mxu0 0.0
        %2775 = vmatprep.subr.mxu0 0.0
        %2776 = vmatpush2.msra.mxu0 0.0
        %2777 = vmatprep.subr.mxu0 0.0
        %2778 = vmatpush2.msra.mxu0 0.0
        %2779 = vmatprep.subr.mxu0 0.0
        %2780 = vmatpush2.msra.mxu0 0.0
        %2781 = vmatprep.subr.mxu0 0.0
        %2782 = vmatpush2.msra.mxu0 0.0
        %2783 = vmatprep.subr.mxu0 0.0
        %2784 = vmatpush2.msra.mxu0 0.0
        %2785 = vmatprep.subr.mxu0 0.0
        %2786 = vmatpush2.msra.mxu0 0.0
        %2787 = vmatprep.subr.mxu0 0.0
        %2788 = vmatpush2.msra.mxu0 0.0
        %2789 = vmatprep.mubr.f32.mxu0 0.0
        %2790 = vmatmul.mubr.f32.gmra.mxu0 %v2720
        %v2791 = vpop.f32.mrf.mxu0
        %v2792 = vadd.f32 %v2716, %v2791
        %v2793 = vpop.f32.mrf.mxu0
        %2794 = vmatprep.mubr.f32.mxu0 0.0
        %2795 = vmatmul.mubr.f32.gmra.mxu0 %v2723
        %v2796 = vpop.f32.mrf.mxu0
        %v2797 = vadd.f32 %v2716, %v2796
        %v2798 = vpop.f32.mrf.mxu0
        %2799 = vdwg.mxu0
        %v2800 = vadd.f32 %v2607, %v2792
        %v2801 = vadd.f32 %v2608, %v2797
        %v2802 = vld [vmem:[%s1101] sm:$0x1]
        %v2803 = vld [vmem:[%s1246] sm:$0x1]
        %v2804 = vsel %vm1367, %v2800, 0.0
        %2805 = vadd.xlane.f32.xlu0 %v2804
        %v2806 = vpop.xlane.xlu0 %2805
        %v2807 = vsel %vm1367, %v2801, 0.0
        %2808 = vadd.xlane.f32.xlu0 %v2807
        %v2809 = vpop.xlane.xlu0 %2808
        %v2810 = vmul.f32 %v2806, %v2572
        %v2811 = vmul.f32 %v2809, %v2572
        %v2812 = vsub.f32 %v2800, %v2810
        %v2813 = vsub.f32 %v2801, %v2811
        %v2814 = vmul.f32 %v2812, %v2812
        %v2815 = vmul.f32 %v2813, %v2813
        %v2816 = vsel %vm1367, %v2814, 0.0
        %2817 = vadd.xlane.f32.xlu0 %v2816
        %v2818 = vpop.xlane.xlu0 %2817
        %v2819 = vsel %vm1367, %v2815, 0.0
        %2820 = vadd.xlane.f32.xlu0 %v2819
        %v2821 = vpop.xlane.xlu0 %2820
        %v2822 = vmul.f32 %v2818, %v2572
        %v2823 = vmul.f32 %v2821, %v2572
        %v2824 = vadd.f32 %v2822, 1e-05
        %v2825 = vadd.f32 %v2823, 1e-05
        %v2826 = vrsqrt.pop %v2824
        %v2827 = vrsqrt.pop %v2825
        %v2828 = vmul.f32 %v2812, %v2826
        %v2829 = vmul.f32 %v2813, %v2827
        %v2831 = vlaneseq
        %v2832 = vshrl.u32 %v2831, 7
        %v2833 = vsub.s32 0, %v2832
        %v2834 = vrot.slane %v2802, %v2833
        %v2836 = vmul.f32 %v2828, %v2834
        %v2837 = vmul.f32 %v2829, %v2834
        %v2839 = vlaneseq
        %v2840 = vshrl.u32 %v2839, 7
        %v2841 = vsub.s32 0, %v2840
        %v2842 = vrot.slane %v2803, %v2841
        %v2844 = vadd.f32 %v2836, %v2842
        %v2845 = vadd.f32 %v2837, %v2842
        %2846 = vst.msk [vmem:[#allocation2] sm:$0xff] %vm1367, %v2844
        %2847 = vst.msk [vmem:[#allocation2 + $0x8] sm:$0xff] %vm1367, %v2845
        %p2848 = scmp.eq.s32.totalorder %s61, 1
        // Predicated region
        $region181: #{tpu_custom_call.1} parent=111 // pred_check
          %p2849 = pneg %p2848
        $region182: #{tpu_custom_call.1} parent=111 // pred_check_branch
          %2851 = sbr.rel (%p2849) target = $region184
        $region183: #{tpu_custom_call.1} parent=111 // pred_region
          %v2852 = vld [vmem:[%s21] sm:$0xff]
          %v2853 = vld [vmem:[%s21 + $0x8] sm:$0xff]
          %v2854 = vld [vmem:[%s21 + $0x10] sm:$0xff]
          %v2855 = vld [vmem:[%s21 + $0x18] sm:$0xff]
          %v2856 = vld [vmem:[%s22] sm:$0x1]
          %v2858 = vlaneseq
          %v2859 = vshrl.u32 %v2858, 7
          %v2860 = vsub.s32 0, %v2859
          %v2861 = vrot.slane %v2856, %v2860
          %v2864 = vsel %vm1367, %v2844, 0
          %v2867 = vsel %vm1367, %v2845, 0
          %2869 = vmatprep.subr.mxu0 0.0
          %2870 = vmatpush1.msra.mxu0 0.0
          %2871 = vmatprep.subr.mxu0 0.0
          %2872 = vmatpush1.msra.mxu0 0.0
          %2873 = vmatprep.subr.mxu0 0.0
          %2874 = vmatpush1.msra.mxu0 0.0
          %2875 = vmatprep.subr.mxu0 0.0
          %2876 = vmatpush1.msra.mxu0 0.0
          %2877 = vmatprep.subr.mxu0 0.0
          %2878 = vmatpush1.msra.mxu0 0.0
          %2879 = vmatprep.subr.mxu0 0.0
          %2880 = vmatpush1.msra.mxu0 0.0
          %2881 = vmatprep.subr.mxu0 0.0
          %2882 = vmatpush1.msra.mxu0 0.0
          %2883 = vmatprep.subr.mxu0 0.0
          %2884 = vmatpush1.msra.mxu0 0.0
          %2885 = vmatprep.subr.mxu0 0.0
          %2886 = vmatpush1.msra.mxu0 0.0
          %2887 = vmatprep.subr.mxu0 0.0
          %2888 = vmatpush1.msra.mxu0 0.0
          %2889 = vmatprep.subr.mxu0 0.0
          %2890 = vmatpush1.msra.mxu0 0.0
          %2891 = vmatprep.subr.mxu0 0.0
          %2892 = vmatpush1.msra.mxu0 0.0
          %2893 = vmatprep.subr.mxu0 0.0
          %2894 = vmatpush1.msra.mxu0 %v2855
          %2895 = vmatprep.subr.mxu0 0.0
          %2896 = vmatpush1.msra.mxu0 %v2854
          %2897 = vmatprep.subr.mxu0 0.0
          %2898 = vmatpush1.msra.mxu0 %v2853
          %2899 = vmatprep.subr.mxu0 0.0
          %2900 = vmatpush1.msra.mxu0 %v2852
          %2901 = vmatprep.subr.mxu0 0.0
          %2902 = vmatpush2.msra.mxu0 0.0
          %2903 = vmatprep.subr.mxu0 0.0
          %2904 = vmatpush2.msra.mxu0 0.0
          %2905 = vmatprep.subr.mxu0 0.0
          %2906 = vmatpush2.msra.mxu0 0.0
          %2907 = vmatprep.subr.mxu0 0.0
          %2908 = vmatpush2.msra.mxu0 0.0
          %2909 = vmatprep.subr.mxu0 0.0
          %2910 = vmatpush2.msra.mxu0 0.0
          %2911 = vmatprep.subr.mxu0 0.0
          %2912 = vmatpush2.msra.mxu0 0.0
          %2913 = vmatprep.subr.mxu0 0.0
          %2914 = vmatpush2.msra.mxu0 0.0
          %2915 = vmatprep.subr.mxu0 0.0
          %2916 = vmatpush2.msra.mxu0 0.0
          %2917 = vmatprep.subr.mxu0 0.0
          %2918 = vmatpush2.msra.mxu0 0.0
          %2919 = vmatprep.subr.mxu0 0.0
          %2920 = vmatpush2.msra.mxu0 0.0
          %2921 = vmatprep.subr.mxu0 0.0
          %2922 = vmatpush2.msra.mxu0 0.0
          %2923 = vmatprep.subr.mxu0 0.0
          %2924 = vmatpush2.msra.mxu0 0.0
          %2925 = vmatprep.subr.mxu0 0.0
          %2926 = vmatpush2.msra.mxu0 0.0
          %2927 = vmatprep.subr.mxu0 0.0
          %2928 = vmatpush2.msra.mxu0 0.0
          %2929 = vmatprep.subr.mxu0 0.0
          %2930 = vmatpush2.msra.mxu0 0.0
          %2931 = vmatprep.subr.mxu0 0.0
          %2932 = vmatpush2.msra.mxu0 0.0
          %2933 = vmatprep.mubr.f32.mxu0 0.0
          %2934 = vmatmul.mubr.f32.gmra.mxu0 %v2864
          %v2935 = vpop.f32.mrf.mxu0
          %v2936 = vadd.f32 %v2861, %v2935
          %v2937 = vpop.f32.mrf.mxu0
          %2938 = vmatprep.mubr.f32.mxu0 0.0
          %2939 = vmatmul.mubr.f32.gmra.mxu0 %v2867
          %v2940 = vpop.f32.mrf.mxu0
          %v2941 = vadd.f32 %v2861, %v2940
          %v2942 = vpop.f32.mrf.mxu0
          %2943 = vdwg.mxu0
          %2944 = vst [vmem:[#allocation30] sm:$0xff] %v2936
          %2945 = vst [vmem:[#allocation30 + $0x8] sm:$0xff] %v2941
        $region184: #{tpu_custom_call.1} parent=111 // pred_fallthru
          _
        // Predicated region
        $region185: #{tpu_custom_call.1} parent=111 // pred_check
          %p2946 = pneg %p659
        $region186: #{tpu_custom_call.1} parent=111 // pred_check_branch
          %2948 = sbr.rel (%p2946) target = $region188
        $region187: #{tpu_custom_call.1} parent=111 // pred_region
          %s2949 = smul.u32 2, %s60
          %s2951 = ssub.s32 256, 256
          %2952 = vsyncadd [#allocation6], %s2951
          %s2953 = smul.addr %s2949, 128
          %s2954 = scalar_lea.hbm %s23, %s2953
          %s2955 = sshll.u32 [#allocation30], 4
          %s2956 = int_to_ptr.vmem [resolvable:$true] %s2955
          %2961 = dma.vmem_to_hbm [thread:$0]  %s2956, 256, %s2954, [#allocation6], 128, 128, 8
        $region188: #{tpu_custom_call.1} parent=111 // pred_fallthru
          _
        // Predicated region
        $region189: #{tpu_custom_call.1} parent=111 // pred_check
          %p2962 = pneg %p659
        $region190: #{tpu_custom_call.1} parent=111 // pred_check_branch
          %2964 = sbr.rel (%p2962) target = $region192
        $region191: #{tpu_custom_call.1} parent=111 // pred_region
          %2965 = dma.done [#allocation6], 256
        $region192: #{tpu_custom_call.1} parent=111 // pred_fallthru
          _
      $region112: #{tpu_custom_call.1} parent=5 // pred_fallthru
        _
      %p2966 = scmp.le.s32.totalorder 2, %s51
      // Predicated region
      $region193: #{tpu_custom_call.1} parent=5 // pred_check
        %p2967 = pneg %p2966
      $region194: #{tpu_custom_call.1} parent=5 // pred_check_branch
        %2969 = sbr.rel (%p2967) target = $region196
      $region195: #{tpu_custom_call.1} parent=5 // pred_region
        %s2970 = ssub.s32 %s51, 2
      $region196: #{tpu_custom_call.1} parent=5 // pred_fallthru
        _
    $region6: #{tpu_custom_call.1} parent=1 // loop_footer
      %s55 = sadd.s32 1, %s51
    $region7: #{tpu_custom_call.1} parent=1 // loop_footer_branch
      %50 = sbr.rel target = $region3
    $region8: #{tpu_custom_call.1} parent=1 // loop_exit
      _
    %2971 = vsyncpa [#allocation5], 1
    %s2972 = scalar_lea.sflag [#allocation5], 1
    %2973 = vsyncpa %s2972, 1
    %2974 = vsyncpa [#allocation8], 1
    %2975 = vsyncpa [#allocation11], 1
    %2976 = vsyncpa [#allocation14], 1
    %s2977 = scalar_lea.sflag [#allocation14], 1
    %2978 = vsyncpa %s2977, 1
    %2979 = vsyncpa [#allocation17], 1
    %s2980 = scalar_lea.sflag [#allocation17], 1
    %2981 = vsyncpa %s2980, 1
    %2982 = vsyncpa [#allocation20], 1
    %s2983 = scalar_lea.sflag [#allocation20], 1
    %2984 = vsyncpa %s2983, 1
    %2985 = vsyncpa [#allocation23], 1
    %s2986 = scalar_lea.sflag [#allocation23], 1
    %2987 = vsyncpa %s2986, 1
    %2988 = vsyncpa [#allocation26], 1
    %s2989 = scalar_lea.sflag [#allocation26], 1
    %2990 = vsyncpa %s2989, 1
    %2991 = vsyncpa [#allocation29], 1
    %s2992 = scalar_lea.sflag [#allocation29], 1
    %2993 = vsyncpa %s2992, 1
    %2994 = vsyncpa [#allocation6], 1
    %s2995 = scalar_lea.sflag [#allocation6], 1
    %2996 = vsyncpa %s2995, 1

</llo_original>
